<compile_context>
chip_gen: v7x
topology: tpu7x:2x2x1
jax: 0.10.0
libtpu: 0.0.40
codegen_flags: <defaults>
</compile_context>

<pallas_src>
import math
import functools

import jax
import jax.numpy as jnp
from jax.experimental import pallas as pl
from jax.experimental.pallas import tpu as pltpu


# ----------------------------- math helpers -----------------------------

def _layernorm(x, g, b, eps=1e-5):
    mu = jnp.mean(x, axis=-1, keepdims=True)
    var = jnp.mean((x - mu) ** 2, axis=-1, keepdims=True)
    return (x - mu) * jax.lax.rsqrt(var + eps) * g + b


def _gelu_exact(x):
    # nn.GELU() default = exact erf-based GELU
    return 0.5 * x * (1.0 + jax.lax.erf(x * 0.7071067811865476))


# ----------------------------- fused kernel -----------------------------

def _fused_transformer_kernel(
        emb_ref, mask_ref,
        lnvec_ref, wqkv_ref, wo_ref, w1_ref, b1_ref, w2_ref,
        lnf_ref,
        out_ref,
        acc_ref,
        *, num_heads, head_dim, bb, seq):
    l = pl.program_id(1)
    nh, hd = num_heads, head_dim
    D = nh * hd
    M = bb * seq
    G = bb * nh
    scale = 1.0 / math.sqrt(hd)

    # First layer step of each batch block: load embeddings into the resident
    # residual-stream accumulator (emb is only read here).
    @pl.when(l == 0)
    def _():
        acc_ref[...] = emb_ref[...].astype(jnp.float32).reshape(acc_ref.shape)

    hs = acc_ref[...]                                   # [M, H] f32 residual stream

    # packed per-layer small vectors: one DMA per layer step
    lnv = lnvec_ref[0]                                  # [8, H]
    ln1g, ln1b = lnv[0:1], lnv[1:2]
    ln2g, ln2b = lnv[2:3], lnv[3:4]
    b2 = lnv[4:5]

    # ---- gated multi-head self-attention (pre-LN) ----
    xn = _layernorm(hs, ln1g, ln1b).astype(jnp.bfloat16)
    qkv = jnp.dot(xn, wqkv_ref[0], preferred_element_type=jnp.float32)   # [M, 3D]
    q, k, v = qkv[:, 0:D], qkv[:, D:2 * D], qkv[:, 2 * D:3 * D]

    def split_heads(x):                                 # [M, D] -> [G, S, hd]
        x = jnp.transpose(x.reshape(bb, seq, nh, hd), (0, 2, 1, 3))
        return x.reshape(G, seq, hd)

    qh = split_heads(q).astype(jnp.bfloat16)
    kh = split_heads(k).astype(jnp.bfloat16)
    vh = split_heads(v).astype(jnp.bfloat16)

    scores = jnp.einsum('gqd,gkd->gqk', qh, kh,
                        preferred_element_type=jnp.float32) * scale      # [G, S, S]
    # additive attention mask, shared by all heads of a batch element
    mask = jnp.broadcast_to(mask_ref[...][:, None, :, :], (bb, nh, 1, seq))
    scores = scores + mask.reshape(G, 1, seq)

    m = jnp.max(scores, axis=-1, keepdims=True)
    e = jnp.exp(scores - m)
    probs = e * pl.reciprocal(jnp.sum(e, axis=-1, keepdims=True), approx=True)
    # TODO(synk): before scaling S, tile the KV axis flash-attention style
    # (online softmax over an extra grid axis) instead of materializing the
    # full [G, S, S] f32 score tensor in VMEM.

    ctx = jnp.einsum('gqk,gkd->gqd', probs.astype(jnp.bfloat16), vh,
                     preferred_element_type=jnp.float32)                 # [G, S, hd]
    ctx = jnp.transpose(ctx.reshape(bb, nh, seq, hd), (0, 2, 1, 3))
    ctx = ctx.reshape(M, D).astype(jnp.bfloat16)

    # Single [M, D] x [D, H] output projection; sentinel gates and the
    # max(1, active/num_heads) normalization are folded into wo (wrapper side).
    attn_out = jnp.dot(ctx, wo_ref[0], preferred_element_type=jnp.float32)
    hs = hs + attn_out

    # ---- feed-forward (pre-LN); dropouts are identity in eval ----
    xn2 = _layernorm(hs, ln2g, ln2b).astype(jnp.bfloat16)
    h1 = jnp.dot(xn2, w1_ref[0], preferred_element_type=jnp.float32) + b1_ref[0]
    h1 = _gelu_exact(h1).astype(jnp.bfloat16)
    # TODO(synk): at production I (=4H) on v7x (64 MiB VMEM), tile the FFN
    # intermediate dim with an extra grid axis + f32 accumulator scratch (or
    # pipeline_mode=pl.Buffered(1) on w1/w2); on v5e/v6e (128 MiB) prefer
    # pipeline_mode=pl.Buffered(3) on wqkv/w1/w2 to hide the weight DMAs.
    ffn = jnp.dot(h1, w2_ref[0], preferred_element_type=jnp.float32) + b2
    acc_ref[...] = hs + ffn

    # final model LayerNorm fused into the last layer step
    @pl.when(l == pl.num_programs(1) - 1)
    def _():
        y = _layernorm(acc_ref[...], lnf_ref[0:1], lnf_ref[1:2])
        out_ref[...] = y.reshape(out_ref.shape)


# ----------------------------- wrapper -----------------------------------

def _pick_batch_block(B, S, max_rows=512):
    """Largest divisor of B such that the activation slab stays small."""
    bb = 1
    for cand in range(1, B + 1):
        if B % cand == 0 and cand * S <= max_rows:
            bb = cand
    return bb


def _vmem_limit_bytes(Bb, S, H, D, I, nh):
    """Size the scoped-VMEM request from actual block bytes (not a constant)."""
    blocks = [
        Bb * S * H * 2,      # emb (bf16)
        Bb * 1 * S * 4,      # mask
        8 * H * 4,           # packed per-layer vectors
        H * 3 * D * 2,       # wqkv (bf16)
        D * H * 2,           # wo   (bf16)
        H * I * 2,           # w1   (bf16)
        1 * I * 4,           # b1
        I * H * 2,           # w2   (bf16)
        2 * H * 4,           # final LN gamma/beta
        Bb * S * H * 4,      # output
    ]
    need = 2 * sum(blocks)                                   # double-buffered pipeline
    need += Bb * S * H * 4                                   # residual scratch
    need += (Bb * nh * S * S + Bb * S * I + Bb * S * 3 * D) * 4  # in-kernel temporaries
    # generous headroom, but never above v7x's 64 MiB per-core VMEM
    return int(min(max(need * 3 // 2, 32 * 1024 * 1024), 64 * 1024 * 1024))


def adaptive_transformer_forward(params, input_ids, attention_mask=None):
    """AdaptiveTransformer.forward (eval mode) -> last_hidden_state."""
    B, S = input_ids.shape
    H = params["token_embedding"].shape[1]
    L = params["wqkv"].shape[0]
    D = params["wo"].shape[1]
    nh = params["num_heads"]
    hd = D // nh
    I = params["w1"].shape[2]
    Bb = _pick_batch_block(B, S)

    # embedding gathers = glue, plain JAX; emb is shipped to the kernel in bf16
    pos_ids = jnp.arange(S, dtype=jnp.int32)
    emb = (params["token_embedding"][input_ids]
           + params["position_embedding"][pos_ids][None, :, :]).astype(jnp.bfloat16)
    if attention_mask is not None:
        mask_add = ((1.0 - attention_mask.astype(jnp.float32)) * -10000.0)[:, None, :]
    else:
        mask_add = jnp.zeros((B, 1, S), jnp.float32)

    def batched(*trailing):
        return pl.BlockSpec((Bb,) + tuple(trailing),
                            lambda b, l: (b,) + (0,) * len(trailing))

    def per_layer(*trailing):
        return pl.BlockSpec((1,) + tuple(trailing),
                            lambda b, l: (l,) + (0,) * len(trailing))

    def shared(*shape):
        return pl.BlockSpec(tuple(shape), lambda b, l: (0,) * len(shape))

    kernel = functools.partial(_fused_transformer_kernel,
                               num_heads=nh, head_dim=hd, bb=Bb, seq=S)

    return pl.pallas_call(
        kernel,
        out_shape=jax.ShapeDtypeStruct((B, S, H), jnp.float32),
        grid=(B // Bb, L),
        in_specs=[
            batched(S, H),                 # embeddings (bf16, resident per batch block)
            batched(1, S),                 # additive attention mask
            per_layer(8, H),               # packed [ln1_g, ln1_b, ln2_g, ln2_b, b2, pad]
            per_layer(H, 3 * D),           # packed W_qkv          (bf16)
            per_layer(D, H),               # W_o, gate+norm folded (bf16)
            per_layer(H, I),               # FFN linear 1 weight   (bf16)
            per_layer(1, I),               # FFN linear 1 bias     (f32)
            per_layer(I, H),               # FFN linear 2 weight   (bf16)
            shared(2, H),                  # final LayerNorm gamma / beta packed
        ],
        out_specs=batched(S, H),
        scratch_shapes=[pltpu.VMEM((Bb * S, H), jnp.float32)],  # residual-stream acc
        compiler_params=pltpu.CompilerParams(
            dimension_semantics=("parallel", "arbitrary"),
            vmem_limit_bytes=_vmem_limit_bytes(Bb, S, H, D, I, nh)),
    )(emb, mask_add,
      params["lnvec"], params["wqkv"], params["wo"],
      params["w1"], params["b1"], params["w2"], params["ln_f"])


# ----------------------------- parameter init -----------------------------

def init_params(key, cfg):
    H = cfg["hidden_size"]; nh = cfg["num_heads"]; L = cfg["num_layers"]
    I = cfg["intermediate_size"]; V = cfg["vocab_size"]; P = cfg["max_position_embeddings"]
    hd = H // nh
    D = nh * hd
    keys = jax.random.split(key, 2 + L)

    def hstack_heads(w):                      # [nh, H, hd] -> [H, nh*hd] (head-major cols)
        return jnp.transpose(w, (1, 0, 2)).reshape(H, D)

    wqkv_l, wo_l, w1_l, b1_l, w2_l, lnvec_l = [], [], [], [], [], []
    for layer in range(L):
        k = jax.random.split(keys[2 + layer], 8)
        # per-head parameters exactly as the PyTorch module defines them
        wq = jax.random.normal(k[0], (nh, H, hd), jnp.float32) / math.sqrt(H)
        wk = jax.random.normal(k[1], (nh, H, hd), jnp.float32) / math.sqrt(H)
        wv = jax.random.normal(k[2], (nh, H, hd), jnp.float32) / math.sqrt(H)
        wo = jax.random.normal(k[3], (nh, hd, H), jnp.float32) / math.sqrt(hd)
        gate = jnp.ones((nh,), jnp.float32)   # sentinel gates, all active by default

        # fold sentinel gates + max(1, active/num_heads) normalization into W_o
        # (valid while gates are static — eval mode, default agency state)
        eff = jnp.where(gate >= 1e-4, gate, 0.0)
        active = jnp.sum((eff >= 1e-4).astype(jnp.float32))
        norm = 1.0 / jnp.maximum(1.0, active / nh)
        wo_folded = (wo * (eff * norm)[:, None, None]).reshape(D, H)

        b2 = jax.random.uniform(k[7], (1, H), jnp.float32, -1.0, 1.0) / math.sqrt(I)
        lnvec_l.append(jnp.concatenate([
            jnp.ones((1, H), jnp.float32),    # ln1 gamma
            jnp.zeros((1, H), jnp.float32),   # ln1 beta
            jnp.ones((1, H), jnp.float32),    # ln2 gamma
            jnp.zeros((1, H), jnp.float32),   # ln2 beta
            b2,                               # FFN linear-2 bias
            jnp.zeros((3, H), jnp.float32),   # sublane padding -> one (8,128) tile
        ], axis=0))

        wqkv_l.append(jnp.concatenate(
            [hstack_heads(wq), hstack_heads(wk), hstack_heads(wv)],
            axis=1).astype(jnp.bfloat16))
        wo_l.append(wo_folded.astype(jnp.bfloat16))
        w1_l.append((jax.random.uniform(k[4], (H, I), jnp.float32, -1.0, 1.0)
                     / math.sqrt(H)).astype(jnp.bfloat16))
        b1_l.append(jax.random.uniform(k[5], (1, I), jnp.float32, -1.0, 1.0) / math.sqrt(H))
        w2_l.append((jax.random.uniform(k[6], (I, H), jnp.float32, -1.0, 1.0)
                     / math.sqrt(I)).astype(jnp.bfloat16))

    return {
        "num_heads": nh,
        "token_embedding": jax.random.normal(keys[0], (V, H), jnp.float32),
        "position_embedding": jax.random.normal(keys[1], (P, H), jnp.float32),
        "lnvec": jnp.stack(lnvec_l),          # [L, 8, H]   f32 packed per-layer vectors
        "wqkv": jnp.stack(wqkv_l),            # [L, H, 3D]  bf16
        "wo":   jnp.stack(wo_l),              # [L, D, H]   bf16 (gate + norm folded)
        "w1":   jnp.stack(w1_l),              # [L, H, I]   bf16
        "b1":   jnp.stack(b1_l),              # [L, 1, I]   f32
        "w2":   jnp.stack(w2_l),              # [L, I, H]   bf16
        "ln_f": jnp.concatenate([jnp.ones((1, H), jnp.float32),
                                 jnp.zeros((1, H), jnp.float32)], axis=0),  # [2, H]
    }


# ----------------------------- main ----------------------------------------

if __name__ == "__main__":
    cfg = dict(vocab_size=64, hidden_size=128, num_heads=4, num_layers=2,
               intermediate_size=512, max_position_embeddings=64)
    key = jax.random.PRNGKey(0)
    pkey, ikey = jax.random.split(key)
    params = init_params(pkey, cfg)

    B, S = 2, 8
    input_ids = jax.random.randint(ikey, (B, S), 0, cfg["vocab_size"], dtype=jnp.int32)
    attention_mask = jnp.ones((B, S), jnp.float32)

    out = adaptive_transformer_forward(params, input_ids, attention_mask)
    out = jax.block_until_ready(out)
    assert out.shape == (B, S, cfg["hidden_size"])
    assert bool(jnp.all(jnp.isfinite(out)))
    print("KERNEL_OK")
</pallas_src>

<mosaic_0001>
module attributes {stable_mosaic.version = 11 : i64} {
  func.func @_fused_transformer_kernel(%arg0: i32, %arg1: i32, %arg2: memref<2x8x128xbf16, #tpu.memory_space<vmem>>, %arg3: memref<2x1x8xf32, #tpu.memory_space<vmem>>, %arg4: memref<1x8x128xf32, #tpu.memory_space<vmem>>, %arg5: memref<1x128x384xbf16, #tpu.memory_space<vmem>>, %arg6: memref<1x128x128xbf16, #tpu.memory_space<vmem>>, %arg7: memref<1x128x512xbf16, #tpu.memory_space<vmem>>, %arg8: memref<1x1x512xf32, #tpu.memory_space<vmem>>, %arg9: memref<1x512x128xbf16, #tpu.memory_space<vmem>>, %arg10: memref<2x128xf32, #tpu.memory_space<vmem>>, %arg11: memref<2x8x128xf32, #tpu.memory_space<vmem>>, %arg12: memref<16x128xf32, #tpu.memory_space<vmem>>) attributes {dimension_semantics = [#tpu.dimension_semantics<parallel>, #tpu.dimension_semantics<arbitrary>], iteration_bounds = array<i64: 1, 2>, scalar_prefetch = 0 : i64, scratch_operands = 1 : i64, tpu.core_type = #tpu.core_type<tc>, window_params = [{transform_indices = @transform_0, window_bounds = array<i64: 2, 8, 128>}, {transform_indices = @transform_1, window_bounds = array<i64: 2, 1, 8>}, {transform_indices = @transform_2, window_bounds = array<i64: 1, 8, 128>}, {transform_indices = @transform_3, window_bounds = array<i64: 1, 128, 384>}, {transform_indices = @transform_4, window_bounds = array<i64: 1, 128, 128>}, {transform_indices = @transform_5, window_bounds = array<i64: 1, 128, 512>}, {transform_indices = @transform_6, window_bounds = array<i64: 1, 1, 512>}, {transform_indices = @transform_7, window_bounds = array<i64: 1, 512, 128>}, {pipeline_mode = #tpu.pipeline_mode<synchronous>, transform_indices = @transform_8, window_bounds = array<i64: 2, 128>}, {transform_indices = @transform_9, window_bounds = array<i64: 2, 8, 128>}]} {
    %c0_i32 = arith.constant 0 : i32
    %0 = arith.cmpi eq, %arg1, %c0_i32 : i32
    %1 = arith.extui %0 : i1 to i32
    %c0_i32_0 = arith.constant 0 : i32
    %2 = arith.cmpi ne, %1, %c0_i32_0 : i32
    scf.if %2 {
      %c0_47 = arith.constant 0 : index
      %c0_48 = arith.constant 0 : index
      %c0_49 = arith.constant 0 : index
      %131 = vector.load %arg2[%c0_47, %c0_48, %c0_49] : memref<2x8x128xbf16, #tpu.memory_space<vmem>>, vector<2x8x128xbf16>
      %132 = arith.extf %131 : vector<2x8x128xbf16> to vector<2x8x128xf32>
      %133 = vector.shape_cast %132 : vector<2x8x128xf32> to vector<16x128xf32>
      %c0_50 = arith.constant 0 : index
      %c0_51 = arith.constant 0 : index
      %134 = vector.load %arg12[%c0_50, %c0_51] : memref<16x128xf32, #tpu.memory_space<vmem>>, vector<16x128xf32>
      tpu.vector_store %arg12[%c0_50, %c0_51], %133 {strides = array<i32>} : memref<16x128xf32, #tpu.memory_space<vmem>>, vector<16x128xf32>,
    } else {
    }
    %c0 = arith.constant 0 : index
    %c0_1 = arith.constant 0 : index
    %3 = vector.load %arg12[%c0, %c0_1] : memref<16x128xf32, #tpu.memory_space<vmem>>, vector<16x128xf32>
    %c0_2 = arith.constant 0 : index
    %c0_3 = arith.constant 0 : index
    %c0_4 = arith.constant 0 : index
    %4 = vector.load %arg4[%c0_2, %c0_3, %c0_4] : memref<1x8x128xf32, #tpu.memory_space<vmem>>, vector<1x8x128xf32>
    %5 = vector.shape_cast %4 : vector<1x8x128xf32> to vector<8x128xf32>
    %6 = vector.extract_strided_slice %5 {offsets = [0, 0], sizes = [1, 128], strides = [1, 1]} : vector<8x128xf32> to vector<1x128xf32>
    %7 = vector.extract_strided_slice %5 {offsets = [1, 0], sizes = [1, 128], strides = [1, 1]} : vector<8x128xf32> to vector<1x128xf32>
    %8 = vector.extract_strided_slice %5 {offsets = [2, 0], sizes = [1, 128], strides = [1, 1]} : vector<8x128xf32> to vector<1x128xf32>
    %9 = vector.extract_strided_slice %5 {offsets = [3, 0], sizes = [1, 128], strides = [1, 1]} : vector<8x128xf32> to vector<1x128xf32>
    %10 = vector.extract_strided_slice %5 {offsets = [4, 0], sizes = [1, 128], strides = [1, 1]} : vector<8x128xf32> to vector<1x128xf32>
    %cst = arith.constant dense<0.000000e+00> : vector<16xf32>
    %11 = vector.multi_reduction <add>, %3, %cst [1] : vector<16x128xf32> to vector<16xf32>
    %12 = vector.shape_cast %11 : vector<16xf32> to vector<16x1xf32>
    %cst_5 = arith.constant 1.280000e+02 : f32
    %13 = vector.broadcast %cst_5 : f32 to vector<16x1xf32>
    %14 = arith.divf %12, %13 : vector<16x1xf32>
    %15 = vector.broadcast %14 : vector<16x1xf32> to vector<16x128xf32>
    %16 = arith.subf %3, %15 : vector<16x128xf32>
    %17 = arith.mulf %16, %16 : vector<16x128xf32>
    %cst_6 = arith.constant dense<0.000000e+00> : vector<16xf32>
    %18 = vector.multi_reduction <add>, %17, %cst_6 [1] : vector<16x128xf32> to vector<16xf32>
    %19 = vector.shape_cast %18 : vector<16xf32> to vector<16x1xf32>
    %cst_7 = arith.constant 1.280000e+02 : f32
    %20 = vector.broadcast %cst_7 : f32 to vector<16x1xf32>
    %21 = arith.divf %19, %20 : vector<16x1xf32>
    %22 = vector.broadcast %14 : vector<16x1xf32> to vector<16x128xf32>
    %23 = arith.subf %3, %22 : vector<16x128xf32>
    %cst_8 = arith.constant 9.99999974E-6 : f32
    %24 = vector.broadcast %cst_8 : f32 to vector<16x1xf32>
    %25 = arith.addf %21, %24 : vector<16x1xf32>
    %26 = math.rsqrt %25 : vector<16x1xf32>
    %27 = vector.broadcast %26 : vector<16x1xf32> to vector<16x128xf32>
    %28 = arith.mulf %23, %27 : vector<16x128xf32>
    %29 = vector.broadcast %6 : vector<1x128xf32> to vector<16x128xf32>
    %30 = arith.mulf %28, %29 : vector<16x128xf32>
    %31 = vector.broadcast %7 : vector<1x128xf32> to vector<16x128xf32>
    %32 = arith.addf %30, %31 : vector<16x128xf32>
    %33 = arith.truncf %32 : vector<16x128xf32> to vector<16x128xbf16>
    %c0_9 = arith.constant 0 : index
    %c0_10 = arith.constant 0 : index
    %c0_11 = arith.constant 0 : index
    %34 = vector.load %arg5[%c0_9, %c0_10, %c0_11] : memref<1x128x384xbf16, #tpu.memory_space<vmem>>, vector<1x128x384xbf16>
    %35 = vector.shape_cast %34 : vector<1x128x384xbf16> to vector<128x384xbf16>
    %cst_12 = arith.constant dense<0.000000e+00> : vector<16x384xf32>
    %36 = tpu.matmul %33, %35, %cst_12 {dimension_numbers = #tpu.dot_dimension_numbers<[1], [0], [0], [1], [0, 0, 1, 1], [], []>} : vector<16x128xbf16>, vector<128x384xbf16>, vector<16x384xf32> -> vector<16x384xf32>
    %37 = vector.extract_strided_slice %36 {offsets = [0, 0], sizes = [16, 128], strides = [1, 1]} : vector<16x384xf32> to vector<16x128xf32>
    %38 = vector.extract_strided_slice %36 {offsets = [0, 128], sizes = [16, 128], strides = [1, 1]} : vector<16x384xf32> to vector<16x128xf32>
    %39 = vector.extract_strided_slice %36 {offsets = [0, 256], sizes = [16, 128], strides = [1, 1]} : vector<16x384xf32> to vector<16x128xf32>
    %40 = vector.shape_cast %37 : vector<16x128xf32> to vector<2x8x4x32xf32>
    %41 = tpu.transpose %40, [0, 2, 1, 3] : vector<2x8x4x32xf32> -> vector<2x4x8x32xf32>
    %42 = vector.shape_cast %41 : vector<2x4x8x32xf32> to vector<8x8x32xf32>
    %43 = arith.truncf %42 : vector<8x8x32xf32> to vector<8x8x32xbf16>
    %44 = vector.shape_cast %38 : vector<16x128xf32> to vector<2x8x4x32xf32>
    %45 = tpu.transpose %44, [0, 2, 1, 3] : vector<2x8x4x32xf32> -> vector<2x4x8x32xf32>
    %46 = vector.shape_cast %45 : vector<2x4x8x32xf32> to vector<8x8x32xf32>
    %47 = arith.truncf %46 : vector<8x8x32xf32> to vector<8x8x32xbf16>
    %48 = vector.shape_cast %39 : vector<16x128xf32> to vector<2x8x4x32xf32>
    %49 = tpu.transpose %48, [0, 2, 1, 3] : vector<2x8x4x32xf32> -> vector<2x4x8x32xf32>
    %50 = vector.shape_cast %49 : vector<2x4x8x32xf32> to vector<8x8x32xf32>
    %51 = arith.truncf %50 : vector<8x8x32xf32> to vector<8x8x32xbf16>
    "tpu.trace_start"() <{level = 10 : i32, message = "gqd,gkd->gqk"}> : () -> ()
    %cst_13 = arith.constant dense<0.000000e+00> : vector<8x8x8xf32>
    %52 = tpu.matmul %43, %47, %cst_13 {dimension_numbers = #tpu.dot_dimension_numbers<[2], [2], [1], [1], [0, 0, 0, 1, 1, 1], [0], [0]>} : vector<8x8x32xbf16>, vector<8x8x32xbf16>, vector<8x8x8xf32> -> vector<8x8x8xf32>
    "tpu.trace_stop"() : () -> ()
    %cst_14 = arith.constant 0.176776692 : f32
    %53 = vector.broadcast %cst_14 : f32 to vector<8x8x8xf32>
    %54 = arith.mulf %52, %53 : vector<8x8x8xf32>
    %c0_15 = arith.constant 0 : index
    %c0_16 = arith.constant 0 : index
    %c0_17 = arith.constant 0 : index
    %55 = vector.load %arg3[%c0_15, %c0_16, %c0_17] : memref<2x1x8xf32, #tpu.memory_space<vmem>>, vector<2x1x8xf32>
    %56 = vector.shape_cast %55 : vector<2x1x8xf32> to vector<2x1x1x8xf32>
    %57 = vector.shape_cast %56 : vector<2x1x1x8xf32> to vector<2x1x1x8xf32>
    %58 = vector.broadcast %57 : vector<2x1x1x8xf32> to vector<2x4x1x8xf32>
    %59 = vector.shape_cast %58 : vector<2x4x1x8xf32> to vector<8x1x8xf32>
    %60 = vector.broadcast %59 : vector<8x1x8xf32> to vector<8x8x8xf32>
    %61 = arith.addf %54, %60 : vector<8x8x8xf32>
    %cst_18 = arith.constant dense<0xFF800000> : vector<8x8xf32>
    %62 = vector.multi_reduction <maximumf>, %61, %cst_18 [2] : vector<8x8x8xf32> to vector<8x8xf32>
    %63 = vector.shape_cast %62 : vector<8x8xf32> to vector<8x8x1xf32>
    %64 = vector.broadcast %63 : vector<8x8x1xf32> to vector<8x8x8xf32>
    %65 = arith.subf %61, %64 : vector<8x8x8xf32>
    %66 = math.exp %65 : vector<8x8x8xf32>
    %cst_19 = arith.constant dense<0.000000e+00> : vector<8x8xf32>
    %67 = vector.multi_reduction <add>, %66, %cst_19 [2] : vector<8x8x8xf32> to vector<8x8xf32>
    %68 = vector.shape_cast %67 : vector<8x8xf32> to vector<8x8x1xf32>
    %69 = tpu.reciprocal %68 {approx = true} : vector<8x8x1xf32> -> vector<8x8x1xf32>
    %70 = vector.broadcast %69 : vector<8x8x1xf32> to vector<8x8x8xf32>
    %71 = arith.mulf %66, %70 : vector<8x8x8xf32>
    %72 = arith.truncf %71 : vector<8x8x8xf32> to vector<8x8x8xbf16>
    "tpu.trace_start"() <{level = 10 : i32, message = "gqk,gkd->gqd"}> : () -> ()
    %cst_20 = arith.constant dense<0.000000e+00> : vector<8x8x32xf32>
    %73 = tpu.matmul %72, %51, %cst_20 {dimension_numbers = #tpu.dot_dimension_numbers<[2], [1], [1], [2], [0, 0, 0, 1, 1, 2], [0], [0]>} : vector<8x8x8xbf16>, vector<8x8x32xbf16>, vector<8x8x32xf32> -> vector<8x8x32xf32>
    "tpu.trace_stop"() : () -> ()
    %74 = vector.shape_cast %73 : vector<8x8x32xf32> to vector<2x4x8x32xf32>
    %75 = tpu.transpose %74, [0, 2, 1, 3] : vector<2x4x8x32xf32> -> vector<2x8x4x32xf32>
    %76 = vector.shape_cast %75 : vector<2x8x4x32xf32> to vector<16x128xf32>
    %77 = arith.truncf %76 : vector<16x128xf32> to vector<16x128xbf16>
    %c0_21 = arith.constant 0 : index
    %c0_22 = arith.constant 0 : index
    %c0_23 = arith.constant 0 : index
    %78 = vector.load %arg6[%c0_21, %c0_22, %c0_23] : memref<1x128x128xbf16, #tpu.memory_space<vmem>>, vector<1x128x128xbf16>
    %79 = vector.shape_cast %78 : vector<1x128x128xbf16> to vector<128x128xbf16>
    %cst_24 = arith.constant dense<0.000000e+00> : vector<16x128xf32>
    %80 = tpu.matmul %77, %79, %cst_24 {dimension_numbers = #tpu.dot_dimension_numbers<[1], [0], [0], [1], [0, 0, 1, 1], [], []>} : vector<16x128xbf16>, vector<128x128xbf16>, vector<16x128xf32> -> vector<16x128xf32>
    %81 = arith.addf %3, %80 : vector<16x128xf32>
    %cst_25 = arith.constant dense<0.000000e+00> : vector<16xf32>
    %82 = vector.multi_reduction <add>, %81, %cst_25 [1] : vector<16x128xf32> to vector<16xf32>
    %83 = vector.shape_cast %82 : vector<16xf32> to vector<16x1xf32>
    %cst_26 = arith.constant 1.280000e+02 : f32
    %84 = vector.broadcast %cst_26 : f32 to vector<16x1xf32>
    %85 = arith.divf %83, %84 : vector<16x1xf32>
    %86 = vector.broadcast %85 : vector<16x1xf32> to vector<16x128xf32>
    %87 = arith.subf %81, %86 : vector<16x128xf32>
    %88 = arith.mulf %87, %87 : vector<16x128xf32>
    %cst_27 = arith.constant dense<0.000000e+00> : vector<16xf32>
    %89 = vector.multi_reduction <add>, %88, %cst_27 [1] : vector<16x128xf32> to vector<16xf32>
    %90 = vector.shape_cast %89 : vector<16xf32> to vector<16x1xf32>
    %cst_28 = arith.constant 1.280000e+02 : f32
    %91 = vector.broadcast %cst_28 : f32 to vector<16x1xf32>
    %92 = arith.divf %90, %91 : vector<16x1xf32>
    %93 = vector.broadcast %85 : vector<16x1xf32> to vector<16x128xf32>
    %94 = arith.subf %81, %93 : vector<16x128xf32>
    %cst_29 = arith.constant 9.99999974E-6 : f32
    %95 = vector.broadcast %cst_29 : f32 to vector<16x1xf32>
    %96 = arith.addf %92, %95 : vector<16x1xf32>
    %97 = math.rsqrt %96 : vector<16x1xf32>
    %98 = vector.broadcast %97 : vector<16x1xf32> to vector<16x128xf32>
    %99 = arith.mulf %94, %98 : vector<16x128xf32>
    %100 = vector.broadcast %8 : vector<1x128xf32> to vector<16x128xf32>
    %101 = arith.mulf %99, %100 : vector<16x128xf32>
    %102 = vector.broadcast %9 : vector<1x128xf32> to vector<16x128xf32>
    %103 = arith.addf %101, %102 : vector<16x128xf32>
    %104 = arith.truncf %103 : vector<16x128xf32> to vector<16x128xbf16>
    %c0_30 = arith.constant 0 : index
    %c0_31 = arith.constant 0 : index
    %c0_32 = arith.constant 0 : index
    %105 = vector.load %arg7[%c0_30, %c0_31, %c0_32] : memref<1x128x512xbf16, #tpu.memory_space<vmem>>, vector<1x128x512xbf16>
    %106 = vector.shape_cast %105 : vector<1x128x512xbf16> to vector<128x512xbf16>
    %cst_33 = arith.constant dense<0.000000e+00> : vector<16x512xf32>
    %107 = tpu.matmul %104, %106, %cst_33 {dimension_numbers = #tpu.dot_dimension_numbers<[1], [0], [0], [1], [0, 0, 1, 1], [], []>} : vector<16x128xbf16>, vector<128x512xbf16>, vector<16x512xf32> -> vector<16x512xf32>
    %c0_34 = arith.constant 0 : index
    %c0_35 = arith.constant 0 : index
    %c0_36 = arith.constant 0 : index
    %108 = vector.load %arg8[%c0_34, %c0_35, %c0_36] : memref<1x1x512xf32, #tpu.memory_space<vmem>>, vector<1x1x512xf32>
    %109 = vector.shape_cast %108 : vector<1x1x512xf32> to vector<1x512xf32>
    %110 = vector.broadcast %109 : vector<1x512xf32> to vector<16x512xf32>
    %111 = arith.addf %107, %110 : vector<16x512xf32>
    %cst_37 = arith.constant 5.000000e-01 : f32
    %112 = vector.broadcast %cst_37 : f32 to vector<16x512xf32>
    %113 = arith.mulf %112, %111 : vector<16x512xf32>
    %cst_38 = arith.constant 0.707106769 : f32
    %114 = vector.broadcast %cst_38 : f32 to vector<16x512xf32>
    %115 = arith.mulf %111, %114 : vector<16x512xf32>
    %116 = math.erf %115 : vector<16x512xf32>
    %cst_39 = arith.constant 1.000000e+00 : f32
    %117 = vector.broadcast %cst_39 : f32 to vector<16x512xf32>
    %118 = arith.addf %117, %116 : vector<16x512xf32>
    %119 = arith.mulf %113, %118 : vector<16x512xf32>
    %120 = arith.truncf %119 : vector<16x512xf32> to vector<16x512xbf16>
    %c0_40 = arith.constant 0 : index
    %c0_41 = arith.constant 0 : index
    %c0_42 = arith.constant 0 : index
    %121 = vector.load %arg9[%c0_40, %c0_41, %c0_42] : memref<1x512x128xbf16, #tpu.memory_space<vmem>>, vector<1x512x128xbf16>
    %122 = vector.shape_cast %121 : vector<1x512x128xbf16> to vector<512x128xbf16>
    %cst_43 = arith.constant dense<0.000000e+00> : vector<16x128xf32>
    %123 = tpu.matmul %120, %122, %cst_43 {dimension_numbers = #tpu.dot_dimension_numbers<[1], [0], [0], [1], [0, 0, 1, 1], [], []>} : vector<16x512xbf16>, vector<512x128xbf16>, vector<16x128xf32> -> vector<16x128xf32>
    %124 = vector.broadcast %10 : vector<1x128xf32> to vector<16x128xf32>
    %125 = arith.addf %123, %124 : vector<16x128xf32>
    %126 = arith.addf %81, %125 : vector<16x128xf32>
    %c0_44 = arith.constant 0 : index
    %c0_45 = arith.constant 0 : index
    %127 = vector.load %arg12[%c0_44, %c0_45] : memref<16x128xf32, #tpu.memory_space<vmem>>, vector<16x128xf32>
    tpu.vector_store %arg12[%c0_44, %c0_45], %126 {strides = array<i32>} : memref<16x128xf32, #tpu.memory_space<vmem>>, vector<16x128xf32>,
    %c1_i32 = arith.constant 1 : i32
    %128 = arith.cmpi eq, %arg1, %c1_i32 : i32
    %129 = arith.extui %128 : i1 to i32
    %c0_i32_46 = arith.constant 0 : i32
    %130 = arith.cmpi ne, %129, %c0_i32_46 : i32
    scf.if %130 {
      %c0_47 = arith.constant 0 : index
      %c0_48 = arith.constant 0 : index
      %131 = vector.load %arg12[%c0_47, %c0_48] : memref<16x128xf32, #tpu.memory_space<vmem>>, vector<16x128xf32>
      %c0_49 = arith.constant 0 : index
      %c0_50 = arith.constant 0 : index
      %132 = vector.load %arg10[%c0_49, %c0_50] : memref<2x128xf32, #tpu.memory_space<vmem>>, vector<1x128xf32>
      %c1 = arith.constant 1 : index
      %c0_51 = arith.constant 0 : index
      %133 = vector.load %arg10[%c1, %c0_51] : memref<2x128xf32, #tpu.memory_space<vmem>>, vector<1x128xf32>
      %cst_52 = arith.constant dense<0.000000e+00> : vector<16xf32>
      %134 = vector.multi_reduction <add>, %131, %cst_52 [1] : vector<16x128xf32> to vector<16xf32>
      %135 = vector.shape_cast %134 : vector<16xf32> to vector<16x1xf32>
      %cst_53 = arith.constant 1.280000e+02 : f32
      %136 = vector.broadcast %cst_53 : f32 to vector<16x1xf32>
      %137 = arith.divf %135, %136 : vector<16x1xf32>
      %138 = vector.broadcast %137 : vector<16x1xf32> to vector<16x128xf32>
      %139 = arith.subf %131, %138 : vector<16x128xf32>
      %140 = arith.mulf %139, %139 : vector<16x128xf32>
      %cst_54 = arith.constant dense<0.000000e+00> : vector<16xf32>
      %141 = vector.multi_reduction <add>, %140, %cst_54 [1] : vector<16x128xf32> to vector<16xf32>
      %142 = vector.shape_cast %141 : vector<16xf32> to vector<16x1xf32>
      %cst_55 = arith.constant 1.280000e+02 : f32
      %143 = vector.broadcast %cst_55 : f32 to vector<16x1xf32>
      %144 = arith.divf %142, %143 : vector<16x1xf32>
      %145 = vector.broadcast %137 : vector<16x1xf32> to vector<16x128xf32>
      %146 = arith.subf %131, %145 : vector<16x128xf32>
      %cst_56 = arith.constant 9.99999974E-6 : f32
      %147 = vector.broadcast %cst_56 : f32 to vector<16x1xf32>
      %148 = arith.addf %144, %147 : vector<16x1xf32>
      %149 = math.rsqrt %148 : vector<16x1xf32>
      %150 = vector.broadcast %149 : vector<16x1xf32> to vector<16x128xf32>
      %151 = arith.mulf %146, %150 : vector<16x128xf32>
      %152 = vector.broadcast %132 : vector<1x128xf32> to vector<16x128xf32>
      %153 = arith.mulf %151, %152 : vector<16x128xf32>
      %154 = vector.broadcast %133 : vector<1x128xf32> to vector<16x128xf32>
      %155 = arith.addf %153, %154 : vector<16x128xf32>
      %156 = vector.shape_cast %155 : vector<16x128xf32> to vector<2x8x128xf32>
      %c0_57 = arith.constant 0 : index
      %c0_58 = arith.constant 0 : index
      %c0_59 = arith.constant 0 : index
      %157 = vector.load %arg11[%c0_57, %c0_58, %c0_59] : memref<2x8x128xf32, #tpu.memory_space<vmem>>, vector<2x8x128xf32>
      tpu.vector_store %arg11[%c0_57, %c0_58, %c0_59], %156 {strides = array<i32>} : memref<2x8x128xf32, #tpu.memory_space<vmem>>, vector<2x8x128xf32>,
    } else {
    }
    return
  }
  func.func @transform_0(%arg0: i32, %arg1: i32) -> (i32, i32, i32) {
    %c0_i32 = arith.constant 0 : i32
    %c0_i32_0 = arith.constant 0 : i32
    %c0_i32_1 = arith.constant 0 : i32
    return %arg0, %c0_i32, %c0_i32_0 : i32, i32, i32
  }
  func.func @transform_1(%arg0: i32, %arg1: i32) -> (i32, i32, i32) {
    %c0_i32 = arith.constant 0 : i32
    %c0_i32_0 = arith.constant 0 : i32
    %c0_i32_1 = arith.constant 0 : i32
    return %arg0, %c0_i32, %c0_i32_0 : i32, i32, i32
  }
  func.func @transform_2(%arg0: i32, %arg1: i32) -> (i32, i32, i32) {
    %c0_i32 = arith.constant 0 : i32
    %c0_i32_0 = arith.constant 0 : i32
    %c0_i32_1 = arith.constant 0 : i32
    return %arg1, %c0_i32, %c0_i32_0 : i32, i32, i32
  }
  func.func @transform_3(%arg0: i32, %arg1: i32) -> (i32, i32, i32) {
    %c0_i32 = arith.constant 0 : i32
    %c0_i32_0 = arith.constant 0 : i32
    %c0_i32_1 = arith.constant 0 : i32
    return %arg1, %c0_i32, %c0_i32_0 : i32, i32, i32
  }
  func.func @transform_4(%arg0: i32, %arg1: i32) -> (i32, i32, i32) {
    %c0_i32 = arith.constant 0 : i32
    %c0_i32_0 = arith.constant 0 : i32
    %c0_i32_1 = arith.constant 0 : i32
    return %arg1, %c0_i32, %c0_i32_0 : i32, i32, i32
  }
  func.func @transform_5(%arg0: i32, %arg1: i32) -> (i32, i32, i32) {
    %c0_i32 = arith.constant 0 : i32
    %c0_i32_0 = arith.constant 0 : i32
    %c0_i32_1 = arith.constant 0 : i32
    return %arg1, %c0_i32, %c0_i32_0 : i32, i32, i32
  }
  func.func @transform_6(%arg0: i32, %arg1: i32) -> (i32, i32, i32) {
    %c0_i32 = arith.constant 0 : i32
    %c0_i32_0 = arith.constant 0 : i32
    %c0_i32_1 = arith.constant 0 : i32
    return %arg1, %c0_i32, %c0_i32_0 : i32, i32, i32
  }
  func.func @transform_7(%arg0: i32, %arg1: i32) -> (i32, i32, i32) {
    %c0_i32 = arith.constant 0 : i32
    %c0_i32_0 = arith.constant 0 : i32
    %c0_i32_1 = arith.constant 0 : i32
    return %arg1, %c0_i32, %c0_i32_0 : i32, i32, i32
  }
  func.func @transform_8(%arg0: i32, %arg1: i32) -> (i32, i32) {
    %c0_i32 = arith.constant 0 : i32
    %c0_i32_0 = arith.constant 0 : i32
    %c0_i32_1 = arith.constant 0 : i32
    return %c0_i32, %c0_i32_0 : i32, i32
  }
  func.func @transform_9(%arg0: i32, %arg1: i32) -> (i32, i32, i32) {
    %c0_i32 = arith.constant 0 : i32
    %c0_i32_0 = arith.constant 0 : i32
    %c0_i32_1 = arith.constant 0 : i32
    return %arg0, %c0_i32, %c0_i32_0 : i32, i32, i32
  }
}

</mosaic_0001>

<llo_original>
// kernel: tpu_custom_call.1
$region0: #{tpu_custom_call.1}
  #allocation0 [shape = 'u32[]', space=smem, size = 0x4, offset = 0x4, fixed_abs, tag = 'smem constant byte address 0x4 - core index']
  #allocation1 [shape = 'u32[144,128]{1,0:T(1,128)}', space=vmem, size = 0x12000, scoped, tag = 'internal scratch']
  #allocation2 [shape = 'f32[16,128]{1,0:T(8,128)}', space=vmem, size = 0x2000, scoped, tag = 'scratch operand']
  %s0 = inlined_call_operand.hbm [shape: bf16[2,8,128], index: 0, kind: input, shape index: {}]
  %s1 = inlined_call_operand.vmem [shape: f32[2,1,8], index: 1, kind: input, shape index: {}]
  %s2 = inlined_call_operand.hbm [shape: f32[2,8,128], index: 2, kind: input, shape index: {}]
  %s3 = inlined_call_operand.hbm [shape: bf16[2,128,384], index: 3, kind: input, shape index: {}]
  %s4 = inlined_call_operand.hbm [shape: bf16[2,128,128], index: 4, kind: input, shape index: {}]
  %s5 = inlined_call_operand.hbm [shape: bf16[2,128,512], index: 5, kind: input, shape index: {}]
  %s6 = inlined_call_operand.vmem [shape: f32[2,1,512], index: 6, kind: input, shape index: {}]
  %s7 = inlined_call_operand.hbm [shape: bf16[2,512,128], index: 7, kind: input, shape index: {}]
  %s8 = inlined_call_operand.vmem [shape: f32[2,128], index: 8, kind: input, shape index: {}]
  %s9 = inlined_call_operand.hbm [shape: f32[2,8,128], index: 9, kind: output, shape index: {}]
  %s10 = sld [smem:[#allocation0]]
  $region101: #{tpu_custom_call.1} parent=0
    _
  %s12 = ssub.s32 1, %s10
  %s13 = scalar_select 0, %s12, %s10
  $region1: #{tpu_custom_call.1} parent=0
    #allocation3 [shape = 'u8[4096]{0}', space=vmem, size = 0x1000, scoped, tag = 'input window, operand 0, single buffered']
    #allocation4 [shape = 's32[2]{0}', space=sflag, size = 0x8, scoped, tag = 'scoped memory for tpu_custom_call.1']
    #allocation5 [shape = 's32[2]{0}', space=sflag, size = 0x8, scoped, tag = 'scoped memory for tpu_custom_call.1']
    #allocation6 [shape = 'u8[8192]{0}', space=vmem, size = 0x2000, scoped, tag = 'input window, operand 2']
    #allocation7 [shape = 's32[2]{0}', space=sflag, size = 0x8, scoped, tag = 'scoped memory for tpu_custom_call.1']
    #allocation8 [shape = 'u8[196608]{0}', space=vmem, size = 0x30000, scoped, tag = 'input window, operand 3']
    #allocation9 [shape = 'u8[65536]{0}', space=vmem, size = 0x10000, scoped, tag = 'input window, operand 4']
    #allocation10 [shape = 's32[2]{0}', space=sflag, size = 0x8, scoped, tag = 'scoped memory for tpu_custom_call.1']
    #allocation11 [shape = 'u8[262144]{0}', space=vmem, size = 0x40000, scoped, tag = 'input window, operand 5']
    #allocation12 [shape = 'u8[262144]{0}', space=vmem, size = 0x40000, scoped, tag = 'input window, operand 7']
    #allocation13 [shape = 's32[2]{0}', space=sflag, size = 0x8, scoped, tag = 'scoped memory for tpu_custom_call.1']
    #allocation14 [shape = 'u8[8192]{0}', space=vmem, size = 0x2000, scoped, tag = 'output window, operand 0, single buffered']
    %14 = vsyncpa [#allocation4], 0
    %15 = vsyncpa [#allocation7], 0
    %s16 = scalar_lea.sflag [#allocation7], 1
    %17 = vsyncpa %s16, 0
    %18 = vsyncpa [#allocation10], 0
    %s19 = scalar_lea.sflag [#allocation10], 1
    %20 = vsyncpa %s19, 0
    %21 = vsyncpa [#allocation13], 0
    %s22 = scalar_lea.sflag [#allocation13], 1
    %23 = vsyncpa %s22, 0
    %24 = vsyncpa [#allocation5], 0
    loop: start=0, step=1, limit=4
    $region2: #{tpu_custom_call.1} parent=1 // loop_pre_header
      _
    $region3: #{tpu_custom_call.1} parent=1 // loop_header
      %s26 = sphi 0, %s30
      %p27 = scmp.ge.s32.totalorder %s26, 4
      %s33 = sphi 0, %s45
      %s34 = sphi 0, %s41
      %s35 = sphi 0, %s33
      %s36 = sphi 0, %s34
      %s37 = sphi 0, %s35
      %s38 = sphi 0, %s36
      %s48 = sphi 0, %s50
      %s51 = sphi 0, %s48
      %s52 = sphi 0, %s51
      %s68 = sphi 0, %s52
      %s74 = sphi 0, %s76
      %s77 = sphi 0, %s74
      %s78 = sphi 0, %s77
      %s94 = sphi 0, %s78
      %s100 = sphi 0, %s102
      %s103 = sphi 0, %s100
      %s104 = sphi 0, %s103
      %s120 = sphi 0, %s104
      %s126 = sphi 0, %s128
      %s129 = sphi 0, %s126
      %s130 = sphi 0, %s129
      %s146 = sphi 0, %s130
      %s152 = sphi 0, %s154
      %s155 = sphi 0, %s152
      %s156 = sphi 0, %s155
      %s172 = sphi 0, %s156
      %s178 = sphi 0, %s180
      %s181 = sphi 0, %s178
      %s182 = sphi 0, %s181
      %s198 = sphi 0, %s182
      %s204 = sphi 0, %s206
      %s207 = sphi 0, %s204
      %s208 = sphi 0, %s207
      %s224 = sphi 0, %s208
      %s230 = sphi 0, %s232
      %s233 = sphi 0, %s230
      %s234 = sphi 0, %s233
      %s250 = sphi 0, %s234
      %s254 = sphi 0, %s254
      %s256 = sphi 0, %s254
      %s257 = sphi 0, %s256
      %s271 = sphi 0, %s257
      %s277 = sphi 0, %s279
      %s280 = sphi 0, %s277
      %s281 = sphi 0, %s280
      %s297 = sphi 0, %s281
    $region4: #{tpu_custom_call.1} parent=1 // loop_header_branch
      %29 = sbr.rel (%p27) target = $region8
    $region5: #{tpu_custom_call.1} parent=1 // loop_body
      %s31 = ssub.s32 %s26, 1
      %s32 = ssub.s32 %s26, 2
      %s39 = sadd.s32 1, %s34
      %p40 = scmp.ge.s32.totalorder %s39, 2
      %s41 = scalar_select %p40, 0, %s39
      %s42 = sadd.s32 1, %s33
      %s43 = scalar_select %p40, %s42, %s33
      %p44 = scmp.ge.s32.totalorder %s43, 1
      %s45 = scalar_select %p44, 0, %s43
      %s46 = ssub.s32 %s33, %s45
      %p47 = scmp.eq.s32.totalorder %s46, 0
      %s49 = sadd.s32 %s48, 1
      %s50 = scalar_select %p47, %s48, %s49
      %p53 = pneg %p47
      %p54 = scmp.eq.s32.totalorder %s26, 1
      %p55 = por %p53, %p54
      %p56 = scmp.ne.s32.totalorder %s48, %s51
      %p57 = scmp.eq.s32.totalorder %s26, 0
      %p58 = por %p56, %p57
      %p59 = scmp.ne.s32.totalorder %s48, %s51
      %p60 = scmp.eq.s32.totalorder %s31, 1
      %p61 = por %p59, %p60
      %p62 = scmp.ne.s32.totalorder %s51, %s52
      %p63 = scmp.eq.s32.totalorder %s31, 0
      %p64 = por %p62, %p63
      %p65 = scmp.ne.s32.totalorder %s51, %s52
      %p66 = scmp.eq.s32.totalorder %s32, 1
      %p67 = por %p65, %p66
      %p69 = scmp.ne.s32.totalorder %s52, %s68
      %p70 = scmp.eq.s32.totalorder %s32, 0
      %p71 = por %p69, %p70
      %s72 = ssub.s32 %s33, %s45
      %p73 = scmp.eq.s32.totalorder %s72, 0
      %s75 = sadd.s32 %s74, 1
      %s76 = scalar_select %p73, %s74, %s75
      %p79 = pneg %p73
      %p80 = scmp.eq.s32.totalorder %s26, 1
      %p81 = por %p79, %p80
      %p82 = scmp.ne.s32.totalorder %s74, %s77
      %p83 = scmp.eq.s32.totalorder %s26, 0
      %p84 = por %p82, %p83
      %p85 = scmp.ne.s32.totalorder %s74, %s77
      %p86 = scmp.eq.s32.totalorder %s31, 1
      %p87 = por %p85, %p86
      %p88 = scmp.ne.s32.totalorder %s77, %s78
      %p89 = scmp.eq.s32.totalorder %s31, 0
      %p90 = por %p88, %p89
      %p91 = scmp.ne.s32.totalorder %s77, %s78
      %p92 = scmp.eq.s32.totalorder %s32, 1
      %p93 = por %p91, %p92
      %p95 = scmp.ne.s32.totalorder %s78, %s94
      %p96 = scmp.eq.s32.totalorder %s32, 0
      %p97 = por %p95, %p96
      %s98 = ssub.s32 %s34, %s41
      %p99 = scmp.eq.s32.totalorder %s98, 0
      %s101 = sadd.s32 %s100, 1
      %s102 = scalar_select %p99, %s100, %s101
      %p105 = pneg %p99
      %p106 = scmp.eq.s32.totalorder %s26, 1
      %p107 = por %p105, %p106
      %p108 = scmp.ne.s32.totalorder %s100, %s103
      %p109 = scmp.eq.s32.totalorder %s26, 0
      %p110 = por %p108, %p109
      %p111 = scmp.ne.s32.totalorder %s100, %s103
      %p112 = scmp.eq.s32.totalorder %s31, 1
      %p113 = por %p111, %p112
      %p114 = scmp.ne.s32.totalorder %s103, %s104
      %p115 = scmp.eq.s32.totalorder %s31, 0
      %p116 = por %p114, %p115
      %p117 = scmp.ne.s32.totalorder %s103, %s104
      %p118 = scmp.eq.s32.totalorder %s32, 1
      %p119 = por %p117, %p118
      %p121 = scmp.ne.s32.totalorder %s104, %s120
      %p122 = scmp.eq.s32.totalorder %s32, 0
      %p123 = por %p121, %p122
      %s124 = ssub.s32 %s34, %s41
      %p125 = scmp.eq.s32.totalorder %s124, 0
      %s127 = sadd.s32 %s126, 1
      %s128 = scalar_select %p125, %s126, %s127
      %p131 = pneg %p125
      %p132 = scmp.eq.s32.totalorder %s26, 1
      %p133 = por %p131, %p132
      %p134 = scmp.ne.s32.totalorder %s126, %s129
      %p135 = scmp.eq.s32.totalorder %s26, 0
      %p136 = por %p134, %p135
      %p137 = scmp.ne.s32.totalorder %s126, %s129
      %p138 = scmp.eq.s32.totalorder %s31, 1
      %p139 = por %p137, %p138
      %p140 = scmp.ne.s32.totalorder %s129, %s130
      %p141 = scmp.eq.s32.totalorder %s31, 0
      %p142 = por %p140, %p141
      %p143 = scmp.ne.s32.totalorder %s129, %s130
      %p144 = scmp.eq.s32.totalorder %s32, 1
      %p145 = por %p143, %p144
      %p147 = scmp.ne.s32.totalorder %s130, %s146
      %p148 = scmp.eq.s32.totalorder %s32, 0
      %p149 = por %p147, %p148
      %s150 = ssub.s32 %s34, %s41
      %p151 = scmp.eq.s32.totalorder %s150, 0
      %s153 = sadd.s32 %s152, 1
      %s154 = scalar_select %p151, %s152, %s153
      %p157 = pneg %p151
      %p158 = scmp.eq.s32.totalorder %s26, 1
      %p159 = por %p157, %p158
      %p160 = scmp.ne.s32.totalorder %s152, %s155
      %p161 = scmp.eq.s32.totalorder %s26, 0
      %p162 = por %p160, %p161
      %p163 = scmp.ne.s32.totalorder %s152, %s155
      %p164 = scmp.eq.s32.totalorder %s31, 1
      %p165 = por %p163, %p164
      %p166 = scmp.ne.s32.totalorder %s155, %s156
      %p167 = scmp.eq.s32.totalorder %s31, 0
      %p168 = por %p166, %p167
      %p169 = scmp.ne.s32.totalorder %s155, %s156
      %p170 = scmp.eq.s32.totalorder %s32, 1
      %p171 = por %p169, %p170
      %p173 = scmp.ne.s32.totalorder %s156, %s172
      %p174 = scmp.eq.s32.totalorder %s32, 0
      %p175 = por %p173, %p174
      %s176 = ssub.s32 %s34, %s41
      %p177 = scmp.eq.s32.totalorder %s176, 0
      %s179 = sadd.s32 %s178, 1
      %s180 = scalar_select %p177, %s178, %s179
      %p183 = pneg %p177
      %p184 = scmp.eq.s32.totalorder %s26, 1
      %p185 = por %p183, %p184
      %p186 = scmp.ne.s32.totalorder %s178, %s181
      %p187 = scmp.eq.s32.totalorder %s26, 0
      %p188 = por %p186, %p187
      %p189 = scmp.ne.s32.totalorder %s178, %s181
      %p190 = scmp.eq.s32.totalorder %s31, 1
      %p191 = por %p189, %p190
      %p192 = scmp.ne.s32.totalorder %s181, %s182
      %p193 = scmp.eq.s32.totalorder %s31, 0
      %p194 = por %p192, %p193
      %p195 = scmp.ne.s32.totalorder %s181, %s182
      %p196 = scmp.eq.s32.totalorder %s32, 1
      %p197 = por %p195, %p196
      %p199 = scmp.ne.s32.totalorder %s182, %s198
      %p200 = scmp.eq.s32.totalorder %s32, 0
      %p201 = por %p199, %p200
      %s202 = ssub.s32 %s34, %s41
      %p203 = scmp.eq.s32.totalorder %s202, 0
      %s205 = sadd.s32 %s204, 1
      %s206 = scalar_select %p203, %s204, %s205
      %p209 = pneg %p203
      %p210 = scmp.eq.s32.totalorder %s26, 1
      %p211 = por %p209, %p210
      %p212 = scmp.ne.s32.totalorder %s204, %s207
      %p213 = scmp.eq.s32.totalorder %s26, 0
      %p214 = por %p212, %p213
      %p215 = scmp.ne.s32.totalorder %s204, %s207
      %p216 = scmp.eq.s32.totalorder %s31, 1
      %p217 = por %p215, %p216
      %p218 = scmp.ne.s32.totalorder %s207, %s208
      %p219 = scmp.eq.s32.totalorder %s31, 0
      %p220 = por %p218, %p219
      %p221 = scmp.ne.s32.totalorder %s207, %s208
      %p222 = scmp.eq.s32.totalorder %s32, 1
      %p223 = por %p221, %p222
      %p225 = scmp.ne.s32.totalorder %s208, %s224
      %p226 = scmp.eq.s32.totalorder %s32, 0
      %p227 = por %p225, %p226
      %s228 = ssub.s32 %s34, %s41
      %p229 = scmp.eq.s32.totalorder %s228, 0
      %s231 = sadd.s32 %s230, 1
      %s232 = scalar_select %p229, %s230, %s231
      %p235 = pneg %p229
      %p236 = scmp.eq.s32.totalorder %s26, 1
      %p237 = por %p235, %p236
      %p238 = scmp.ne.s32.totalorder %s230, %s233
      %p239 = scmp.eq.s32.totalorder %s26, 0
      %p240 = por %p238, %p239
      %p241 = scmp.ne.s32.totalorder %s230, %s233
      %p242 = scmp.eq.s32.totalorder %s31, 1
      %p243 = por %p241, %p242
      %p244 = scmp.ne.s32.totalorder %s233, %s234
      %p245 = scmp.eq.s32.totalorder %s31, 0
      %p246 = por %p244, %p245
      %p247 = scmp.ne.s32.totalorder %s233, %s234
      %p248 = scmp.eq.s32.totalorder %s32, 1
      %p249 = por %p247, %p248
      %p251 = scmp.ne.s32.totalorder %s234, %s250
      %p252 = scmp.eq.s32.totalorder %s32, 0
      %p253 = por %p251, %p252
      %s255 = sadd.s32 %s254, 1
      %p258 = scmp.eq.s32.totalorder %s26, 1
      %p259 = scmp.ne.s32.totalorder %s254, %s256
      %p260 = scmp.eq.s32.totalorder %s26, 0
      %p261 = por %p259, %p260
      %p262 = scmp.ne.s32.totalorder %s254, %s256
      %p263 = scmp.eq.s32.totalorder %s31, 1
      %p264 = por %p262, %p263
      %p265 = scmp.ne.s32.totalorder %s256, %s257
      %p266 = scmp.eq.s32.totalorder %s31, 0
      %p267 = por %p265, %p266
      %p268 = scmp.ne.s32.totalorder %s256, %s257
      %p269 = scmp.eq.s32.totalorder %s32, 1
      %p270 = por %p268, %p269
      %p272 = scmp.ne.s32.totalorder %s257, %s271
      %p273 = scmp.eq.s32.totalorder %s32, 0
      %p274 = por %p272, %p273
      %s275 = ssub.s32 %s33, %s45
      %p276 = scmp.eq.s32.totalorder %s275, 0
      %s278 = sadd.s32 %s277, 1
      %s279 = scalar_select %p276, %s277, %s278
      %p282 = pneg %p276
      %p283 = scmp.eq.s32.totalorder %s26, 1
      %p284 = por %p282, %p283
      %p285 = scmp.ne.s32.totalorder %s277, %s280
      %p286 = scmp.eq.s32.totalorder %s26, 0
      %p287 = por %p285, %p286
      %p288 = scmp.ne.s32.totalorder %s277, %s280
      %p289 = scmp.eq.s32.totalorder %s31, 1
      %p290 = por %p288, %p289
      %p291 = scmp.ne.s32.totalorder %s280, %s281
      %p292 = scmp.eq.s32.totalorder %s31, 0
      %p293 = por %p291, %p292
      %p294 = scmp.ne.s32.totalorder %s280, %s281
      %p295 = scmp.eq.s32.totalorder %s32, 1
      %p296 = por %p294, %p295
      %p298 = scmp.ne.s32.totalorder %s281, %s297
      %p299 = scmp.eq.s32.totalorder %s32, 0
      %p300 = por %p298, %p299
      %p301 = scmp.le.s32.totalorder 1, %s26
      %p302 = scmp.lt.s32.totalorder %s26, 3
      %p303 = pnand %p301, %p302
      %p304 = pneg %p303
      // Predicated region
      $region9: #{tpu_custom_call.1} parent=5 // pred_check
        _
      $region10: #{tpu_custom_call.1} parent=5 // pred_check_branch
        %306 = sbr.rel (%p303) target = $region12
      $region11: #{tpu_custom_call.1} parent=5 // pred_region
        %s307 = ssub.s32 %s26, 1
        // Predicated region
        $region13: #{tpu_custom_call.1} parent=11 // pred_check
          %p308 = pneg %p64
        $region14: #{tpu_custom_call.1} parent=11 // pred_check_branch
          %310 = sbr.rel (%p308) target = $region16
        $region15: #{tpu_custom_call.1} parent=11 // pred_region
          %s311 = smul.u32 2, %s35
          %s313 = ssub.s32 128, 128
          %314 = vsyncadd [#allocation4], %s313
          %s315 = smul.addr %s311, 64
          %s316 = scalar_lea.hbm %s0, %s315
          %s317 = sshll.u32 [#allocation3], 4
          %s318 = int_to_ptr.vmem [resolvable:$true] %s317
          %323 = dma.hbm_to_vmem [thread:$0]  %s316, 128, %s318, [#allocation4], 64, 64, 4
        $region16: #{tpu_custom_call.1} parent=11 // pred_fallthru
          _
        // Predicated region
        $region17: #{tpu_custom_call.1} parent=11 // pred_check
          %p324 = pneg %p90
        $region18: #{tpu_custom_call.1} parent=11 // pred_check_branch
          %326 = sbr.rel (%p324) target = $region20
        $region19: #{tpu_custom_call.1} parent=11 // pred_region
          %s327 = smul.u32 2, %s35
          %p328 = scmp.lt.s32.totalorder %s327, 1
          %s329 = scalar_select %p328, %s327, 1
          %s330 = scalar_lea.vmem %s1, %s329
          %s331 = smul.u32 2, %s35
        $region20: #{tpu_custom_call.1} parent=11 // pred_fallthru
          _
        // Predicated region
        $region21: #{tpu_custom_call.1} parent=11 // pred_check
          %p332 = pneg %p267
        $region22: #{tpu_custom_call.1} parent=11 // pred_check_branch
          %334 = sbr.rel (%p332) target = $region24
        $region23: #{tpu_custom_call.1} parent=11 // pred_region
          _
        $region24: #{tpu_custom_call.1} parent=11 // pred_fallthru
          _
      $region12: #{tpu_custom_call.1} parent=5 // pred_fallthru
        _
      %p335 = scmp.lt.s32.totalorder %s26, 2
      // Predicated region
      $region25: #{tpu_custom_call.1} parent=5 // pred_check
        %p336 = pneg %p335
      $region26: #{tpu_custom_call.1} parent=5 // pred_check_branch
        %338 = sbr.rel (%p336) target = $region28
      $region27: #{tpu_custom_call.1} parent=5 // pred_region
        // Predicated region
        $region29: #{tpu_custom_call.1} parent=27 // pred_check
          %p339 = pneg %p110
        $region30: #{tpu_custom_call.1} parent=27 // pred_check_branch
          %341 = sbr.rel (%p339) target = $region32
        $region31: #{tpu_custom_call.1} parent=27 // pred_region
          %s342 = sand.u32 %s26, 1
          %s343 = scalar_lea.sflag [#allocation7], %s342
          %s344 = sand.u32 %s100, 1
          %s345 = smul.addr %s344, 8
          %s346 = scalar_lea.vmem [#allocation6], %s345
          %s348 = ssub.s32 128, 128
          %349 = vsyncadd %s343, %s348
          %s350 = smul.addr %s34, 128
          %s351 = scalar_lea.hbm %s2, %s350
          %s353 = sshll.u32 %s346, 4
          %s354 = int_to_ptr.vmem [resolvable:$true] %s353
          %356 = dma.hbm_to_vmem [thread:$0]  %s351, 128, %s354, %s343
        $region32: #{tpu_custom_call.1} parent=27 // pred_fallthru
          _
        // Predicated region
        $region33: #{tpu_custom_call.1} parent=27 // pred_check
          %p357 = pneg %p136
        $region34: #{tpu_custom_call.1} parent=27 // pred_check_branch
          %359 = sbr.rel (%p357) target = $region36
        $region35: #{tpu_custom_call.1} parent=27 // pred_region
          %s360 = sand.u32 %s26, 1
          %s361 = scalar_lea.sflag [#allocation7], %s360
          %s362 = sand.u32 %s126, 1
          %s363 = smul.addr %s362, 192
          %s364 = scalar_lea.vmem [#allocation8], %s363
          %s366 = ssub.s32 3072, 3072
          %367 = vsyncadd %s361, %s366
          %s368 = smul.addr %s34, 48
          %s369 = smul.addr %s368, 64
          %s370 = scalar_lea.hbm %s3, %s369
          %s371 = sshll.u32 %s364, 4
          %s372 = int_to_ptr.vmem [resolvable:$true] %s371
          %377 = dma.hbm_to_vmem [thread:$0]  %s370, 3072, %s372, %s361, 192, 192, 12
        $region36: #{tpu_custom_call.1} parent=27 // pred_fallthru
          _
        // Predicated region
        $region37: #{tpu_custom_call.1} parent=27 // pred_check
          %p378 = pneg %p162
        $region38: #{tpu_custom_call.1} parent=27 // pred_check_branch
          %380 = sbr.rel (%p378) target = $region40
        $region39: #{tpu_custom_call.1} parent=27 // pred_region
          %s381 = sand.u32 %s26, 1
          %s382 = scalar_lea.sflag [#allocation10], %s381
          %s383 = sand.u32 %s152, 1
          %s384 = smul.addr %s383, 64
          %s385 = scalar_lea.vmem [#allocation9], %s384
          %s387 = ssub.s32 1024, 1024
          %388 = vsyncadd %s382, %s387
          %s389 = smul.addr %s34, 16
          %s390 = smul.addr %s389, 64
          %s391 = scalar_lea.hbm %s4, %s390
          %s392 = sshll.u32 %s385, 4
          %s393 = int_to_ptr.vmem [resolvable:$true] %s392
          %398 = dma.hbm_to_vmem [thread:$0]  %s391, 1024, %s393, %s382, 64, 64, 4
        $region40: #{tpu_custom_call.1} parent=27 // pred_fallthru
          _
        // Predicated region
        $region41: #{tpu_custom_call.1} parent=27 // pred_check
          %p399 = pneg %p188
        $region42: #{tpu_custom_call.1} parent=27 // pred_check_branch
          %401 = sbr.rel (%p399) target = $region44
        $region43: #{tpu_custom_call.1} parent=27 // pred_region
          %s402 = sand.u32 %s26, 1
          %s403 = scalar_lea.sflag [#allocation10], %s402
          %s404 = sand.u32 %s178, 1
          %s405 = smul.addr %s404, 256
          %s406 = scalar_lea.vmem [#allocation11], %s405
          %s408 = ssub.s32 4096, 4096
          %409 = vsyncadd %s403, %s408
          %s410 = smul.addr %s34, 64
          %s411 = smul.addr %s410, 64
          %s412 = scalar_lea.hbm %s5, %s411
          %s413 = sshll.u32 %s406, 4
          %s414 = int_to_ptr.vmem [resolvable:$true] %s413
          %419 = dma.hbm_to_vmem [thread:$0]  %s412, 4096, %s414, %s403, 256, 256, 16
        $region44: #{tpu_custom_call.1} parent=27 // pred_fallthru
          _
        // Predicated region
        $region45: #{tpu_custom_call.1} parent=27 // pred_check
          %p420 = pneg %p214
        $region46: #{tpu_custom_call.1} parent=27 // pred_check_branch
          %422 = sbr.rel (%p420) target = $region48
        $region47: #{tpu_custom_call.1} parent=27 // pred_region
          %p423 = scmp.lt.s32.totalorder %s34, 1
          %s424 = scalar_select %p423, %s34, 1
          %s425 = smul.addr %s424, 4
          %s426 = scalar_lea.vmem %s6, %s425
        $region48: #{tpu_custom_call.1} parent=27 // pred_fallthru
          _
        // Predicated region
        $region49: #{tpu_custom_call.1} parent=27 // pred_check
          %p427 = pneg %p240
        $region50: #{tpu_custom_call.1} parent=27 // pred_check_branch
          %429 = sbr.rel (%p427) target = $region52
        $region51: #{tpu_custom_call.1} parent=27 // pred_region
          %s430 = sand.u32 %s230, 1
          %s431 = scalar_lea.sflag [#allocation13], %s430
          %s432 = sand.u32 %s230, 1
          %s433 = smul.addr %s432, 256
          %s434 = scalar_lea.vmem [#allocation12], %s433
          %s436 = ssub.s32 4096, 4096
          %437 = vsyncadd %s431, %s436
          %s438 = smul.addr %s34, 64
          %s439 = smul.addr %s438, 64
          %s440 = scalar_lea.hbm %s7, %s439
          %s441 = sshll.u32 %s434, 4
          %s442 = int_to_ptr.vmem [resolvable:$true] %s441
          %447 = dma.hbm_to_vmem [thread:$0]  %s440, 4096, %s442, %s431, 64, 64, 4
        $region52: #{tpu_custom_call.1} parent=27 // pred_fallthru
          _
      $region28: #{tpu_custom_call.1} parent=5 // pred_fallthru
        _
      %p448 = scmp.le.s32.totalorder 1, %s26
      %p449 = scmp.lt.s32.totalorder %s26, 3
      %p450 = pnand %p448, %p449
      %p451 = pneg %p450
      // Predicated region
      $region53: #{tpu_custom_call.1} parent=5 // pred_check
        _
      $region54: #{tpu_custom_call.1} parent=5 // pred_check_branch
        %453 = sbr.rel (%p450) target = $region56
      $region55: #{tpu_custom_call.1} parent=5 // pred_region
        %s454 = ssub.s32 %s26, 1
        // Predicated region
        $region57: #{tpu_custom_call.1} parent=55 // pred_check
          %p455 = pneg %p64
        $region58: #{tpu_custom_call.1} parent=55 // pred_check_branch
          %457 = sbr.rel (%p455) target = $region60
        $region59: #{tpu_custom_call.1} parent=55 // pred_region
          %458 = dma.done [#allocation4], 128
        $region60: #{tpu_custom_call.1} parent=55 // pred_fallthru
          _
        %s459 = sand.u32 %s31, 1
        %s460 = scalar_lea.sflag [#allocation7], %s459
        %s461 = sand.u32 %s103, 1
        %s462 = smul.addr %s461, 8
        %s463 = scalar_lea.vmem [#allocation6], %s462
        // Predicated region
        $region61: #{tpu_custom_call.1} parent=55 // pred_check
          %p464 = pneg %p116
        $region62: #{tpu_custom_call.1} parent=55 // pred_check_branch
          %466 = sbr.rel (%p464) target = $region64
        $region63: #{tpu_custom_call.1} parent=55 // pred_region
          %467 = dma.done %s460, 128
        $region64: #{tpu_custom_call.1} parent=55 // pred_fallthru
          _
        %s468 = sand.u32 %s31, 1
        %s469 = scalar_lea.sflag [#allocation7], %s468
        %s470 = sand.u32 %s129, 1
        %s471 = smul.addr %s470, 192
        %s472 = scalar_lea.vmem [#allocation8], %s471
        // Predicated region
        $region65: #{tpu_custom_call.1} parent=55 // pred_check
          %p473 = pneg %p142
        $region66: #{tpu_custom_call.1} parent=55 // pred_check_branch
          %475 = sbr.rel (%p473) target = $region68
        $region67: #{tpu_custom_call.1} parent=55 // pred_region
          %476 = dma.done %s469, 3072
        $region68: #{tpu_custom_call.1} parent=55 // pred_fallthru
          _
        %s477 = sand.u32 %s31, 1
        %s478 = scalar_lea.sflag [#allocation10], %s477
        %s479 = sand.u32 %s155, 1
        %s480 = smul.addr %s479, 64
        %s481 = scalar_lea.vmem [#allocation9], %s480
        // Predicated region
        $region69: #{tpu_custom_call.1} parent=55 // pred_check
          %p482 = pneg %p168
        $region70: #{tpu_custom_call.1} parent=55 // pred_check_branch
          %484 = sbr.rel (%p482) target = $region72
        $region71: #{tpu_custom_call.1} parent=55 // pred_region
          %485 = dma.done %s478, 1024
        $region72: #{tpu_custom_call.1} parent=55 // pred_fallthru
          _
        %s486 = sand.u32 %s31, 1
        %s487 = scalar_lea.sflag [#allocation10], %s486
        %s488 = sand.u32 %s181, 1
        %s489 = smul.addr %s488, 256
        %s490 = scalar_lea.vmem [#allocation11], %s489
        // Predicated region
        $region73: #{tpu_custom_call.1} parent=55 // pred_check
          %p491 = pneg %p194
        $region74: #{tpu_custom_call.1} parent=55 // pred_check_branch
          %493 = sbr.rel (%p491) target = $region76
        $region75: #{tpu_custom_call.1} parent=55 // pred_region
          %494 = dma.done %s487, 4096
        $region76: #{tpu_custom_call.1} parent=55 // pred_fallthru
          _
        %s495 = sand.u32 %s233, 1
        %s496 = scalar_lea.sflag [#allocation13], %s495
        %s497 = sand.u32 %s233, 1
        %s498 = smul.addr %s497, 256
        %s499 = scalar_lea.vmem [#allocation12], %s498
        // Predicated region
        $region77: #{tpu_custom_call.1} parent=55 // pred_check
          %p500 = pneg %p246
        $region78: #{tpu_custom_call.1} parent=55 // pred_check_branch
          %502 = sbr.rel (%p500) target = $region80
        $region79: #{tpu_custom_call.1} parent=55 // pred_region
          %503 = dma.done %s496, 4096
        $region80: #{tpu_custom_call.1} parent=55 // pred_fallthru
          _
        %p504 = pneg %p64
        %p505 = pneg %p61
        %s506 = smul.u32 2, %s35
        %p507 = scmp.lt.s32.totalorder %s506, 1
        %s508 = scalar_select %p507, %s506, 1
        %s509 = scalar_lea.vmem %s1, %s508
        %p510 = pneg %p90
        %p511 = pneg %p87
        %s512 = sand.u32 %s31, 1
        %s513 = scalar_lea.sflag [#allocation7], %s512
        %s514 = sand.u32 %s103, 1
        %s515 = smul.addr %s514, 8
        %s516 = scalar_lea.vmem [#allocation6], %s515
        %p517 = pneg %p116
        %p518 = pneg %p113
        %s519 = sand.u32 %s31, 1
        %s520 = scalar_lea.sflag [#allocation7], %s519
        %s521 = sand.u32 %s129, 1
        %s522 = smul.addr %s521, 192
        %s523 = scalar_lea.vmem [#allocation8], %s522
        %p524 = pneg %p142
        %p525 = pneg %p139
        %s526 = sand.u32 %s31, 1
        %s527 = scalar_lea.sflag [#allocation10], %s526
        %s528 = sand.u32 %s155, 1
        %s529 = smul.addr %s528, 64
        %s530 = scalar_lea.vmem [#allocation9], %s529
        %p531 = pneg %p168
        %p532 = pneg %p165
        %s533 = sand.u32 %s31, 1
        %s534 = scalar_lea.sflag [#allocation10], %s533
        %s535 = sand.u32 %s181, 1
        %s536 = smul.addr %s535, 256
        %s537 = scalar_lea.vmem [#allocation11], %s536
        %p538 = pneg %p194
        %p539 = pneg %p191
        %p540 = scmp.lt.s32.totalorder %s36, 1
        %s541 = scalar_select %p540, %s36, 1
        %s542 = smul.addr %s541, 4
        %s543 = scalar_lea.vmem %s6, %s542
        %p544 = pneg %p220
        %p545 = pneg %p217
        %s546 = sand.u32 %s233, 1
        %s547 = scalar_lea.sflag [#allocation13], %s546
        %s548 = sand.u32 %s233, 1
        %s549 = smul.addr %s548, 256
        %s550 = scalar_lea.vmem [#allocation12], %s549
        %p551 = pneg %p246
        %p552 = pneg %p243
        %p553 = pneg %p267
        %p554 = pneg %p264
        %p555 = pneg %p293
        %p556 = pneg %p290
        %s557 = smul.u32 2, %s35
        %s558 = smul.u32 2, %s35
        %p559 = scmp.lt.s32.totalorder %s558, 1
        %s560 = scalar_select %p559, %s558, 1
        %s561 = scalar_lea.vmem %s1, %s560
        %s562 = smul.u32 2, %s35
        %p563 = scmp.lt.s32.totalorder %s36, 1
        %s564 = scalar_select %p563, %s36, 1
        %s565 = smul.addr %s564, 4
        %s566 = scalar_lea.vmem %s6, %s565
        %s567 = smul.u32 2, %s35
        %p569 = scmp.eq.s32.totalorder %s36, 0
        // Predicated region
        $region81: #{tpu_custom_call.1} parent=55 // pred_check
          %p570 = pneg %p569
        $region82: #{tpu_custom_call.1} parent=55 // pred_check_branch
          %572 = sbr.rel (%p570) target = $region84
        $region83: #{tpu_custom_call.1} parent=55 // pred_region
          %v573 = vld [vmem:[#allocation3] sm:$0xf]
          %v574 = vld [vmem:[#allocation3 + $0x4] sm:$0xf]
          %v575 = vunpack.c.l.bf16 %v573
          %v576 = vunpack.c.l.bf16 %v574
          %577 = vst [vmem:[#allocation2] sm:$0xff] %v575
          %578 = vst [vmem:[#allocation2 + $0x8] sm:$0xff] %v576
        $region84: #{tpu_custom_call.1} parent=55 // pred_fallthru
          _
        %v579 = vld [vmem:[#allocation2] sm:$0xff]
        %v580 = vld [vmem:[#allocation2 + $0x8] sm:$0xff]
        %v581 = vld [vmem:[%s463] sm:$0xff]
        %582 = vadd.xlane.f32.xlu0 %v579
        %v583 = vpop.xlane.xlu0 %582
        %584 = vadd.xlane.f32.xlu0 %v580
        %v585 = vpop.xlane.xlu0 %584
        %v586 = vrcp.pop 128.0
        %v587 = vmul.f32 %v583, %v586
        %v588 = vmul.f32 %v585, %v586
        %v589 = vsub.f32 %v579, %v587
        %v590 = vsub.f32 %v580, %v588
        %v591 = vmul.f32 %v589, %v589
        %v592 = vmul.f32 %v590, %v590
        %593 = vadd.xlane.f32.xlu0 %v591
        %v594 = vpop.xlane.xlu0 %593
        %595 = vadd.xlane.f32.xlu0 %v592
        %v596 = vpop.xlane.xlu0 %595
        %v597 = vmul.f32 %v594, %v586
        %v598 = vmul.f32 %v596, %v586
        %v599 = vadd.f32 %v597, 1e-05
        %v600 = vadd.f32 %v598, 1e-05
        %v601 = vrsqrt.pop %v599
        %v602 = vrsqrt.pop %v600
        %v603 = vmul.f32 %v589, %v601
        %v604 = vmul.f32 %v590, %v602
        %v605 = vlaneseq
        %v606 = vshrl.u32 %v605, 7
        %v607 = vsub.s32 0, %v606
        %v608 = vrot.slane %v581, %v607
        %v609 = vmul.f32 %v603, %v608
        %v610 = vmul.f32 %v604, %v608
        %v611 = vlaneseq
        %v612 = vshrl.u32 %v611, 7
        %v613 = vsub.s32 1, %v612
        %v614 = vrot.slane %v581, %v613
        %v615 = vadd.f32 %v609, %v614
        %v616 = vadd.f32 %v610, %v614
        %v617 = vpack.c.bf16 %v616, %v615
        %v618 = vld [vmem:[%s472] sm:$0xff]
        %v619 = vld [vmem:[%s472 + $0x8] sm:$0xf]
        %v620 = vld [vmem:[%s472 + $0xc] sm:$0xff]
        %v621 = vld [vmem:[%s472 + $0x14] sm:$0xf]
        %v622 = vld [vmem:[%s472 + $0x18] sm:$0xff]
        %v623 = vld [vmem:[%s472 + $0x20] sm:$0xf]
        %v624 = vld [vmem:[%s472 + $0x24] sm:$0xff]
        %v625 = vld [vmem:[%s472 + $0x2c] sm:$0xf]
        %v626 = vld [vmem:[%s472 + $0x30] sm:$0xff]
        %v627 = vld [vmem:[%s472 + $0x38] sm:$0xf]
        %v628 = vld [vmem:[%s472 + $0x3c] sm:$0xff]
        %v629 = vld [vmem:[%s472 + $0x44] sm:$0xf]
        %v630 = vld [vmem:[%s472 + $0x48] sm:$0xff]
        %v631 = vld [vmem:[%s472 + $0x50] sm:$0xf]
        %v632 = vld [vmem:[%s472 + $0x54] sm:$0xff]
        %v633 = vld [vmem:[%s472 + $0x5c] sm:$0xf]
        %v634 = vld [vmem:[%s472 + $0x60] sm:$0xff]
        %v635 = vld [vmem:[%s472 + $0x68] sm:$0xf]
        %v636 = vld [vmem:[%s472 + $0x6c] sm:$0xff]
        %v637 = vld [vmem:[%s472 + $0x74] sm:$0xf]
        %v638 = vld [vmem:[%s472 + $0x78] sm:$0xff]
        %v639 = vld [vmem:[%s472 + $0x80] sm:$0xf]
        %v640 = vld [vmem:[%s472 + $0x84] sm:$0xff]
        %v641 = vld [vmem:[%s472 + $0x8c] sm:$0xf]
        %v642 = vld [vmem:[%s472 + $0x90] sm:$0xff]
        %v643 = vld [vmem:[%s472 + $0x98] sm:$0xf]
        %v644 = vld [vmem:[%s472 + $0x9c] sm:$0xff]
        %v645 = vld [vmem:[%s472 + $0xa4] sm:$0xf]
        %v646 = vld [vmem:[%s472 + $0xa8] sm:$0xff]
        %v647 = vld [vmem:[%s472 + $0xb0] sm:$0xf]
        %v648 = vld [vmem:[%s472 + $0xb4] sm:$0xff]
        %v649 = vld [vmem:[%s472 + $0xbc] sm:$0xf]
        %v682 = vunpack.c.l.b16 %v618
        %v683 = vunpack.c.h.b16 %v618
        %v684 = vunpack.c.l.b16 %v619
        %v685 = vunpack.c.l.b16 %v620
        %v686 = vunpack.c.h.b16 %v620
        %v687 = vunpack.c.l.b16 %v621
        %v688 = vunpack.c.l.b16 %v622
        %v689 = vunpack.c.h.b16 %v622
        %v690 = vunpack.c.l.b16 %v623
        %v691 = vunpack.c.l.b16 %v624
        %v692 = vunpack.c.h.b16 %v624
        %v693 = vunpack.c.l.b16 %v625
        %v694 = vunpack.c.l.b16 %v626
        %v695 = vunpack.c.h.b16 %v626
        %v696 = vunpack.c.l.b16 %v627
        %v697 = vunpack.c.l.b16 %v628
        %v698 = vunpack.c.h.b16 %v628
        %v699 = vunpack.c.l.b16 %v629
        %v700 = vunpack.c.l.b16 %v630
        %v701 = vunpack.c.h.b16 %v630
        %v702 = vunpack.c.l.b16 %v631
        %v703 = vunpack.c.l.b16 %v632
        %v704 = vunpack.c.h.b16 %v632
        %v705 = vunpack.c.l.b16 %v633
        %v706 = vunpack.c.l.b16 %v634
        %v707 = vunpack.c.h.b16 %v634
        %v708 = vunpack.c.l.b16 %v635
        %v709 = vunpack.c.l.b16 %v636
        %v710 = vunpack.c.h.b16 %v636
        %v711 = vunpack.c.l.b16 %v637
        %v712 = vunpack.c.l.b16 %v638
        %v713 = vunpack.c.h.b16 %v638
        %v714 = vunpack.c.l.b16 %v639
        %v715 = vunpack.c.l.b16 %v640
        %v716 = vunpack.c.h.b16 %v640
        %v717 = vunpack.c.l.b16 %v641
        %v718 = vunpack.c.l.b16 %v642
        %v719 = vunpack.c.h.b16 %v642
        %v720 = vunpack.c.l.b16 %v643
        %v721 = vunpack.c.l.b16 %v644
        %v722 = vunpack.c.h.b16 %v644
        %v723 = vunpack.c.l.b16 %v645
        %v724 = vunpack.c.l.b16 %v646
        %v725 = vunpack.c.h.b16 %v646
        %v726 = vunpack.c.l.b16 %v647
        %v727 = vunpack.c.l.b16 %v648
        %v728 = vunpack.c.h.b16 %v648
        %v729 = vunpack.c.l.b16 %v649
        %v730 = vpack.c.b16 %v685, %v682
        %v731 = vpack.c.b16 %v686, %v683
        %v732 = vpack.c.b16 %v687, %v684
        %v733 = vpack.c.b16 %v691, %v688
        %v734 = vpack.c.b16 %v692, %v689
        %v735 = vpack.c.b16 %v693, %v690
        %v736 = vpack.c.b16 %v697, %v694
        %v737 = vpack.c.b16 %v698, %v695
        %v738 = vpack.c.b16 %v699, %v696
        %v739 = vpack.c.b16 %v703, %v700
        %v740 = vpack.c.b16 %v704, %v701
        %v741 = vpack.c.b16 %v705, %v702
        %v742 = vpack.c.b16 %v709, %v706
        %v743 = vpack.c.b16 %v710, %v707
        %v744 = vpack.c.b16 %v711, %v708
        %v745 = vpack.c.b16 %v715, %v712
        %v746 = vpack.c.b16 %v716, %v713
        %v747 = vpack.c.b16 %v717, %v714
        %v748 = vpack.c.b16 %v721, %v718
        %v749 = vpack.c.b16 %v722, %v719
        %v750 = vpack.c.b16 %v723, %v720
        %v751 = vpack.c.b16 %v727, %v724
        %v752 = vpack.c.b16 %v728, %v725
        %v753 = vpack.c.b16 %v729, %v726
        %778 = vmatprep.subr.bf16.mxu0 %v731
        %779 = vmatpush1.bf16.msra.mxu0 %v730
        %780 = vmatprep.subr.bf16.mxu0 %v734
        %781 = vmatpush1.bf16.msra.mxu0 %v733
        %782 = vmatprep.subr.bf16.mxu0 %v737
        %783 = vmatpush1.bf16.msra.mxu0 %v736
        %784 = vmatprep.subr.bf16.mxu0 %v740
        %785 = vmatpush1.bf16.msra.mxu0 %v739
        %786 = vmatprep.subr.bf16.mxu0 %v743
        %787 = vmatpush1.bf16.msra.mxu0 %v742
        %788 = vmatprep.subr.bf16.mxu0 %v746
        %789 = vmatpush1.bf16.msra.mxu0 %v745
        %790 = vmatprep.subr.bf16.mxu0 %v749
        %791 = vmatpush1.bf16.msra.mxu0 %v748
        %792 = vmatprep.subr.bf16.mxu0 %v752
        %793 = vmatpush1.bf16.msra.mxu0 %v751
        %794 = vmatprep.subr.bf16.mxu0 0
        %795 = vmatpush1.bf16.msra.mxu0 0
        %796 = vmatprep.subr.bf16.mxu0 0
        %797 = vmatpush1.bf16.msra.mxu0 0
        %798 = vmatprep.subr.bf16.mxu0 0
        %799 = vmatpush1.bf16.msra.mxu0 0
        %800 = vmatprep.subr.bf16.mxu0 0
        %801 = vmatpush1.bf16.msra.mxu0 0
        %802 = vmatprep.subr.bf16.mxu0 0
        %803 = vmatpush1.bf16.msra.mxu0 0
        %804 = vmatprep.subr.bf16.mxu0 0
        %805 = vmatpush1.bf16.msra.mxu0 0
        %806 = vmatprep.subr.bf16.mxu0 0
        %807 = vmatpush1.bf16.msra.mxu0 0
        %808 = vmatprep.subr.bf16.mxu0 0
        %809 = vmatpush1.bf16.msra.mxu0 0
        %810 = vmatprep.mubr.bf16.mxu0 0
        %811 = vmatmul.mubr.bf16.gmra.mrb[0].mxu0 %v617
        %v812 = vpop.f32.mrb[0].mxu0
        %v813 = vadd.f32 0.0, %v812
        %v814 = vpop.f32.mrb[0].mxu0
        %v815 = vadd.f32 0.0, %v814
        %v816 = vpop.f32.mrb[0].mxu0
        %v817 = vadd.f32 0.0, %v816
        %v818 = vpop.f32.mrb[0].mxu0
        %v819 = vadd.f32 0.0, %v818
        %820 = vdwg.mxu0
        %821 = vmatprep.subr.bf16.mxu0 0
        %822 = vmatpush1.bf16.msra.mxu0 %v732
        %823 = vmatprep.subr.bf16.mxu0 0
        %824 = vmatpush1.bf16.msra.mxu0 %v735
        %825 = vmatprep.subr.bf16.mxu0 0
        %826 = vmatpush1.bf16.msra.mxu0 %v738
        %827 = vmatprep.subr.bf16.mxu0 0
        %828 = vmatpush1.bf16.msra.mxu0 %v741
        %829 = vmatprep.subr.bf16.mxu0 0
        %830 = vmatpush1.bf16.msra.mxu0 %v744
        %831 = vmatprep.subr.bf16.mxu0 0
        %832 = vmatpush1.bf16.msra.mxu0 %v747
        %833 = vmatprep.subr.bf16.mxu0 0
        %834 = vmatpush1.bf16.msra.mxu0 %v750
        %835 = vmatprep.subr.bf16.mxu0 0
        %836 = vmatpush1.bf16.msra.mxu0 %v753
        %837 = vmatprep.subr.bf16.mxu0 0
        %838 = vmatpush1.bf16.msra.mxu0 0
        %839 = vmatprep.subr.bf16.mxu0 0
        %840 = vmatpush1.bf16.msra.mxu0 0
        %841 = vmatprep.subr.bf16.mxu0 0
        %842 = vmatpush1.bf16.msra.mxu0 0
        %843 = vmatprep.subr.bf16.mxu0 0
        %844 = vmatpush1.bf16.msra.mxu0 0
        %845 = vmatprep.subr.bf16.mxu0 0
        %846 = vmatpush1.bf16.msra.mxu0 0
        %847 = vmatprep.subr.bf16.mxu0 0
        %848 = vmatpush1.bf16.msra.mxu0 0
        %849 = vmatprep.subr.bf16.mxu0 0
        %850 = vmatpush1.bf16.msra.mxu0 0
        %851 = vmatprep.subr.bf16.mxu0 0
        %852 = vmatpush1.bf16.msra.mxu0 0
        %853 = vmatprep.mubr.bf16.mxu0 0
        %854 = vmatmul.mubr.bf16.gmra.mrb[0].mxu0 %v617
        %v855 = vpop.f32.mrb[0].mxu0
        %v856 = vadd.f32 0.0, %v855
        %v857 = vpop.f32.mrb[0].mxu0
        %v858 = vpop.f32.mrb[0].mxu0
        %v859 = vadd.f32 0.0, %v858
        %v860 = vpop.f32.mrb[0].mxu0
        %861 = vdwg.mxu0
        %864 = vrot.lane.b32.xlu0 %v813, 96
        %v865 = vpop.permute.xlu0 %864
        %866 = vrot.lane.b32.xlu0 %v817, 96
        %v867 = vpop.permute.xlu0 %866
        %870 = vrot.lane.b32.xlu0 %v813, 64
        %v871 = vpop.permute.xlu0 %870
        %872 = vrot.lane.b32.xlu0 %v817, 64
        %v873 = vpop.permute.xlu0 %872
        %876 = vrot.lane.b32.xlu0 %v813, 32
        %v877 = vpop.permute.xlu0 %876
        %878 = vrot.lane.b32.xlu0 %v817, 32
        %v879 = vpop.permute.xlu0 %878
        %v882 = vcombine.low %v813, %v871
        %v883 = vcombine.high %v813, %v871
        %v885 = vunpack.c.l.s4 1983009808
        %v886 = vunpack.c.0.s8 %v885
        %v887 = vlaneseq
        %v888 = vshrl.u32 %v887, 7
        %v889 = vsub.s32 %v886, %v888
        %v890 = vrot.slane %v882, %v889
        %v892 = vunpack.c.l.s4 1983009808
        %v893 = vunpack.c.0.s8 %v892
        %v894 = vlaneseq
        %v895 = vshrl.u32 %v894, 7
        %v896 = vsub.s32 %v893, %v895
        %v897 = vrot.slane %v883, %v896
        %v898 = vcombine.low %v865, %v877
        %v899 = vcombine.high %v865, %v877
        %v901 = vunpack.c.l.s4 1983009808
        %v902 = vunpack.c.0.s8 %v901
        %v903 = vlaneseq
        %v904 = vshrl.u32 %v903, 7
        %v905 = vsub.s32 %v902, %v904
        %v906 = vrot.slane %v898, %v905
        %v908 = vunpack.c.l.s4 1983009808
        %v909 = vunpack.c.0.s8 %v908
        %v910 = vlaneseq
        %v911 = vshrl.u32 %v910, 7
        %v912 = vsub.s32 %v909, %v911
        %v913 = vrot.slane %v899, %v912
        %v914 = vcombine.low %v890, %v906
        %v915 = vcombine.high %v890, %v906
        %v917 = vunpack.c.l.s4 1934713408
        %v918 = vunpack.c.0.s8 %v917
        %v919 = vlaneseq
        %v920 = vshrl.u32 %v919, 7
        %v921 = vsub.s32 %v918, %v920
        %v922 = vrot.slane %v914, %v921
        %v924 = vunpack.c.l.s4 1934713408
        %v925 = vunpack.c.0.s8 %v924
        %v926 = vlaneseq
        %v927 = vshrl.u32 %v926, 7
        %v928 = vsub.s32 %v925, %v927
        %v929 = vrot.slane %v915, %v928
        %v930 = vcombine.low %v897, %v913
        %v931 = vcombine.high %v897, %v913
        %v933 = vunpack.c.l.s4 1934713408
        %v934 = vunpack.c.0.s8 %v933
        %v935 = vlaneseq
        %v936 = vshrl.u32 %v935, 7
        %v937 = vsub.s32 %v934, %v936
        %v938 = vrot.slane %v930, %v937
        %v940 = vunpack.c.l.s4 1934713408
        %v941 = vunpack.c.0.s8 %v940
        %v942 = vlaneseq
        %v943 = vshrl.u32 %v942, 7
        %v944 = vsub.s32 %v941, %v943
        %v945 = vrot.slane %v931, %v944
        %v946 = vcombine.high %v922, 0.0
        %v947 = vcombine.high %v929, 0.0
        %v948 = vcombine.high %v938, 0.0
        %v949 = vcombine.high %v945, 0.0
        %v950 = vcombine.low %v817, %v873
        %v951 = vcombine.high %v817, %v873
        %v953 = vunpack.c.l.s4 1983009808
        %v954 = vunpack.c.0.s8 %v953
        %v955 = vlaneseq
        %v956 = vshrl.u32 %v955, 7
        %v957 = vsub.s32 %v954, %v956
        %v958 = vrot.slane %v950, %v957
        %v960 = vunpack.c.l.s4 1983009808
        %v961 = vunpack.c.0.s8 %v960
        %v962 = vlaneseq
        %v963 = vshrl.u32 %v962, 7
        %v964 = vsub.s32 %v961, %v963
        %v965 = vrot.slane %v951, %v964
        %v966 = vcombine.low %v867, %v879
        %v967 = vcombine.high %v867, %v879
        %v969 = vunpack.c.l.s4 1983009808
        %v970 = vunpack.c.0.s8 %v969
        %v971 = vlaneseq
        %v972 = vshrl.u32 %v971, 7
        %v973 = vsub.s32 %v970, %v972
        %v974 = vrot.slane %v966, %v973
        %v976 = vunpack.c.l.s4 1983009808
        %v977 = vunpack.c.0.s8 %v976
        %v978 = vlaneseq
        %v979 = vshrl.u32 %v978, 7
        %v980 = vsub.s32 %v977, %v979
        %v981 = vrot.slane %v967, %v980
        %v982 = vcombine.low %v958, %v974
        %v983 = vcombine.high %v958, %v974
        %v985 = vunpack.c.l.s4 1934713408
        %v986 = vunpack.c.0.s8 %v985
        %v987 = vlaneseq
        %v988 = vshrl.u32 %v987, 7
        %v989 = vsub.s32 %v986, %v988
        %v990 = vrot.slane %v982, %v989
        %v992 = vunpack.c.l.s4 1934713408
        %v993 = vunpack.c.0.s8 %v992
        %v994 = vlaneseq
        %v995 = vshrl.u32 %v994, 7
        %v996 = vsub.s32 %v993, %v995
        %v997 = vrot.slane %v983, %v996
        %v998 = vcombine.low %v965, %v981
        %v999 = vcombine.high %v965, %v981
        %v1001 = vunpack.c.l.s4 1934713408
        %v1002 = vunpack.c.0.s8 %v1001
        %v1003 = vlaneseq
        %v1004 = vshrl.u32 %v1003, 7
        %v1005 = vsub.s32 %v1002, %v1004
        %v1006 = vrot.slane %v998, %v1005
        %v1008 = vunpack.c.l.s4 1934713408
        %v1009 = vunpack.c.0.s8 %v1008
        %v1010 = vlaneseq
        %v1011 = vshrl.u32 %v1010, 7
        %v1012 = vsub.s32 %v1009, %v1011
        %v1013 = vrot.slane %v999, %v1012
        %v1014 = vcombine.high %v990, 0.0
        %v1015 = vcombine.high %v997, 0.0
        %v1016 = vcombine.high %v1006, 0.0
        %v1017 = vcombine.high %v1013, 0.0
        %v1018 = vcombine.low %v922, %v929
        %v1020 = vunpack.c.l.s4 1983009808
        %v1021 = vunpack.c.0.s8 %v1020
        %v1022 = vlaneseq
        %v1023 = vshrl.u32 %v1022, 7
        %v1024 = vsub.s32 %v1021, %v1023
        %v1025 = vrot.slane %v1018, %v1024
        %v1026 = vcombine.low %v946, %v947
        %v1028 = vunpack.c.l.s4 1983009808
        %v1029 = vunpack.c.0.s8 %v1028
        %v1030 = vlaneseq
        %v1031 = vshrl.u32 %v1030, 7
        %v1032 = vsub.s32 %v1029, %v1031
        %v1033 = vrot.slane %v1026, %v1032
        %v1034 = vcombine.low %v938, %v945
        %v1036 = vunpack.c.l.s4 1983009808
        %v1037 = vunpack.c.0.s8 %v1036
        %v1038 = vlaneseq
        %v1039 = vshrl.u32 %v1038, 7
        %v1040 = vsub.s32 %v1037, %v1039
        %v1041 = vrot.slane %v1034, %v1040
        %v1042 = vcombine.low %v948, %v949
        %v1044 = vunpack.c.l.s4 1983009808
        %v1045 = vunpack.c.0.s8 %v1044
        %v1046 = vlaneseq
        %v1047 = vshrl.u32 %v1046, 7
        %v1048 = vsub.s32 %v1045, %v1047
        %v1049 = vrot.slane %v1042, %v1048
        %v1050 = vcombine.low %v1025, %v1033
        %v1051 = vcombine.high %v1025, %v1033
        %v1053 = vunpack.c.l.s4 1934713408
        %v1054 = vunpack.c.0.s8 %v1053
        %v1055 = vlaneseq
        %v1056 = vshrl.u32 %v1055, 7
        %v1057 = vsub.s32 %v1054, %v1056
        %v1058 = vrot.slane %v1050, %v1057
        %v1060 = vunpack.c.l.s4 1934713408
        %v1061 = vunpack.c.0.s8 %v1060
        %v1062 = vlaneseq
        %v1063 = vshrl.u32 %v1062, 7
        %v1064 = vsub.s32 %v1061, %v1063
        %v1065 = vrot.slane %v1051, %v1064
        %v1066 = vcombine.low %v1041, %v1049
        %v1067 = vcombine.high %v1041, %v1049
        %v1069 = vunpack.c.l.s4 1934713408
        %v1070 = vunpack.c.0.s8 %v1069
        %v1071 = vlaneseq
        %v1072 = vshrl.u32 %v1071, 7
        %v1073 = vsub.s32 %v1070, %v1072
        %v1074 = vrot.slane %v1066, %v1073
        %v1076 = vunpack.c.l.s4 1934713408
        %v1077 = vunpack.c.0.s8 %v1076
        %v1078 = vlaneseq
        %v1079 = vshrl.u32 %v1078, 7
        %v1080 = vsub.s32 %v1077, %v1079
        %v1081 = vrot.slane %v1067, %v1080
        %v1082 = vcombine.low %v1058, %v1074
        %v1083 = vcombine.high %v1058, %v1074
        %v1084 = vcombine.low %v1065, %v1081
        %v1085 = vcombine.high %v1065, %v1081
        %v1086 = vcombine.low %v990, %v997
        %v1088 = vunpack.c.l.s4 1983009808
        %v1089 = vunpack.c.0.s8 %v1088
        %v1090 = vlaneseq
        %v1091 = vshrl.u32 %v1090, 7
        %v1092 = vsub.s32 %v1089, %v1091
        %v1093 = vrot.slane %v1086, %v1092
        %v1094 = vcombine.low %v1014, %v1015
        %v1096 = vunpack.c.l.s4 1983009808
        %v1097 = vunpack.c.0.s8 %v1096
        %v1098 = vlaneseq
        %v1099 = vshrl.u32 %v1098, 7
        %v1100 = vsub.s32 %v1097, %v1099
        %v1101 = vrot.slane %v1094, %v1100
        %v1102 = vcombine.low %v1006, %v1013
        %v1104 = vunpack.c.l.s4 1983009808
        %v1105 = vunpack.c.0.s8 %v1104
        %v1106 = vlaneseq
        %v1107 = vshrl.u32 %v1106, 7
        %v1108 = vsub.s32 %v1105, %v1107
        %v1109 = vrot.slane %v1102, %v1108
        %v1110 = vcombine.low %v1016, %v1017
        %v1112 = vunpack.c.l.s4 1983009808
        %v1113 = vunpack.c.0.s8 %v1112
        %v1114 = vlaneseq
        %v1115 = vshrl.u32 %v1114, 7
        %v1116 = vsub.s32 %v1113, %v1115
        %v1117 = vrot.slane %v1110, %v1116
        %v1118 = vcombine.low %v1093, %v1101
        %v1119 = vcombine.high %v1093, %v1101
        %v1121 = vunpack.c.l.s4 1934713408
        %v1122 = vunpack.c.0.s8 %v1121
        %v1123 = vlaneseq
        %v1124 = vshrl.u32 %v1123, 7
        %v1125 = vsub.s32 %v1122, %v1124
        %v1126 = vrot.slane %v1118, %v1125
        %v1128 = vunpack.c.l.s4 1934713408
        %v1129 = vunpack.c.0.s8 %v1128
        %v1130 = vlaneseq
        %v1131 = vshrl.u32 %v1130, 7
        %v1132 = vsub.s32 %v1129, %v1131
        %v1133 = vrot.slane %v1119, %v1132
        %v1134 = vcombine.low %v1109, %v1117
        %v1135 = vcombine.high %v1109, %v1117
        %v1137 = vunpack.c.l.s4 1934713408
        %v1138 = vunpack.c.0.s8 %v1137
        %v1139 = vlaneseq
        %v1140 = vshrl.u32 %v1139, 7
        %v1141 = vsub.s32 %v1138, %v1140
        %v1142 = vrot.slane %v1134, %v1141
        %v1144 = vunpack.c.l.s4 1934713408
        %v1145 = vunpack.c.0.s8 %v1144
        %v1146 = vlaneseq
        %v1147 = vshrl.u32 %v1146, 7
        %v1148 = vsub.s32 %v1145, %v1147
        %v1149 = vrot.slane %v1135, %v1148
        %v1150 = vcombine.low %v1126, %v1142
        %v1151 = vcombine.high %v1126, %v1142
        %v1152 = vcombine.low %v1133, %v1149
        %v1153 = vcombine.high %v1133, %v1149
        %v1154 = vpack.c.bf16 %v1082, %v1082
        %v1155 = vpack.c.bf16 %v1083, %v1083
        %v1156 = vpack.c.bf16 %v1084, %v1084
        %v1157 = vpack.c.bf16 %v1085, %v1085
        %v1158 = vpack.c.bf16 %v1150, %v1150
        %v1159 = vpack.c.bf16 %v1151, %v1151
        %v1160 = vpack.c.bf16 %v1152, %v1152
        %v1161 = vpack.c.bf16 %v1153, %v1153
        %1164 = vrot.lane.b32.xlu0 %v815, 96
        %v1165 = vpop.permute.xlu0 %1164
        %1166 = vrot.lane.b32.xlu0 %v819, 96
        %v1167 = vpop.permute.xlu0 %1166
        %1170 = vrot.lane.b32.xlu0 %v815, 64
        %v1171 = vpop.permute.xlu0 %1170
        %1172 = vrot.lane.b32.xlu0 %v819, 64
        %v1173 = vpop.permute.xlu0 %1172
        %1176 = vrot.lane.b32.xlu0 %v815, 32
        %v1177 = vpop.permute.xlu0 %1176
        %1178 = vrot.lane.b32.xlu0 %v819, 32
        %v1179 = vpop.permute.xlu0 %1178
        %v1182 = vcombine.low %v815, %v1171
        %v1183 = vcombine.high %v815, %v1171
        %v1185 = vunpack.c.l.s4 1983009808
        %v1186 = vunpack.c.0.s8 %v1185
        %v1187 = vlaneseq
        %v1188 = vshrl.u32 %v1187, 7
        %v1189 = vsub.s32 %v1186, %v1188
        %v1190 = vrot.slane %v1182, %v1189
        %v1192 = vunpack.c.l.s4 1983009808
        %v1193 = vunpack.c.0.s8 %v1192
        %v1194 = vlaneseq
        %v1195 = vshrl.u32 %v1194, 7
        %v1196 = vsub.s32 %v1193, %v1195
        %v1197 = vrot.slane %v1183, %v1196
        %v1198 = vcombine.low %v1165, %v1177
        %v1199 = vcombine.high %v1165, %v1177
        %v1201 = vunpack.c.l.s4 1983009808
        %v1202 = vunpack.c.0.s8 %v1201
        %v1203 = vlaneseq
        %v1204 = vshrl.u32 %v1203, 7
        %v1205 = vsub.s32 %v1202, %v1204
        %v1206 = vrot.slane %v1198, %v1205
        %v1208 = vunpack.c.l.s4 1983009808
        %v1209 = vunpack.c.0.s8 %v1208
        %v1210 = vlaneseq
        %v1211 = vshrl.u32 %v1210, 7
        %v1212 = vsub.s32 %v1209, %v1211
        %v1213 = vrot.slane %v1199, %v1212
        %v1214 = vcombine.low %v1190, %v1206
        %v1215 = vcombine.high %v1190, %v1206
        %v1217 = vunpack.c.l.s4 1934713408
        %v1218 = vunpack.c.0.s8 %v1217
        %v1219 = vlaneseq
        %v1220 = vshrl.u32 %v1219, 7
        %v1221 = vsub.s32 %v1218, %v1220
        %v1222 = vrot.slane %v1214, %v1221
        %v1224 = vunpack.c.l.s4 1934713408
        %v1225 = vunpack.c.0.s8 %v1224
        %v1226 = vlaneseq
        %v1227 = vshrl.u32 %v1226, 7
        %v1228 = vsub.s32 %v1225, %v1227
        %v1229 = vrot.slane %v1215, %v1228
        %v1230 = vcombine.low %v1197, %v1213
        %v1231 = vcombine.high %v1197, %v1213
        %v1233 = vunpack.c.l.s4 1934713408
        %v1234 = vunpack.c.0.s8 %v1233
        %v1235 = vlaneseq
        %v1236 = vshrl.u32 %v1235, 7
        %v1237 = vsub.s32 %v1234, %v1236
        %v1238 = vrot.slane %v1230, %v1237
        %v1240 = vunpack.c.l.s4 1934713408
        %v1241 = vunpack.c.0.s8 %v1240
        %v1242 = vlaneseq
        %v1243 = vshrl.u32 %v1242, 7
        %v1244 = vsub.s32 %v1241, %v1243
        %v1245 = vrot.slane %v1231, %v1244
        %v1246 = vcombine.high %v1222, 0.0
        %v1247 = vcombine.high %v1229, 0.0
        %v1248 = vcombine.high %v1238, 0.0
        %v1249 = vcombine.high %v1245, 0.0
        %v1250 = vcombine.low %v819, %v1173
        %v1251 = vcombine.high %v819, %v1173
        %v1253 = vunpack.c.l.s4 1983009808
        %v1254 = vunpack.c.0.s8 %v1253
        %v1255 = vlaneseq
        %v1256 = vshrl.u32 %v1255, 7
        %v1257 = vsub.s32 %v1254, %v1256
        %v1258 = vrot.slane %v1250, %v1257
        %v1260 = vunpack.c.l.s4 1983009808
        %v1261 = vunpack.c.0.s8 %v1260
        %v1262 = vlaneseq
        %v1263 = vshrl.u32 %v1262, 7
        %v1264 = vsub.s32 %v1261, %v1263
        %v1265 = vrot.slane %v1251, %v1264
        %v1266 = vcombine.low %v1167, %v1179
        %v1267 = vcombine.high %v1167, %v1179
        %v1269 = vunpack.c.l.s4 1983009808
        %v1270 = vunpack.c.0.s8 %v1269
        %v1271 = vlaneseq
        %v1272 = vshrl.u32 %v1271, 7
        %v1273 = vsub.s32 %v1270, %v1272
        %v1274 = vrot.slane %v1266, %v1273
        %v1276 = vunpack.c.l.s4 1983009808
        %v1277 = vunpack.c.0.s8 %v1276
        %v1278 = vlaneseq
        %v1279 = vshrl.u32 %v1278, 7
        %v1280 = vsub.s32 %v1277, %v1279
        %v1281 = vrot.slane %v1267, %v1280
        %v1282 = vcombine.low %v1258, %v1274
        %v1283 = vcombine.high %v1258, %v1274
        %v1285 = vunpack.c.l.s4 1934713408
        %v1286 = vunpack.c.0.s8 %v1285
        %v1287 = vlaneseq
        %v1288 = vshrl.u32 %v1287, 7
        %v1289 = vsub.s32 %v1286, %v1288
        %v1290 = vrot.slane %v1282, %v1289
        %v1292 = vunpack.c.l.s4 1934713408
        %v1293 = vunpack.c.0.s8 %v1292
        %v1294 = vlaneseq
        %v1295 = vshrl.u32 %v1294, 7
        %v1296 = vsub.s32 %v1293, %v1295
        %v1297 = vrot.slane %v1283, %v1296
        %v1298 = vcombine.low %v1265, %v1281
        %v1299 = vcombine.high %v1265, %v1281
        %v1301 = vunpack.c.l.s4 1934713408
        %v1302 = vunpack.c.0.s8 %v1301
        %v1303 = vlaneseq
        %v1304 = vshrl.u32 %v1303, 7
        %v1305 = vsub.s32 %v1302, %v1304
        %v1306 = vrot.slane %v1298, %v1305
        %v1308 = vunpack.c.l.s4 1934713408
        %v1309 = vunpack.c.0.s8 %v1308
        %v1310 = vlaneseq
        %v1311 = vshrl.u32 %v1310, 7
        %v1312 = vsub.s32 %v1309, %v1311
        %v1313 = vrot.slane %v1299, %v1312
        %v1314 = vcombine.high %v1290, 0.0
        %v1315 = vcombine.high %v1297, 0.0
        %v1316 = vcombine.high %v1306, 0.0
        %v1317 = vcombine.high %v1313, 0.0
        %v1318 = vcombine.low %v1222, %v1229
        %v1320 = vunpack.c.l.s4 1983009808
        %v1321 = vunpack.c.0.s8 %v1320
        %v1322 = vlaneseq
        %v1323 = vshrl.u32 %v1322, 7
        %v1324 = vsub.s32 %v1321, %v1323
        %v1325 = vrot.slane %v1318, %v1324
        %v1326 = vcombine.low %v1246, %v1247
        %v1328 = vunpack.c.l.s4 1983009808
        %v1329 = vunpack.c.0.s8 %v1328
        %v1330 = vlaneseq
        %v1331 = vshrl.u32 %v1330, 7
        %v1332 = vsub.s32 %v1329, %v1331
        %v1333 = vrot.slane %v1326, %v1332
        %v1334 = vcombine.low %v1238, %v1245
        %v1336 = vunpack.c.l.s4 1983009808
        %v1337 = vunpack.c.0.s8 %v1336
        %v1338 = vlaneseq
        %v1339 = vshrl.u32 %v1338, 7
        %v1340 = vsub.s32 %v1337, %v1339
        %v1341 = vrot.slane %v1334, %v1340
        %v1342 = vcombine.low %v1248, %v1249
        %v1344 = vunpack.c.l.s4 1983009808
        %v1345 = vunpack.c.0.s8 %v1344
        %v1346 = vlaneseq
        %v1347 = vshrl.u32 %v1346, 7
        %v1348 = vsub.s32 %v1345, %v1347
        %v1349 = vrot.slane %v1342, %v1348
        %v1350 = vcombine.low %v1325, %v1333
        %v1351 = vcombine.high %v1325, %v1333
        %v1353 = vunpack.c.l.s4 1934713408
        %v1354 = vunpack.c.0.s8 %v1353
        %v1355 = vlaneseq
        %v1356 = vshrl.u32 %v1355, 7
        %v1357 = vsub.s32 %v1354, %v1356
        %v1358 = vrot.slane %v1350, %v1357
        %v1360 = vunpack.c.l.s4 1934713408
        %v1361 = vunpack.c.0.s8 %v1360
        %v1362 = vlaneseq
        %v1363 = vshrl.u32 %v1362, 7
        %v1364 = vsub.s32 %v1361, %v1363
        %v1365 = vrot.slane %v1351, %v1364
        %v1366 = vcombine.low %v1341, %v1349
        %v1367 = vcombine.high %v1341, %v1349
        %v1369 = vunpack.c.l.s4 1934713408
        %v1370 = vunpack.c.0.s8 %v1369
        %v1371 = vlaneseq
        %v1372 = vshrl.u32 %v1371, 7
        %v1373 = vsub.s32 %v1370, %v1372
        %v1374 = vrot.slane %v1366, %v1373
        %v1376 = vunpack.c.l.s4 1934713408
        %v1377 = vunpack.c.0.s8 %v1376
        %v1378 = vlaneseq
        %v1379 = vshrl.u32 %v1378, 7
        %v1380 = vsub.s32 %v1377, %v1379
        %v1381 = vrot.slane %v1367, %v1380
        %v1382 = vcombine.low %v1358, %v1374
        %v1383 = vcombine.high %v1358, %v1374
        %v1384 = vcombine.low %v1365, %v1381
        %v1385 = vcombine.high %v1365, %v1381
        %v1386 = vcombine.low %v1290, %v1297
        %v1388 = vunpack.c.l.s4 1983009808
        %v1389 = vunpack.c.0.s8 %v1388
        %v1390 = vlaneseq
        %v1391 = vshrl.u32 %v1390, 7
        %v1392 = vsub.s32 %v1389, %v1391
        %v1393 = vrot.slane %v1386, %v1392
        %v1394 = vcombine.low %v1314, %v1315
        %v1396 = vunpack.c.l.s4 1983009808
        %v1397 = vunpack.c.0.s8 %v1396
        %v1398 = vlaneseq
        %v1399 = vshrl.u32 %v1398, 7
        %v1400 = vsub.s32 %v1397, %v1399
        %v1401 = vrot.slane %v1394, %v1400
        %v1402 = vcombine.low %v1306, %v1313
        %v1404 = vunpack.c.l.s4 1983009808
        %v1405 = vunpack.c.0.s8 %v1404
        %v1406 = vlaneseq
        %v1407 = vshrl.u32 %v1406, 7
        %v1408 = vsub.s32 %v1405, %v1407
        %v1409 = vrot.slane %v1402, %v1408
        %v1410 = vcombine.low %v1316, %v1317
        %v1412 = vunpack.c.l.s4 1983009808
        %v1413 = vunpack.c.0.s8 %v1412
        %v1414 = vlaneseq
        %v1415 = vshrl.u32 %v1414, 7
        %v1416 = vsub.s32 %v1413, %v1415
        %v1417 = vrot.slane %v1410, %v1416
        %v1418 = vcombine.low %v1393, %v1401
        %v1419 = vcombine.high %v1393, %v1401
        %v1421 = vunpack.c.l.s4 1934713408
        %v1422 = vunpack.c.0.s8 %v1421
        %v1423 = vlaneseq
        %v1424 = vshrl.u32 %v1423, 7
        %v1425 = vsub.s32 %v1422, %v1424
        %v1426 = vrot.slane %v1418, %v1425
        %v1428 = vunpack.c.l.s4 1934713408
        %v1429 = vunpack.c.0.s8 %v1428
        %v1430 = vlaneseq
        %v1431 = vshrl.u32 %v1430, 7
        %v1432 = vsub.s32 %v1429, %v1431
        %v1433 = vrot.slane %v1419, %v1432
        %v1434 = vcombine.low %v1409, %v1417
        %v1435 = vcombine.high %v1409, %v1417
        %v1437 = vunpack.c.l.s4 1934713408
        %v1438 = vunpack.c.0.s8 %v1437
        %v1439 = vlaneseq
        %v1440 = vshrl.u32 %v1439, 7
        %v1441 = vsub.s32 %v1438, %v1440
        %v1442 = vrot.slane %v1434, %v1441
        %v1444 = vunpack.c.l.s4 1934713408
        %v1445 = vunpack.c.0.s8 %v1444
        %v1446 = vlaneseq
        %v1447 = vshrl.u32 %v1446, 7
        %v1448 = vsub.s32 %v1445, %v1447
        %v1449 = vrot.slane %v1435, %v1448
        %v1450 = vcombine.low %v1426, %v1442
        %v1451 = vcombine.high %v1426, %v1442
        %v1452 = vcombine.low %v1433, %v1449
        %v1453 = vcombine.high %v1433, %v1449
        %v1454 = vpack.c.bf16 %v1382, %v1382
        %v1455 = vpack.c.bf16 %v1383, %v1383
        %v1456 = vpack.c.bf16 %v1384, %v1384
        %v1457 = vpack.c.bf16 %v1385, %v1385
        %v1458 = vpack.c.bf16 %v1450, %v1450
        %v1459 = vpack.c.bf16 %v1451, %v1451
        %v1460 = vpack.c.bf16 %v1452, %v1452
        %v1461 = vpack.c.bf16 %v1453, %v1453
        %1464 = vrot.lane.b32.xlu0 %v856, 96
        %v1465 = vpop.permute.xlu0 %1464
        %1466 = vrot.lane.b32.xlu0 %v859, 96
        %v1467 = vpop.permute.xlu0 %1466
        %1470 = vrot.lane.b32.xlu0 %v856, 64
        %v1471 = vpop.permute.xlu0 %1470
        %1472 = vrot.lane.b32.xlu0 %v859, 64
        %v1473 = vpop.permute.xlu0 %1472
        %1476 = vrot.lane.b32.xlu0 %v856, 32
        %v1477 = vpop.permute.xlu0 %1476
        %1478 = vrot.lane.b32.xlu0 %v859, 32
        %v1479 = vpop.permute.xlu0 %1478
        %v1482 = vcombine.low %v856, %v1471
        %v1483 = vcombine.high %v856, %v1471
        %v1485 = vunpack.c.l.s4 1983009808
        %v1486 = vunpack.c.0.s8 %v1485
        %v1487 = vlaneseq
        %v1488 = vshrl.u32 %v1487, 7
        %v1489 = vsub.s32 %v1486, %v1488
        %v1490 = vrot.slane %v1482, %v1489
        %v1492 = vunpack.c.l.s4 1983009808
        %v1493 = vunpack.c.0.s8 %v1492
        %v1494 = vlaneseq
        %v1495 = vshrl.u32 %v1494, 7
        %v1496 = vsub.s32 %v1493, %v1495
        %v1497 = vrot.slane %v1483, %v1496
        %v1498 = vcombine.low %v1465, %v1477
        %v1499 = vcombine.high %v1465, %v1477
        %v1501 = vunpack.c.l.s4 1983009808
        %v1502 = vunpack.c.0.s8 %v1501
        %v1503 = vlaneseq
        %v1504 = vshrl.u32 %v1503, 7
        %v1505 = vsub.s32 %v1502, %v1504
        %v1506 = vrot.slane %v1498, %v1505
        %v1508 = vunpack.c.l.s4 1983009808
        %v1509 = vunpack.c.0.s8 %v1508
        %v1510 = vlaneseq
        %v1511 = vshrl.u32 %v1510, 7
        %v1512 = vsub.s32 %v1509, %v1511
        %v1513 = vrot.slane %v1499, %v1512
        %v1514 = vcombine.low %v1490, %v1506
        %v1515 = vcombine.high %v1490, %v1506
        %v1517 = vunpack.c.l.s4 1934713408
        %v1518 = vunpack.c.0.s8 %v1517
        %v1519 = vlaneseq
        %v1520 = vshrl.u32 %v1519, 7
        %v1521 = vsub.s32 %v1518, %v1520
        %v1522 = vrot.slane %v1514, %v1521
        %v1524 = vunpack.c.l.s4 1934713408
        %v1525 = vunpack.c.0.s8 %v1524
        %v1526 = vlaneseq
        %v1527 = vshrl.u32 %v1526, 7
        %v1528 = vsub.s32 %v1525, %v1527
        %v1529 = vrot.slane %v1515, %v1528
        %v1530 = vcombine.low %v1497, %v1513
        %v1531 = vcombine.high %v1497, %v1513
        %v1533 = vunpack.c.l.s4 1934713408
        %v1534 = vunpack.c.0.s8 %v1533
        %v1535 = vlaneseq
        %v1536 = vshrl.u32 %v1535, 7
        %v1537 = vsub.s32 %v1534, %v1536
        %v1538 = vrot.slane %v1530, %v1537
        %v1540 = vunpack.c.l.s4 1934713408
        %v1541 = vunpack.c.0.s8 %v1540
        %v1542 = vlaneseq
        %v1543 = vshrl.u32 %v1542, 7
        %v1544 = vsub.s32 %v1541, %v1543
        %v1545 = vrot.slane %v1531, %v1544
        %v1546 = vcombine.high %v1522, 0.0
        %v1547 = vcombine.high %v1529, 0.0
        %v1548 = vcombine.high %v1538, 0.0
        %v1549 = vcombine.high %v1545, 0.0
        %v1550 = vcombine.low %v859, %v1473
        %v1551 = vcombine.high %v859, %v1473
        %v1553 = vunpack.c.l.s4 1983009808
        %v1554 = vunpack.c.0.s8 %v1553
        %v1555 = vlaneseq
        %v1556 = vshrl.u32 %v1555, 7
        %v1557 = vsub.s32 %v1554, %v1556
        %v1558 = vrot.slane %v1550, %v1557
        %v1560 = vunpack.c.l.s4 1983009808
        %v1561 = vunpack.c.0.s8 %v1560
        %v1562 = vlaneseq
        %v1563 = vshrl.u32 %v1562, 7
        %v1564 = vsub.s32 %v1561, %v1563
        %v1565 = vrot.slane %v1551, %v1564
        %v1566 = vcombine.low %v1467, %v1479
        %v1567 = vcombine.high %v1467, %v1479
        %v1569 = vunpack.c.l.s4 1983009808
        %v1570 = vunpack.c.0.s8 %v1569
        %v1571 = vlaneseq
        %v1572 = vshrl.u32 %v1571, 7
        %v1573 = vsub.s32 %v1570, %v1572
        %v1574 = vrot.slane %v1566, %v1573
        %v1576 = vunpack.c.l.s4 1983009808
        %v1577 = vunpack.c.0.s8 %v1576
        %v1578 = vlaneseq
        %v1579 = vshrl.u32 %v1578, 7
        %v1580 = vsub.s32 %v1577, %v1579
        %v1581 = vrot.slane %v1567, %v1580
        %v1582 = vcombine.low %v1558, %v1574
        %v1583 = vcombine.high %v1558, %v1574
        %v1585 = vunpack.c.l.s4 1934713408
        %v1586 = vunpack.c.0.s8 %v1585
        %v1587 = vlaneseq
        %v1588 = vshrl.u32 %v1587, 7
        %v1589 = vsub.s32 %v1586, %v1588
        %v1590 = vrot.slane %v1582, %v1589
        %v1592 = vunpack.c.l.s4 1934713408
        %v1593 = vunpack.c.0.s8 %v1592
        %v1594 = vlaneseq
        %v1595 = vshrl.u32 %v1594, 7
        %v1596 = vsub.s32 %v1593, %v1595
        %v1597 = vrot.slane %v1583, %v1596
        %v1598 = vcombine.low %v1565, %v1581
        %v1599 = vcombine.high %v1565, %v1581
        %v1601 = vunpack.c.l.s4 1934713408
        %v1602 = vunpack.c.0.s8 %v1601
        %v1603 = vlaneseq
        %v1604 = vshrl.u32 %v1603, 7
        %v1605 = vsub.s32 %v1602, %v1604
        %v1606 = vrot.slane %v1598, %v1605
        %v1608 = vunpack.c.l.s4 1934713408
        %v1609 = vunpack.c.0.s8 %v1608
        %v1610 = vlaneseq
        %v1611 = vshrl.u32 %v1610, 7
        %v1612 = vsub.s32 %v1609, %v1611
        %v1613 = vrot.slane %v1599, %v1612
        %v1614 = vcombine.high %v1590, 0.0
        %v1615 = vcombine.high %v1597, 0.0
        %v1616 = vcombine.high %v1606, 0.0
        %v1617 = vcombine.high %v1613, 0.0
        %v1618 = vcombine.low %v1522, %v1529
        %v1620 = vunpack.c.l.s4 1983009808
        %v1621 = vunpack.c.0.s8 %v1620
        %v1622 = vlaneseq
        %v1623 = vshrl.u32 %v1622, 7
        %v1624 = vsub.s32 %v1621, %v1623
        %v1625 = vrot.slane %v1618, %v1624
        %v1626 = vcombine.low %v1546, %v1547
        %v1628 = vunpack.c.l.s4 1983009808
        %v1629 = vunpack.c.0.s8 %v1628
        %v1630 = vlaneseq
        %v1631 = vshrl.u32 %v1630, 7
        %v1632 = vsub.s32 %v1629, %v1631
        %v1633 = vrot.slane %v1626, %v1632
        %v1634 = vcombine.low %v1538, %v1545
        %v1636 = vunpack.c.l.s4 1983009808
        %v1637 = vunpack.c.0.s8 %v1636
        %v1638 = vlaneseq
        %v1639 = vshrl.u32 %v1638, 7
        %v1640 = vsub.s32 %v1637, %v1639
        %v1641 = vrot.slane %v1634, %v1640
        %v1642 = vcombine.low %v1548, %v1549
        %v1644 = vunpack.c.l.s4 1983009808
        %v1645 = vunpack.c.0.s8 %v1644
        %v1646 = vlaneseq
        %v1647 = vshrl.u32 %v1646, 7
        %v1648 = vsub.s32 %v1645, %v1647
        %v1649 = vrot.slane %v1642, %v1648
        %v1650 = vcombine.low %v1625, %v1633
        %v1651 = vcombine.high %v1625, %v1633
        %v1653 = vunpack.c.l.s4 1934713408
        %v1654 = vunpack.c.0.s8 %v1653
        %v1655 = vlaneseq
        %v1656 = vshrl.u32 %v1655, 7
        %v1657 = vsub.s32 %v1654, %v1656
        %v1658 = vrot.slane %v1650, %v1657
        %v1660 = vunpack.c.l.s4 1934713408
        %v1661 = vunpack.c.0.s8 %v1660
        %v1662 = vlaneseq
        %v1663 = vshrl.u32 %v1662, 7
        %v1664 = vsub.s32 %v1661, %v1663
        %v1665 = vrot.slane %v1651, %v1664
        %v1666 = vcombine.low %v1641, %v1649
        %v1667 = vcombine.high %v1641, %v1649
        %v1669 = vunpack.c.l.s4 1934713408
        %v1670 = vunpack.c.0.s8 %v1669
        %v1671 = vlaneseq
        %v1672 = vshrl.u32 %v1671, 7
        %v1673 = vsub.s32 %v1670, %v1672
        %v1674 = vrot.slane %v1666, %v1673
        %v1676 = vunpack.c.l.s4 1934713408
        %v1677 = vunpack.c.0.s8 %v1676
        %v1678 = vlaneseq
        %v1679 = vshrl.u32 %v1678, 7
        %v1680 = vsub.s32 %v1677, %v1679
        %v1681 = vrot.slane %v1667, %v1680
        %v1682 = vcombine.low %v1658, %v1674
        %v1683 = vcombine.high %v1658, %v1674
        %v1684 = vcombine.low %v1665, %v1681
        %v1685 = vcombine.high %v1665, %v1681
        %v1686 = vcombine.low %v1590, %v1597
        %v1688 = vunpack.c.l.s4 1983009808
        %v1689 = vunpack.c.0.s8 %v1688
        %v1690 = vlaneseq
        %v1691 = vshrl.u32 %v1690, 7
        %v1692 = vsub.s32 %v1689, %v1691
        %v1693 = vrot.slane %v1686, %v1692
        %v1694 = vcombine.low %v1614, %v1615
        %v1696 = vunpack.c.l.s4 1983009808
        %v1697 = vunpack.c.0.s8 %v1696
        %v1698 = vlaneseq
        %v1699 = vshrl.u32 %v1698, 7
        %v1700 = vsub.s32 %v1697, %v1699
        %v1701 = vrot.slane %v1694, %v1700
        %v1702 = vcombine.low %v1606, %v1613
        %v1704 = vunpack.c.l.s4 1983009808
        %v1705 = vunpack.c.0.s8 %v1704
        %v1706 = vlaneseq
        %v1707 = vshrl.u32 %v1706, 7
        %v1708 = vsub.s32 %v1705, %v1707
        %v1709 = vrot.slane %v1702, %v1708
        %v1710 = vcombine.low %v1616, %v1617
        %v1712 = vunpack.c.l.s4 1983009808
        %v1713 = vunpack.c.0.s8 %v1712
        %v1714 = vlaneseq
        %v1715 = vshrl.u32 %v1714, 7
        %v1716 = vsub.s32 %v1713, %v1715
        %v1717 = vrot.slane %v1710, %v1716
        %v1718 = vcombine.low %v1693, %v1701
        %v1719 = vcombine.high %v1693, %v1701
        %v1721 = vunpack.c.l.s4 1934713408
        %v1722 = vunpack.c.0.s8 %v1721
        %v1723 = vlaneseq
        %v1724 = vshrl.u32 %v1723, 7
        %v1725 = vsub.s32 %v1722, %v1724
        %v1726 = vrot.slane %v1718, %v1725
        %v1728 = vunpack.c.l.s4 1934713408
        %v1729 = vunpack.c.0.s8 %v1728
        %v1730 = vlaneseq
        %v1731 = vshrl.u32 %v1730, 7
        %v1732 = vsub.s32 %v1729, %v1731
        %v1733 = vrot.slane %v1719, %v1732
        %v1734 = vcombine.low %v1709, %v1717
        %v1735 = vcombine.high %v1709, %v1717
        %v1737 = vunpack.c.l.s4 1934713408
        %v1738 = vunpack.c.0.s8 %v1737
        %v1739 = vlaneseq
        %v1740 = vshrl.u32 %v1739, 7
        %v1741 = vsub.s32 %v1738, %v1740
        %v1742 = vrot.slane %v1734, %v1741
        %v1744 = vunpack.c.l.s4 1934713408
        %v1745 = vunpack.c.0.s8 %v1744
        %v1746 = vlaneseq
        %v1747 = vshrl.u32 %v1746, 7
        %v1748 = vsub.s32 %v1745, %v1747
        %v1749 = vrot.slane %v1735, %v1748
        %v1750 = vcombine.low %v1726, %v1742
        %v1751 = vcombine.high %v1726, %v1742
        %v1752 = vcombine.low %v1733, %v1749
        %v1753 = vcombine.high %v1733, %v1749
        %v1754 = vpack.c.bf16 %v1682, %v1682
        %v1755 = vpack.c.bf16 %v1683, %v1683
        %v1756 = vpack.c.bf16 %v1684, %v1684
        %v1757 = vpack.c.bf16 %v1685, %v1685
        %v1758 = vpack.c.bf16 %v1750, %v1750
        %v1759 = vpack.c.bf16 %v1751, %v1751
        %v1760 = vpack.c.bf16 %v1752, %v1752
        %v1761 = vpack.c.bf16 %v1753, %v1753
        %vm1762 = vcmask 261120
        %v1764 = vsel %vm1762, %v1154, 0
        %v1767 = vsel %vm1762, %v1454, 0
        %1769 = vmatprep.subr.bf16.mxu0 0
        %1770 = vmatpush1.bf16.xpose.msra.mxu0 %v1767
        %1771 = vmatprep.subr.bf16.mxu0 0
        %1772 = vmatpush1.bf16.xpose.msra.mxu0 0
        %1773 = vmatprep.subr.bf16.mxu0 0
        %1774 = vmatpush1.bf16.xpose.msra.mxu0 0
        %1775 = vmatprep.subr.bf16.mxu0 0
        %1776 = vmatpush1.bf16.xpose.msra.mxu0 0
        %1777 = vmatprep.subr.bf16.mxu0 0
        %1778 = vmatpush1.bf16.xpose.msra.mxu0 0
        %1779 = vmatprep.subr.bf16.mxu0 0
        %1780 = vmatpush1.bf16.xpose.msra.mxu0 0
        %1781 = vmatprep.subr.bf16.mxu0 0
        %1782 = vmatpush1.bf16.xpose.msra.mxu0 0
        %1783 = vmatprep.subr.bf16.mxu0 0
        %1784 = vmatpush1.bf16.xpose.msra.mxu0 0
        %1785 = vmatprep.subr.bf16.mxu0 0
        %1786 = vmatpush1.bf16.xpose.msra.mxu0 0
        %1787 = vmatprep.subr.bf16.mxu0 0
        %1788 = vmatpush1.bf16.xpose.msra.mxu0 0
        %1789 = vmatprep.subr.bf16.mxu0 0
        %1790 = vmatpush1.bf16.xpose.msra.mxu0 0
        %1791 = vmatprep.subr.bf16.mxu0 0
        %1792 = vmatpush1.bf16.xpose.msra.mxu0 0
        %1793 = vmatprep.subr.bf16.mxu0 0
        %1794 = vmatpush1.bf16.xpose.msra.mxu0 0
        %1795 = vmatprep.subr.bf16.mxu0 0
        %1796 = vmatpush1.bf16.xpose.msra.mxu0 0
        %1797 = vmatprep.subr.bf16.mxu0 0
        %1798 = vmatpush1.bf16.xpose.msra.mxu0 0
        %1799 = vmatprep.subr.bf16.mxu0 0
        %1800 = vmatpush1.bf16.xpose.msra.mxu0 0
        %1801 = vmatprep.mubr.bf16.mxu0 0
        %1802 = vmatmul.mubr.bf16.gmra.mrb[0].mxu0 %v1764
        %v1803 = vpop.f32.mrb[0].mxu0
        %v1804 = vadd.f32 0.0, %v1803
        %v1805 = vpop.f32.mrb[0].mxu0
        %v1806 = vpop.f32.mrb[0].mxu0
        %v1807 = vpop.f32.mrb[0].mxu0
        %1808 = vdwg.mxu0
        %v1810 = vsel %vm1762, %v1155, 0
        %v1813 = vsel %vm1762, %v1455, 0
        %1815 = vmatprep.subr.bf16.mxu0 0
        %1816 = vmatpush1.bf16.xpose.msra.mxu0 %v1813
        %1817 = vmatprep.subr.bf16.mxu0 0
        %1818 = vmatpush1.bf16.xpose.msra.mxu0 0
        %1819 = vmatprep.subr.bf16.mxu0 0
        %1820 = vmatpush1.bf16.xpose.msra.mxu0 0
        %1821 = vmatprep.subr.bf16.mxu0 0
        %1822 = vmatpush1.bf16.xpose.msra.mxu0 0
        %1823 = vmatprep.subr.bf16.mxu0 0
        %1824 = vmatpush1.bf16.xpose.msra.mxu0 0
        %1825 = vmatprep.subr.bf16.mxu0 0
        %1826 = vmatpush1.bf16.xpose.msra.mxu0 0
        %1827 = vmatprep.subr.bf16.mxu0 0
        %1828 = vmatpush1.bf16.xpose.msra.mxu0 0
        %1829 = vmatprep.subr.bf16.mxu0 0
        %1830 = vmatpush1.bf16.xpose.msra.mxu0 0
        %1831 = vmatprep.subr.bf16.mxu0 0
        %1832 = vmatpush1.bf16.xpose.msra.mxu0 0
        %1833 = vmatprep.subr.bf16.mxu0 0
        %1834 = vmatpush1.bf16.xpose.msra.mxu0 0
        %1835 = vmatprep.subr.bf16.mxu0 0
        %1836 = vmatpush1.bf16.xpose.msra.mxu0 0
        %1837 = vmatprep.subr.bf16.mxu0 0
        %1838 = vmatpush1.bf16.xpose.msra.mxu0 0
        %1839 = vmatprep.subr.bf16.mxu0 0
        %1840 = vmatpush1.bf16.xpose.msra.mxu0 0
        %1841 = vmatprep.subr.bf16.mxu0 0
        %1842 = vmatpush1.bf16.xpose.msra.mxu0 0
        %1843 = vmatprep.subr.bf16.mxu0 0
        %1844 = vmatpush1.bf16.xpose.msra.mxu0 0
        %1845 = vmatprep.subr.bf16.mxu0 0
        %1846 = vmatpush1.bf16.xpose.msra.mxu0 0
        %1847 = vmatprep.mubr.bf16.mxu0 0
        %1848 = vmatmul.mubr.bf16.gmra.mrb[0].mxu0 %v1810
        %v1849 = vpop.f32.mrb[0].mxu0
        %v1850 = vadd.f32 0.0, %v1849
        %v1851 = vpop.f32.mrb[0].mxu0
        %v1852 = vpop.f32.mrb[0].mxu0
        %v1853 = vpop.f32.mrb[0].mxu0
        %1854 = vdwg.mxu0
        %v1856 = vsel %vm1762, %v1156, 0
        %v1859 = vsel %vm1762, %v1456, 0
        %1861 = vmatprep.subr.bf16.mxu0 0
        %1862 = vmatpush1.bf16.xpose.msra.mxu0 %v1859
        %1863 = vmatprep.subr.bf16.mxu0 0
        %1864 = vmatpush1.bf16.xpose.msra.mxu0 0
        %1865 = vmatprep.subr.bf16.mxu0 0
        %1866 = vmatpush1.bf16.xpose.msra.mxu0 0
        %1867 = vmatprep.subr.bf16.mxu0 0
        %1868 = vmatpush1.bf16.xpose.msra.mxu0 0
        %1869 = vmatprep.subr.bf16.mxu0 0
        %1870 = vmatpush1.bf16.xpose.msra.mxu0 0
        %1871 = vmatprep.subr.bf16.mxu0 0
        %1872 = vmatpush1.bf16.xpose.msra.mxu0 0
        %1873 = vmatprep.subr.bf16.mxu0 0
        %1874 = vmatpush1.bf16.xpose.msra.mxu0 0
        %1875 = vmatprep.subr.bf16.mxu0 0
        %1876 = vmatpush1.bf16.xpose.msra.mxu0 0
        %1877 = vmatprep.subr.bf16.mxu0 0
        %1878 = vmatpush1.bf16.xpose.msra.mxu0 0
        %1879 = vmatprep.subr.bf16.mxu0 0
        %1880 = vmatpush1.bf16.xpose.msra.mxu0 0
        %1881 = vmatprep.subr.bf16.mxu0 0
        %1882 = vmatpush1.bf16.xpose.msra.mxu0 0
        %1883 = vmatprep.subr.bf16.mxu0 0
        %1884 = vmatpush1.bf16.xpose.msra.mxu0 0
        %1885 = vmatprep.subr.bf16.mxu0 0
        %1886 = vmatpush1.bf16.xpose.msra.mxu0 0
        %1887 = vmatprep.subr.bf16.mxu0 0
        %1888 = vmatpush1.bf16.xpose.msra.mxu0 0
        %1889 = vmatprep.subr.bf16.mxu0 0
        %1890 = vmatpush1.bf16.xpose.msra.mxu0 0
        %1891 = vmatprep.subr.bf16.mxu0 0
        %1892 = vmatpush1.bf16.xpose.msra.mxu0 0
        %1893 = vmatprep.mubr.bf16.mxu0 0
        %1894 = vmatmul.mubr.bf16.gmra.mrb[0].mxu0 %v1856
        %v1895 = vpop.f32.mrb[0].mxu0
        %v1896 = vadd.f32 0.0, %v1895
        %v1897 = vpop.f32.mrb[0].mxu0
        %v1898 = vpop.f32.mrb[0].mxu0
        %v1899 = vpop.f32.mrb[0].mxu0
        %1900 = vdwg.mxu0
        %v1902 = vsel %vm1762, %v1157, 0
        %v1905 = vsel %vm1762, %v1457, 0
        %1907 = vmatprep.subr.bf16.mxu0 0
        %1908 = vmatpush1.bf16.xpose.msra.mxu0 %v1905
        %1909 = vmatprep.subr.bf16.mxu0 0
        %1910 = vmatpush1.bf16.xpose.msra.mxu0 0
        %1911 = vmatprep.subr.bf16.mxu0 0
        %1912 = vmatpush1.bf16.xpose.msra.mxu0 0
        %1913 = vmatprep.subr.bf16.mxu0 0
        %1914 = vmatpush1.bf16.xpose.msra.mxu0 0
        %1915 = vmatprep.subr.bf16.mxu0 0
        %1916 = vmatpush1.bf16.xpose.msra.mxu0 0
        %1917 = vmatprep.subr.bf16.mxu0 0
        %1918 = vmatpush1.bf16.xpose.msra.mxu0 0
        %1919 = vmatprep.subr.bf16.mxu0 0
        %1920 = vmatpush1.bf16.xpose.msra.mxu0 0
        %1921 = vmatprep.subr.bf16.mxu0 0
        %1922 = vmatpush1.bf16.xpose.msra.mxu0 0
        %1923 = vmatprep.subr.bf16.mxu0 0
        %1924 = vmatpush1.bf16.xpose.msra.mxu0 0
        %1925 = vmatprep.subr.bf16.mxu0 0
        %1926 = vmatpush1.bf16.xpose.msra.mxu0 0
        %1927 = vmatprep.subr.bf16.mxu0 0
        %1928 = vmatpush1.bf16.xpose.msra.mxu0 0
        %1929 = vmatprep.subr.bf16.mxu0 0
        %1930 = vmatpush1.bf16.xpose.msra.mxu0 0
        %1931 = vmatprep.subr.bf16.mxu0 0
        %1932 = vmatpush1.bf16.xpose.msra.mxu0 0
        %1933 = vmatprep.subr.bf16.mxu0 0
        %1934 = vmatpush1.bf16.xpose.msra.mxu0 0
        %1935 = vmatprep.subr.bf16.mxu0 0
        %1936 = vmatpush1.bf16.xpose.msra.mxu0 0
        %1937 = vmatprep.subr.bf16.mxu0 0
        %1938 = vmatpush1.bf16.xpose.msra.mxu0 0
        %1939 = vmatprep.mubr.bf16.mxu0 0
        %1940 = vmatmul.mubr.bf16.gmra.mrb[0].mxu0 %v1902
        %v1941 = vpop.f32.mrb[0].mxu0
        %v1942 = vadd.f32 0.0, %v1941
        %v1943 = vpop.f32.mrb[0].mxu0
        %v1944 = vpop.f32.mrb[0].mxu0
        %v1945 = vpop.f32.mrb[0].mxu0
        %1946 = vdwg.mxu0
        %v1948 = vsel %vm1762, %v1158, 0
        %v1951 = vsel %vm1762, %v1458, 0
        %1953 = vmatprep.subr.bf16.mxu0 0
        %1954 = vmatpush1.bf16.xpose.msra.mxu0 %v1951
        %1955 = vmatprep.subr.bf16.mxu0 0
        %1956 = vmatpush1.bf16.xpose.msra.mxu0 0
        %1957 = vmatprep.subr.bf16.mxu0 0
        %1958 = vmatpush1.bf16.xpose.msra.mxu0 0
        %1959 = vmatprep.subr.bf16.mxu0 0
        %1960 = vmatpush1.bf16.xpose.msra.mxu0 0
        %1961 = vmatprep.subr.bf16.mxu0 0
        %1962 = vmatpush1.bf16.xpose.msra.mxu0 0
        %1963 = vmatprep.subr.bf16.mxu0 0
        %1964 = vmatpush1.bf16.xpose.msra.mxu0 0
        %1965 = vmatprep.subr.bf16.mxu0 0
        %1966 = vmatpush1.bf16.xpose.msra.mxu0 0
        %1967 = vmatprep.subr.bf16.mxu0 0
        %1968 = vmatpush1.bf16.xpose.msra.mxu0 0
        %1969 = vmatprep.subr.bf16.mxu0 0
        %1970 = vmatpush1.bf16.xpose.msra.mxu0 0
        %1971 = vmatprep.subr.bf16.mxu0 0
        %1972 = vmatpush1.bf16.xpose.msra.mxu0 0
        %1973 = vmatprep.subr.bf16.mxu0 0
        %1974 = vmatpush1.bf16.xpose.msra.mxu0 0
        %1975 = vmatprep.subr.bf16.mxu0 0
        %1976 = vmatpush1.bf16.xpose.msra.mxu0 0
        %1977 = vmatprep.subr.bf16.mxu0 0
        %1978 = vmatpush1.bf16.xpose.msra.mxu0 0
        %1979 = vmatprep.subr.bf16.mxu0 0
        %1980 = vmatpush1.bf16.xpose.msra.mxu0 0
        %1981 = vmatprep.subr.bf16.mxu0 0
        %1982 = vmatpush1.bf16.xpose.msra.mxu0 0
        %1983 = vmatprep.subr.bf16.mxu0 0
        %1984 = vmatpush1.bf16.xpose.msra.mxu0 0
        %1985 = vmatprep.mubr.bf16.mxu0 0
        %1986 = vmatmul.mubr.bf16.gmra.mrb[0].mxu0 %v1948
        %v1987 = vpop.f32.mrb[0].mxu0
        %v1988 = vadd.f32 0.0, %v1987
        %v1989 = vpop.f32.mrb[0].mxu0
        %v1990 = vpop.f32.mrb[0].mxu0
        %v1991 = vpop.f32.mrb[0].mxu0
        %1992 = vdwg.mxu0
        %v1994 = vsel %vm1762, %v1159, 0
        %v1997 = vsel %vm1762, %v1459, 0
        %1999 = vmatprep.subr.bf16.mxu0 0
        %2000 = vmatpush1.bf16.xpose.msra.mxu0 %v1997
        %2001 = vmatprep.subr.bf16.mxu0 0
        %2002 = vmatpush1.bf16.xpose.msra.mxu0 0
        %2003 = vmatprep.subr.bf16.mxu0 0
        %2004 = vmatpush1.bf16.xpose.msra.mxu0 0
        %2005 = vmatprep.subr.bf16.mxu0 0
        %2006 = vmatpush1.bf16.xpose.msra.mxu0 0
        %2007 = vmatprep.subr.bf16.mxu0 0
        %2008 = vmatpush1.bf16.xpose.msra.mxu0 0
        %2009 = vmatprep.subr.bf16.mxu0 0
        %2010 = vmatpush1.bf16.xpose.msra.mxu0 0
        %2011 = vmatprep.subr.bf16.mxu0 0
        %2012 = vmatpush1.bf16.xpose.msra.mxu0 0
        %2013 = vmatprep.subr.bf16.mxu0 0
        %2014 = vmatpush1.bf16.xpose.msra.mxu0 0
        %2015 = vmatprep.subr.bf16.mxu0 0
        %2016 = vmatpush1.bf16.xpose.msra.mxu0 0
        %2017 = vmatprep.subr.bf16.mxu0 0
        %2018 = vmatpush1.bf16.xpose.msra.mxu0 0
        %2019 = vmatprep.subr.bf16.mxu0 0
        %2020 = vmatpush1.bf16.xpose.msra.mxu0 0
        %2021 = vmatprep.subr.bf16.mxu0 0
        %2022 = vmatpush1.bf16.xpose.msra.mxu0 0
        %2023 = vmatprep.subr.bf16.mxu0 0
        %2024 = vmatpush1.bf16.xpose.msra.mxu0 0
        %2025 = vmatprep.subr.bf16.mxu0 0
        %2026 = vmatpush1.bf16.xpose.msra.mxu0 0
        %2027 = vmatprep.subr.bf16.mxu0 0
        %2028 = vmatpush1.bf16.xpose.msra.mxu0 0
        %2029 = vmatprep.subr.bf16.mxu0 0
        %2030 = vmatpush1.bf16.xpose.msra.mxu0 0
        %2031 = vmatprep.mubr.bf16.mxu0 0
        %2032 = vmatmul.mubr.bf16.gmra.mrb[0].mxu0 %v1994
        %v2033 = vpop.f32.mrb[0].mxu0
        %v2034 = vadd.f32 0.0, %v2033
        %v2035 = vpop.f32.mrb[0].mxu0
        %v2036 = vpop.f32.mrb[0].mxu0
        %v2037 = vpop.f32.mrb[0].mxu0
        %2038 = vdwg.mxu0
        %v2040 = vsel %vm1762, %v1160, 0
        %v2043 = vsel %vm1762, %v1460, 0
        %2045 = vmatprep.subr.bf16.mxu0 0
        %2046 = vmatpush1.bf16.xpose.msra.mxu0 %v2043
        %2047 = vmatprep.subr.bf16.mxu0 0
        %2048 = vmatpush1.bf16.xpose.msra.mxu0 0
        %2049 = vmatprep.subr.bf16.mxu0 0
        %2050 = vmatpush1.bf16.xpose.msra.mxu0 0
        %2051 = vmatprep.subr.bf16.mxu0 0
        %2052 = vmatpush1.bf16.xpose.msra.mxu0 0
        %2053 = vmatprep.subr.bf16.mxu0 0
        %2054 = vmatpush1.bf16.xpose.msra.mxu0 0
        %2055 = vmatprep.subr.bf16.mxu0 0
        %2056 = vmatpush1.bf16.xpose.msra.mxu0 0
        %2057 = vmatprep.subr.bf16.mxu0 0
        %2058 = vmatpush1.bf16.xpose.msra.mxu0 0
        %2059 = vmatprep.subr.bf16.mxu0 0
        %2060 = vmatpush1.bf16.xpose.msra.mxu0 0
        %2061 = vmatprep.subr.bf16.mxu0 0
        %2062 = vmatpush1.bf16.xpose.msra.mxu0 0
        %2063 = vmatprep.subr.bf16.mxu0 0
        %2064 = vmatpush1.bf16.xpose.msra.mxu0 0
        %2065 = vmatprep.subr.bf16.mxu0 0
        %2066 = vmatpush1.bf16.xpose.msra.mxu0 0
        %2067 = vmatprep.subr.bf16.mxu0 0
        %2068 = vmatpush1.bf16.xpose.msra.mxu0 0
        %2069 = vmatprep.subr.bf16.mxu0 0
        %2070 = vmatpush1.bf16.xpose.msra.mxu0 0
        %2071 = vmatprep.subr.bf16.mxu0 0
        %2072 = vmatpush1.bf16.xpose.msra.mxu0 0
        %2073 = vmatprep.subr.bf16.mxu0 0
        %2074 = vmatpush1.bf16.xpose.msra.mxu0 0
        %2075 = vmatprep.subr.bf16.mxu0 0
        %2076 = vmatpush1.bf16.xpose.msra.mxu0 0
        %2077 = vmatprep.mubr.bf16.mxu0 0
        %2078 = vmatmul.mubr.bf16.gmra.mrb[0].mxu0 %v2040
        %v2079 = vpop.f32.mrb[0].mxu0
        %v2080 = vadd.f32 0.0, %v2079
        %v2081 = vpop.f32.mrb[0].mxu0
        %v2082 = vpop.f32.mrb[0].mxu0
        %v2083 = vpop.f32.mrb[0].mxu0
        %2084 = vdwg.mxu0
        %v2086 = vsel %vm1762, %v1161, 0
        %v2089 = vsel %vm1762, %v1461, 0
        %2091 = vmatprep.subr.bf16.mxu0 0
        %2092 = vmatpush1.bf16.xpose.msra.mxu0 %v2089
        %2093 = vmatprep.subr.bf16.mxu0 0
        %2094 = vmatpush1.bf16.xpose.msra.mxu0 0
        %2095 = vmatprep.subr.bf16.mxu0 0
        %2096 = vmatpush1.bf16.xpose.msra.mxu0 0
        %2097 = vmatprep.subr.bf16.mxu0 0
        %2098 = vmatpush1.bf16.xpose.msra.mxu0 0
        %2099 = vmatprep.subr.bf16.mxu0 0
        %2100 = vmatpush1.bf16.xpose.msra.mxu0 0
        %2101 = vmatprep.subr.bf16.mxu0 0
        %2102 = vmatpush1.bf16.xpose.msra.mxu0 0
        %2103 = vmatprep.subr.bf16.mxu0 0
        %2104 = vmatpush1.bf16.xpose.msra.mxu0 0
        %2105 = vmatprep.subr.bf16.mxu0 0
        %2106 = vmatpush1.bf16.xpose.msra.mxu0 0
        %2107 = vmatprep.subr.bf16.mxu0 0
        %2108 = vmatpush1.bf16.xpose.msra.mxu0 0
        %2109 = vmatprep.subr.bf16.mxu0 0
        %2110 = vmatpush1.bf16.xpose.msra.mxu0 0
        %2111 = vmatprep.subr.bf16.mxu0 0
        %2112 = vmatpush1.bf16.xpose.msra.mxu0 0
        %2113 = vmatprep.subr.bf16.mxu0 0
        %2114 = vmatpush1.bf16.xpose.msra.mxu0 0
        %2115 = vmatprep.subr.bf16.mxu0 0
        %2116 = vmatpush1.bf16.xpose.msra.mxu0 0
        %2117 = vmatprep.subr.bf16.mxu0 0
        %2118 = vmatpush1.bf16.xpose.msra.mxu0 0
        %2119 = vmatprep.subr.bf16.mxu0 0
        %2120 = vmatpush1.bf16.xpose.msra.mxu0 0
        %2121 = vmatprep.subr.bf16.mxu0 0
        %2122 = vmatpush1.bf16.xpose.msra.mxu0 0
        %2123 = vmatprep.mubr.bf16.mxu0 0
        %2124 = vmatmul.mubr.bf16.gmra.mrb[0].mxu0 %v2086
        %v2125 = vpop.f32.mrb[0].mxu0
        %v2126 = vadd.f32 0.0, %v2125
        %v2127 = vpop.f32.mrb[0].mxu0
        %v2128 = vpop.f32.mrb[0].mxu0
        %v2129 = vpop.f32.mrb[0].mxu0
        %2130 = vdwg.mxu0
        %v2131 = vmul.f32 %v1804, 0.17677669
        %v2132 = vmul.f32 %v1850, 0.17677669
        %v2133 = vmul.f32 %v1896, 0.17677669
        %v2134 = vmul.f32 %v1942, 0.17677669
        %v2135 = vmul.f32 %v1988, 0.17677669
        %v2136 = vmul.f32 %v2034, 0.17677669
        %v2137 = vmul.f32 %v2080, 0.17677669
        %v2138 = vmul.f32 %v2126, 0.17677669
        %v2139 = vld [vmem:[%s561] sm:$0x1]
        %v2140 = vld [vmem:[%s561 + $0x1] sm:$0x1]
        %v2143 = vlaneseq
        %v2144 = vshrl.u32 %v2143, 7
        %v2145 = vsub.s32 0, %v2144
        %v2146 = vrot.slane %v2139, %v2145
        %v2147 = vlaneseq
        %v2148 = vshrl.u32 %v2147, 7
        %v2149 = vsub.s32 0, %v2148
        %v2150 = vrot.slane %v2140, %v2149
        %v2153 = vadd.f32 %v2131, %v2146
        %v2154 = vadd.f32 %v2132, %v2146
        %v2155 = vadd.f32 %v2133, %v2146
        %v2156 = vadd.f32 %v2134, %v2146
        %v2157 = vadd.f32 %v2135, %v2150
        %v2158 = vadd.f32 %v2136, %v2150
        %v2159 = vadd.f32 %v2137, %v2150
        %v2160 = vadd.f32 %v2138, %v2150
        %vm2161 = vcmask 64512
        %v2162 = vsel %vm2161, %v2153, -inf
        %2163 = vmax.xlane.f32.xlu0 %v2162
        %v2164 = vpop.xlane.xlu0 %2163
        %v2165 = vsel %vm2161, %v2154, -inf
        %2166 = vmax.xlane.f32.xlu0 %v2165
        %v2167 = vpop.xlane.xlu0 %2166
        %v2168 = vsel %vm2161, %v2155, -inf
        %2169 = vmax.xlane.f32.xlu0 %v2168
        %v2170 = vpop.xlane.xlu0 %2169
        %v2171 = vsel %vm2161, %v2156, -inf
        %2172 = vmax.xlane.f32.xlu0 %v2171
        %v2173 = vpop.xlane.xlu0 %2172
        %v2174 = vsel %vm2161, %v2157, -inf
        %2175 = vmax.xlane.f32.xlu0 %v2174
        %v2176 = vpop.xlane.xlu0 %2175
        %v2177 = vsel %vm2161, %v2158, -inf
        %2178 = vmax.xlane.f32.xlu0 %v2177
        %v2179 = vpop.xlane.xlu0 %2178
        %v2180 = vsel %vm2161, %v2159, -inf
        %2181 = vmax.xlane.f32.xlu0 %v2180
        %v2182 = vpop.xlane.xlu0 %2181
        %v2183 = vsel %vm2161, %v2160, -inf
        %2184 = vmax.xlane.f32.xlu0 %v2183
        %v2185 = vpop.xlane.xlu0 %2184
        %v2186 = vsub.f32 %v2153, %v2164
        %v2187 = vsub.f32 %v2154, %v2167
        %v2188 = vsub.f32 %v2155, %v2170
        %v2189 = vsub.f32 %v2156, %v2173
        %v2190 = vsub.f32 %v2157, %v2176
        %v2191 = vsub.f32 %v2158, %v2179
        %v2192 = vsub.f32 %v2159, %v2182
        %v2193 = vsub.f32 %v2160, %v2185
        %v2194 = vmul.f32 %v2186, 1.442695
        %v2195 = vpow.pop %v2194
        %v2196 = vmul.f32 %v2187, 1.442695
        %v2197 = vpow.pop %v2196
        %v2198 = vmul.f32 %v2188, 1.442695
        %v2199 = vpow.pop %v2198
        %v2200 = vmul.f32 %v2189, 1.442695
        %v2201 = vpow.pop %v2200
        %v2202 = vmul.f32 %v2190, 1.442695
        %v2203 = vpow.pop %v2202
        %v2204 = vmul.f32 %v2191, 1.442695
        %v2205 = vpow.pop %v2204
        %v2206 = vmul.f32 %v2192, 1.442695
        %v2207 = vpow.pop %v2206
        %v2208 = vmul.f32 %v2193, 1.442695
        %v2209 = vpow.pop %v2208
        %v2210 = vsel %vm2161, %v2195, 0.0
        %2211 = vadd.xlane.f32.xlu0 %v2210
        %v2212 = vpop.xlane.xlu0 %2211
        %v2213 = vsel %vm2161, %v2197, 0.0
        %2214 = vadd.xlane.f32.xlu0 %v2213
        %v2215 = vpop.xlane.xlu0 %2214
        %v2216 = vsel %vm2161, %v2199, 0.0
        %2217 = vadd.xlane.f32.xlu0 %v2216
        %v2218 = vpop.xlane.xlu0 %2217
        %v2219 = vsel %vm2161, %v2201, 0.0
        %2220 = vadd.xlane.f32.xlu0 %v2219
        %v2221 = vpop.xlane.xlu0 %2220
        %v2222 = vsel %vm2161, %v2203, 0.0
        %2223 = vadd.xlane.f32.xlu0 %v2222
        %v2224 = vpop.xlane.xlu0 %2223
        %v2225 = vsel %vm2161, %v2205, 0.0
        %2226 = vadd.xlane.f32.xlu0 %v2225
        %v2227 = vpop.xlane.xlu0 %2226
        %v2228 = vsel %vm2161, %v2207, 0.0
        %2229 = vadd.xlane.f32.xlu0 %v2228
        %v2230 = vpop.xlane.xlu0 %2229
        %v2231 = vsel %vm2161, %v2209, 0.0
        %2232 = vadd.xlane.f32.xlu0 %v2231
        %v2233 = vpop.xlane.xlu0 %2232
        %v2234 = vrcp.pop %v2212
        %v2235 = vrcp.pop %v2215
        %v2236 = vrcp.pop %v2218
        %v2237 = vrcp.pop %v2221
        %v2238 = vrcp.pop %v2224
        %v2239 = vrcp.pop %v2227
        %v2240 = vrcp.pop %v2230
        %v2241 = vrcp.pop %v2233
        %v2242 = vmul.f32 %v2195, %v2234
        %v2243 = vmul.f32 %v2197, %v2235
        %v2244 = vmul.f32 %v2199, %v2236
        %v2245 = vmul.f32 %v2201, %v2237
        %v2246 = vmul.f32 %v2203, %v2238
        %v2247 = vmul.f32 %v2205, %v2239
        %v2248 = vmul.f32 %v2207, %v2240
        %v2249 = vmul.f32 %v2209, %v2241
        %v2250 = vpack.c.bf16 %v2242, %v2242
        %v2251 = vpack.c.bf16 %v2243, %v2243
        %v2252 = vpack.c.bf16 %v2244, %v2244
        %v2253 = vpack.c.bf16 %v2245, %v2245
        %v2254 = vpack.c.bf16 %v2246, %v2246
        %v2255 = vpack.c.bf16 %v2247, %v2247
        %v2256 = vpack.c.bf16 %v2248, %v2248
        %v2257 = vpack.c.bf16 %v2249, %v2249
        %v2259 = vsel %vm2161, %v2250, 0
        %vm2261 = vcmask 1043456
        %v2263 = vsel %vm2261, %v1754, 0
        %2265 = vmatprep.subr.bf16.mxu0 0
        %2266 = vmatpush1.bf16.msra.mxu0 %v2263
        %2267 = vmatprep.subr.bf16.mxu0 0
        %2268 = vmatpush1.bf16.msra.mxu0 0
        %2269 = vmatprep.subr.bf16.mxu0 0
        %2270 = vmatpush1.bf16.msra.mxu0 0
        %2271 = vmatprep.subr.bf16.mxu0 0
        %2272 = vmatpush1.bf16.msra.mxu0 0
        %2273 = vmatprep.subr.bf16.mxu0 0
        %2274 = vmatpush1.bf16.msra.mxu0 0
        %2275 = vmatprep.subr.bf16.mxu0 0
        %2276 = vmatpush1.bf16.msra.mxu0 0
        %2277 = vmatprep.subr.bf16.mxu0 0
        %2278 = vmatpush1.bf16.msra.mxu0 0
        %2279 = vmatprep.subr.bf16.mxu0 0
        %2280 = vmatpush1.bf16.msra.mxu0 0
        %2281 = vmatprep.subr.bf16.mxu0 0
        %2282 = vmatpush1.bf16.msra.mxu0 0
        %2283 = vmatprep.subr.bf16.mxu0 0
        %2284 = vmatpush1.bf16.msra.mxu0 0
        %2285 = vmatprep.subr.bf16.mxu0 0
        %2286 = vmatpush1.bf16.msra.mxu0 0
        %2287 = vmatprep.subr.bf16.mxu0 0
        %2288 = vmatpush1.bf16.msra.mxu0 0
        %2289 = vmatprep.subr.bf16.mxu0 0
        %2290 = vmatpush1.bf16.msra.mxu0 0
        %2291 = vmatprep.subr.bf16.mxu0 0
        %2292 = vmatpush1.bf16.msra.mxu0 0
        %2293 = vmatprep.subr.bf16.mxu0 0
        %2294 = vmatpush1.bf16.msra.mxu0 0
        %2295 = vmatprep.subr.bf16.mxu0 0
        %2296 = vmatpush1.bf16.msra.mxu0 0
        %2297 = vmatprep.mubr.bf16.mxu0 0
        %2298 = vmatmul.mubr.bf16.gmra.mrb[0].mxu0 %v2259
        %v2299 = vpop.f32.mrb[0].mxu0
        %v2300 = vadd.f32 0.0, %v2299
        %v2301 = vpop.f32.mrb[0].mxu0
        %v2302 = vpop.f32.mrb[0].mxu0
        %v2303 = vpop.f32.mrb[0].mxu0
        %2304 = vdwg.mxu0
        %v2306 = vsel %vm2161, %v2251, 0
        %v2309 = vsel %vm2261, %v1755, 0
        %2311 = vmatprep.subr.bf16.mxu0 0
        %2312 = vmatpush1.bf16.msra.mxu0 %v2309
        %2313 = vmatprep.subr.bf16.mxu0 0
        %2314 = vmatpush1.bf16.msra.mxu0 0
        %2315 = vmatprep.subr.bf16.mxu0 0
        %2316 = vmatpush1.bf16.msra.mxu0 0
        %2317 = vmatprep.subr.bf16.mxu0 0
        %2318 = vmatpush1.bf16.msra.mxu0 0
        %2319 = vmatprep.subr.bf16.mxu0 0
        %2320 = vmatpush1.bf16.msra.mxu0 0
        %2321 = vmatprep.subr.bf16.mxu0 0
        %2322 = vmatpush1.bf16.msra.mxu0 0
        %2323 = vmatprep.subr.bf16.mxu0 0
        %2324 = vmatpush1.bf16.msra.mxu0 0
        %2325 = vmatprep.subr.bf16.mxu0 0
        %2326 = vmatpush1.bf16.msra.mxu0 0
        %2327 = vmatprep.subr.bf16.mxu0 0
        %2328 = vmatpush1.bf16.msra.mxu0 0
        %2329 = vmatprep.subr.bf16.mxu0 0
        %2330 = vmatpush1.bf16.msra.mxu0 0
        %2331 = vmatprep.subr.bf16.mxu0 0
        %2332 = vmatpush1.bf16.msra.mxu0 0
        %2333 = vmatprep.subr.bf16.mxu0 0
        %2334 = vmatpush1.bf16.msra.mxu0 0
        %2335 = vmatprep.subr.bf16.mxu0 0
        %2336 = vmatpush1.bf16.msra.mxu0 0
        %2337 = vmatprep.subr.bf16.mxu0 0
        %2338 = vmatpush1.bf16.msra.mxu0 0
        %2339 = vmatprep.subr.bf16.mxu0 0
        %2340 = vmatpush1.bf16.msra.mxu0 0
        %2341 = vmatprep.subr.bf16.mxu0 0
        %2342 = vmatpush1.bf16.msra.mxu0 0
        %2343 = vmatprep.mubr.bf16.mxu0 0
        %2344 = vmatmul.mubr.bf16.gmra.mrb[0].mxu0 %v2306
        %v2345 = vpop.f32.mrb[0].mxu0
        %v2346 = vadd.f32 0.0, %v2345
        %v2347 = vpop.f32.mrb[0].mxu0
        %v2348 = vpop.f32.mrb[0].mxu0
        %v2349 = vpop.f32.mrb[0].mxu0
        %2350 = vdwg.mxu0
        %v2352 = vsel %vm2161, %v2252, 0
        %v2355 = vsel %vm2261, %v1756, 0
        %2357 = vmatprep.subr.bf16.mxu0 0
        %2358 = vmatpush1.bf16.msra.mxu0 %v2355
        %2359 = vmatprep.subr.bf16.mxu0 0
        %2360 = vmatpush1.bf16.msra.mxu0 0
        %2361 = vmatprep.subr.bf16.mxu0 0
        %2362 = vmatpush1.bf16.msra.mxu0 0
        %2363 = vmatprep.subr.bf16.mxu0 0
        %2364 = vmatpush1.bf16.msra.mxu0 0
        %2365 = vmatprep.subr.bf16.mxu0 0
        %2366 = vmatpush1.bf16.msra.mxu0 0
        %2367 = vmatprep.subr.bf16.mxu0 0
        %2368 = vmatpush1.bf16.msra.mxu0 0
        %2369 = vmatprep.subr.bf16.mxu0 0
        %2370 = vmatpush1.bf16.msra.mxu0 0
        %2371 = vmatprep.subr.bf16.mxu0 0
        %2372 = vmatpush1.bf16.msra.mxu0 0
        %2373 = vmatprep.subr.bf16.mxu0 0
        %2374 = vmatpush1.bf16.msra.mxu0 0
        %2375 = vmatprep.subr.bf16.mxu0 0
        %2376 = vmatpush1.bf16.msra.mxu0 0
        %2377 = vmatprep.subr.bf16.mxu0 0
        %2378 = vmatpush1.bf16.msra.mxu0 0
        %2379 = vmatprep.subr.bf16.mxu0 0
        %2380 = vmatpush1.bf16.msra.mxu0 0
        %2381 = vmatprep.subr.bf16.mxu0 0
        %2382 = vmatpush1.bf16.msra.mxu0 0
        %2383 = vmatprep.subr.bf16.mxu0 0
        %2384 = vmatpush1.bf16.msra.mxu0 0
        %2385 = vmatprep.subr.bf16.mxu0 0
        %2386 = vmatpush1.bf16.msra.mxu0 0
        %2387 = vmatprep.subr.bf16.mxu0 0
        %2388 = vmatpush1.bf16.msra.mxu0 0
        %2389 = vmatprep.mubr.bf16.mxu0 0
        %2390 = vmatmul.mubr.bf16.gmra.mrb[0].mxu0 %v2352
        %v2391 = vpop.f32.mrb[0].mxu0
        %v2392 = vadd.f32 0.0, %v2391
        %v2393 = vpop.f32.mrb[0].mxu0
        %v2394 = vpop.f32.mrb[0].mxu0
        %v2395 = vpop.f32.mrb[0].mxu0
        %2396 = vdwg.mxu0
        %v2398 = vsel %vm2161, %v2253, 0
        %v2401 = vsel %vm2261, %v1757, 0
        %2403 = vmatprep.subr.bf16.mxu0 0
        %2404 = vmatpush1.bf16.msra.mxu0 %v2401
        %2405 = vmatprep.subr.bf16.mxu0 0
        %2406 = vmatpush1.bf16.msra.mxu0 0
        %2407 = vmatprep.subr.bf16.mxu0 0
        %2408 = vmatpush1.bf16.msra.mxu0 0
        %2409 = vmatprep.subr.bf16.mxu0 0
        %2410 = vmatpush1.bf16.msra.mxu0 0
        %2411 = vmatprep.subr.bf16.mxu0 0
        %2412 = vmatpush1.bf16.msra.mxu0 0
        %2413 = vmatprep.subr.bf16.mxu0 0
        %2414 = vmatpush1.bf16.msra.mxu0 0
        %2415 = vmatprep.subr.bf16.mxu0 0
        %2416 = vmatpush1.bf16.msra.mxu0 0
        %2417 = vmatprep.subr.bf16.mxu0 0
        %2418 = vmatpush1.bf16.msra.mxu0 0
        %2419 = vmatprep.subr.bf16.mxu0 0
        %2420 = vmatpush1.bf16.msra.mxu0 0
        %2421 = vmatprep.subr.bf16.mxu0 0
        %2422 = vmatpush1.bf16.msra.mxu0 0
        %2423 = vmatprep.subr.bf16.mxu0 0
        %2424 = vmatpush1.bf16.msra.mxu0 0
        %2425 = vmatprep.subr.bf16.mxu0 0
        %2426 = vmatpush1.bf16.msra.mxu0 0
        %2427 = vmatprep.subr.bf16.mxu0 0
        %2428 = vmatpush1.bf16.msra.mxu0 0
        %2429 = vmatprep.subr.bf16.mxu0 0
        %2430 = vmatpush1.bf16.msra.mxu0 0
        %2431 = vmatprep.subr.bf16.mxu0 0
        %2432 = vmatpush1.bf16.msra.mxu0 0
        %2433 = vmatprep.subr.bf16.mxu0 0
        %2434 = vmatpush1.bf16.msra.mxu0 0
        %2435 = vmatprep.mubr.bf16.mxu0 0
        %2436 = vmatmul.mubr.bf16.gmra.mrb[0].mxu0 %v2398
        %v2437 = vpop.f32.mrb[0].mxu0
        %v2438 = vadd.f32 0.0, %v2437
        %v2439 = vpop.f32.mrb[0].mxu0
        %v2440 = vpop.f32.mrb[0].mxu0
        %v2441 = vpop.f32.mrb[0].mxu0
        %2442 = vdwg.mxu0
        %v2444 = vsel %vm2161, %v2254, 0
        %v2447 = vsel %vm2261, %v1758, 0
        %2449 = vmatprep.subr.bf16.mxu0 0
        %2450 = vmatpush1.bf16.msra.mxu0 %v2447
        %2451 = vmatprep.subr.bf16.mxu0 0
        %2452 = vmatpush1.bf16.msra.mxu0 0
        %2453 = vmatprep.subr.bf16.mxu0 0
        %2454 = vmatpush1.bf16.msra.mxu0 0
        %2455 = vmatprep.subr.bf16.mxu0 0
        %2456 = vmatpush1.bf16.msra.mxu0 0
        %2457 = vmatprep.subr.bf16.mxu0 0
        %2458 = vmatpush1.bf16.msra.mxu0 0
        %2459 = vmatprep.subr.bf16.mxu0 0
        %2460 = vmatpush1.bf16.msra.mxu0 0
        %2461 = vmatprep.subr.bf16.mxu0 0
        %2462 = vmatpush1.bf16.msra.mxu0 0
        %2463 = vmatprep.subr.bf16.mxu0 0
        %2464 = vmatpush1.bf16.msra.mxu0 0
        %2465 = vmatprep.subr.bf16.mxu0 0
        %2466 = vmatpush1.bf16.msra.mxu0 0
        %2467 = vmatprep.subr.bf16.mxu0 0
        %2468 = vmatpush1.bf16.msra.mxu0 0
        %2469 = vmatprep.subr.bf16.mxu0 0
        %2470 = vmatpush1.bf16.msra.mxu0 0
        %2471 = vmatprep.subr.bf16.mxu0 0
        %2472 = vmatpush1.bf16.msra.mxu0 0
        %2473 = vmatprep.subr.bf16.mxu0 0
        %2474 = vmatpush1.bf16.msra.mxu0 0
        %2475 = vmatprep.subr.bf16.mxu0 0
        %2476 = vmatpush1.bf16.msra.mxu0 0
        %2477 = vmatprep.subr.bf16.mxu0 0
        %2478 = vmatpush1.bf16.msra.mxu0 0
        %2479 = vmatprep.subr.bf16.mxu0 0
        %2480 = vmatpush1.bf16.msra.mxu0 0
        %2481 = vmatprep.mubr.bf16.mxu0 0
        %2482 = vmatmul.mubr.bf16.gmra.mrb[0].mxu0 %v2444
        %v2483 = vpop.f32.mrb[0].mxu0
        %v2484 = vadd.f32 0.0, %v2483
        %v2485 = vpop.f32.mrb[0].mxu0
        %v2486 = vpop.f32.mrb[0].mxu0
        %v2487 = vpop.f32.mrb[0].mxu0
        %2488 = vdwg.mxu0
        %v2490 = vsel %vm2161, %v2255, 0
        %v2493 = vsel %vm2261, %v1759, 0
        %2495 = vmatprep.subr.bf16.mxu0 0
        %2496 = vmatpush1.bf16.msra.mxu0 %v2493
        %2497 = vmatprep.subr.bf16.mxu0 0
        %2498 = vmatpush1.bf16.msra.mxu0 0
        %2499 = vmatprep.subr.bf16.mxu0 0
        %2500 = vmatpush1.bf16.msra.mxu0 0
        %2501 = vmatprep.subr.bf16.mxu0 0
        %2502 = vmatpush1.bf16.msra.mxu0 0
        %2503 = vmatprep.subr.bf16.mxu0 0
        %2504 = vmatpush1.bf16.msra.mxu0 0
        %2505 = vmatprep.subr.bf16.mxu0 0
        %2506 = vmatpush1.bf16.msra.mxu0 0
        %2507 = vmatprep.subr.bf16.mxu0 0
        %2508 = vmatpush1.bf16.msra.mxu0 0
        %2509 = vmatprep.subr.bf16.mxu0 0
        %2510 = vmatpush1.bf16.msra.mxu0 0
        %2511 = vmatprep.subr.bf16.mxu0 0
        %2512 = vmatpush1.bf16.msra.mxu0 0
        %2513 = vmatprep.subr.bf16.mxu0 0
        %2514 = vmatpush1.bf16.msra.mxu0 0
        %2515 = vmatprep.subr.bf16.mxu0 0
        %2516 = vmatpush1.bf16.msra.mxu0 0
        %2517 = vmatprep.subr.bf16.mxu0 0
        %2518 = vmatpush1.bf16.msra.mxu0 0
        %2519 = vmatprep.subr.bf16.mxu0 0
        %2520 = vmatpush1.bf16.msra.mxu0 0
        %2521 = vmatprep.subr.bf16.mxu0 0
        %2522 = vmatpush1.bf16.msra.mxu0 0
        %2523 = vmatprep.subr.bf16.mxu0 0
        %2524 = vmatpush1.bf16.msra.mxu0 0
        %2525 = vmatprep.subr.bf16.mxu0 0
        %2526 = vmatpush1.bf16.msra.mxu0 0
        %2527 = vmatprep.mubr.bf16.mxu0 0
        %2528 = vmatmul.mubr.bf16.gmra.mrb[0].mxu0 %v2490
        %v2529 = vpop.f32.mrb[0].mxu0
        %v2530 = vadd.f32 0.0, %v2529
        %v2531 = vpop.f32.mrb[0].mxu0
        %v2532 = vpop.f32.mrb[0].mxu0
        %v2533 = vpop.f32.mrb[0].mxu0
        %2534 = vdwg.mxu0
        %v2536 = vsel %vm2161, %v2256, 0
        %v2539 = vsel %vm2261, %v1760, 0
        %2541 = vmatprep.subr.bf16.mxu0 0
        %2542 = vmatpush1.bf16.msra.mxu0 %v2539
        %2543 = vmatprep.subr.bf16.mxu0 0
        %2544 = vmatpush1.bf16.msra.mxu0 0
        %2545 = vmatprep.subr.bf16.mxu0 0
        %2546 = vmatpush1.bf16.msra.mxu0 0
        %2547 = vmatprep.subr.bf16.mxu0 0
        %2548 = vmatpush1.bf16.msra.mxu0 0
        %2549 = vmatprep.subr.bf16.mxu0 0
        %2550 = vmatpush1.bf16.msra.mxu0 0
        %2551 = vmatprep.subr.bf16.mxu0 0
        %2552 = vmatpush1.bf16.msra.mxu0 0
        %2553 = vmatprep.subr.bf16.mxu0 0
        %2554 = vmatpush1.bf16.msra.mxu0 0
        %2555 = vmatprep.subr.bf16.mxu0 0
        %2556 = vmatpush1.bf16.msra.mxu0 0
        %2557 = vmatprep.subr.bf16.mxu0 0
        %2558 = vmatpush1.bf16.msra.mxu0 0
        %2559 = vmatprep.subr.bf16.mxu0 0
        %2560 = vmatpush1.bf16.msra.mxu0 0
        %2561 = vmatprep.subr.bf16.mxu0 0
        %2562 = vmatpush1.bf16.msra.mxu0 0
        %2563 = vmatprep.subr.bf16.mxu0 0
        %2564 = vmatpush1.bf16.msra.mxu0 0
        %2565 = vmatprep.subr.bf16.mxu0 0
        %2566 = vmatpush1.bf16.msra.mxu0 0
        %2567 = vmatprep.subr.bf16.mxu0 0
        %2568 = vmatpush1.bf16.msra.mxu0 0
        %2569 = vmatprep.subr.bf16.mxu0 0
        %2570 = vmatpush1.bf16.msra.mxu0 0
        %2571 = vmatprep.subr.bf16.mxu0 0
        %2572 = vmatpush1.bf16.msra.mxu0 0
        %2573 = vmatprep.mubr.bf16.mxu0 0
        %2574 = vmatmul.mubr.bf16.gmra.mrb[0].mxu0 %v2536
        %v2575 = vpop.f32.mrb[0].mxu0
        %v2576 = vadd.f32 0.0, %v2575
        %v2577 = vpop.f32.mrb[0].mxu0
        %v2578 = vpop.f32.mrb[0].mxu0
        %v2579 = vpop.f32.mrb[0].mxu0
        %2580 = vdwg.mxu0
        %v2582 = vsel %vm2161, %v2257, 0
        %v2585 = vsel %vm2261, %v1761, 0
        %2587 = vmatprep.subr.bf16.mxu0 0
        %2588 = vmatpush1.bf16.msra.mxu0 %v2585
        %2589 = vmatprep.subr.bf16.mxu0 0
        %2590 = vmatpush1.bf16.msra.mxu0 0
        %2591 = vmatprep.subr.bf16.mxu0 0
        %2592 = vmatpush1.bf16.msra.mxu0 0
        %2593 = vmatprep.subr.bf16.mxu0 0
        %2594 = vmatpush1.bf16.msra.mxu0 0
        %2595 = vmatprep.subr.bf16.mxu0 0
        %2596 = vmatpush1.bf16.msra.mxu0 0
        %2597 = vmatprep.subr.bf16.mxu0 0
        %2598 = vmatpush1.bf16.msra.mxu0 0
        %2599 = vmatprep.subr.bf16.mxu0 0
        %2600 = vmatpush1.bf16.msra.mxu0 0
        %2601 = vmatprep.subr.bf16.mxu0 0
        %2602 = vmatpush1.bf16.msra.mxu0 0
        %2603 = vmatprep.subr.bf16.mxu0 0
        %2604 = vmatpush1.bf16.msra.mxu0 0
        %2605 = vmatprep.subr.bf16.mxu0 0
        %2606 = vmatpush1.bf16.msra.mxu0 0
        %2607 = vmatprep.subr.bf16.mxu0 0
        %2608 = vmatpush1.bf16.msra.mxu0 0
        %2609 = vmatprep.subr.bf16.mxu0 0
        %2610 = vmatpush1.bf16.msra.mxu0 0
        %2611 = vmatprep.subr.bf16.mxu0 0
        %2612 = vmatpush1.bf16.msra.mxu0 0
        %2613 = vmatprep.subr.bf16.mxu0 0
        %2614 = vmatpush1.bf16.msra.mxu0 0
        %2615 = vmatprep.subr.bf16.mxu0 0
        %2616 = vmatpush1.bf16.msra.mxu0 0
        %2617 = vmatprep.subr.bf16.mxu0 0
        %2618 = vmatpush1.bf16.msra.mxu0 0
        %2619 = vmatprep.mubr.bf16.mxu0 0
        %2620 = vmatmul.mubr.bf16.gmra.mrb[0].mxu0 %v2582
        %v2621 = vpop.f32.mrb[0].mxu0
        %v2622 = vadd.f32 0.0, %v2621
        %v2623 = vpop.f32.mrb[0].mxu0
        %v2624 = vpop.f32.mrb[0].mxu0
        %v2625 = vpop.f32.mrb[0].mxu0
        %2626 = vdwg.mxu0
        %v2627 = vcombine.low %v2300, %v2392
        %v2628 = vcombine.high %v2300, %v2392
        %v2630 = vunpack.c.l.s4 1983009808
        %v2631 = vunpack.c.0.s8 %v2630
        %v2632 = vlaneseq
        %v2633 = vshrl.u32 %v2632, 7
        %v2634 = vsub.s32 %v2631, %v2633
        %v2635 = vrot.slane %v2627, %v2634
        %v2637 = vunpack.c.l.s4 1983009808
        %v2638 = vunpack.c.0.s8 %v2637
        %v2639 = vlaneseq
        %v2640 = vshrl.u32 %v2639, 7
        %v2641 = vsub.s32 %v2638, %v2640
        %v2642 = vrot.slane %v2628, %v2641
        %v2643 = vcombine.low %v2346, %v2438
        %v2644 = vcombine.high %v2346, %v2438
        %v2646 = vunpack.c.l.s4 1983009808
        %v2647 = vunpack.c.0.s8 %v2646
        %v2648 = vlaneseq
        %v2649 = vshrl.u32 %v2648, 7
        %v2650 = vsub.s32 %v2647, %v2649
        %v2651 = vrot.slane %v2643, %v2650
        %v2653 = vunpack.c.l.s4 1983009808
        %v2654 = vunpack.c.0.s8 %v2653
        %v2655 = vlaneseq
        %v2656 = vshrl.u32 %v2655, 7
        %v2657 = vsub.s32 %v2654, %v2656
        %v2658 = vrot.slane %v2644, %v2657
        %v2659 = vcombine.low %v2635, %v2651
        %v2660 = vcombine.high %v2635, %v2651
        %v2662 = vunpack.c.l.s4 1934713408
        %v2663 = vunpack.c.0.s8 %v2662
        %v2664 = vlaneseq
        %v2665 = vshrl.u32 %v2664, 7
        %v2666 = vsub.s32 %v2663, %v2665
        %v2667 = vrot.slane %v2659, %v2666
        %v2669 = vunpack.c.l.s4 1934713408
        %v2670 = vunpack.c.0.s8 %v2669
        %v2671 = vlaneseq
        %v2672 = vshrl.u32 %v2671, 7
        %v2673 = vsub.s32 %v2670, %v2672
        %v2674 = vrot.slane %v2660, %v2673
        %v2675 = vcombine.low %v2642, %v2658
        %v2676 = vcombine.high %v2642, %v2658
        %v2678 = vunpack.c.l.s4 1934713408
        %v2679 = vunpack.c.0.s8 %v2678
        %v2680 = vlaneseq
        %v2681 = vshrl.u32 %v2680, 7
        %v2682 = vsub.s32 %v2679, %v2681
        %v2683 = vrot.slane %v2675, %v2682
        %v2685 = vunpack.c.l.s4 1934713408
        %v2686 = vunpack.c.0.s8 %v2685
        %v2687 = vlaneseq
        %v2688 = vshrl.u32 %v2687, 7
        %v2689 = vsub.s32 %v2686, %v2688
        %v2690 = vrot.slane %v2676, %v2689
        %v2691 = vcombine.high %v2667, 0.0
        %v2692 = vcombine.high %v2674, 0.0
        %v2693 = vcombine.high %v2683, 0.0
        %v2694 = vcombine.high %v2690, 0.0
        %v2695 = vcombine.low %v2484, %v2576
        %v2696 = vcombine.high %v2484, %v2576
        %v2698 = vunpack.c.l.s4 1983009808
        %v2699 = vunpack.c.0.s8 %v2698
        %v2700 = vlaneseq
        %v2701 = vshrl.u32 %v2700, 7
        %v2702 = vsub.s32 %v2699, %v2701
        %v2703 = vrot.slane %v2695, %v2702
        %v2705 = vunpack.c.l.s4 1983009808
        %v2706 = vunpack.c.0.s8 %v2705
        %v2707 = vlaneseq
        %v2708 = vshrl.u32 %v2707, 7
        %v2709 = vsub.s32 %v2706, %v2708
        %v2710 = vrot.slane %v2696, %v2709
        %v2711 = vcombine.low %v2530, %v2622
        %v2712 = vcombine.high %v2530, %v2622
        %v2714 = vunpack.c.l.s4 1983009808
        %v2715 = vunpack.c.0.s8 %v2714
        %v2716 = vlaneseq
        %v2717 = vshrl.u32 %v2716, 7
        %v2718 = vsub.s32 %v2715, %v2717
        %v2719 = vrot.slane %v2711, %v2718
        %v2721 = vunpack.c.l.s4 1983009808
        %v2722 = vunpack.c.0.s8 %v2721
        %v2723 = vlaneseq
        %v2724 = vshrl.u32 %v2723, 7
        %v2725 = vsub.s32 %v2722, %v2724
        %v2726 = vrot.slane %v2712, %v2725
        %v2727 = vcombine.low %v2703, %v2719
        %v2728 = vcombine.high %v2703, %v2719
        %v2730 = vunpack.c.l.s4 1934713408
        %v2731 = vunpack.c.0.s8 %v2730
        %v2732 = vlaneseq
        %v2733 = vshrl.u32 %v2732, 7
        %v2734 = vsub.s32 %v2731, %v2733
        %v2735 = vrot.slane %v2727, %v2734
        %v2737 = vunpack.c.l.s4 1934713408
        %v2738 = vunpack.c.0.s8 %v2737
        %v2739 = vlaneseq
        %v2740 = vshrl.u32 %v2739, 7
        %v2741 = vsub.s32 %v2738, %v2740
        %v2742 = vrot.slane %v2728, %v2741
        %v2743 = vcombine.low %v2710, %v2726
        %v2744 = vcombine.high %v2710, %v2726
        %v2746 = vunpack.c.l.s4 1934713408
        %v2747 = vunpack.c.0.s8 %v2746
        %v2748 = vlaneseq
        %v2749 = vshrl.u32 %v2748, 7
        %v2750 = vsub.s32 %v2747, %v2749
        %v2751 = vrot.slane %v2743, %v2750
        %v2753 = vunpack.c.l.s4 1934713408
        %v2754 = vunpack.c.0.s8 %v2753
        %v2755 = vlaneseq
        %v2756 = vshrl.u32 %v2755, 7
        %v2757 = vsub.s32 %v2754, %v2756
        %v2758 = vrot.slane %v2744, %v2757
        %v2759 = vcombine.high %v2735, 0.0
        %v2760 = vcombine.high %v2742, 0.0
        %v2761 = vcombine.high %v2751, 0.0
        %v2762 = vcombine.high %v2758, 0.0
        %v2763 = vcombine.low %v2667, %v2674
        %v2765 = vunpack.c.l.s4 1983009808
        %v2766 = vunpack.c.0.s8 %v2765
        %v2767 = vlaneseq
        %v2768 = vshrl.u32 %v2767, 7
        %v2769 = vsub.s32 %v2766, %v2768
        %v2770 = vrot.slane %v2763, %v2769
        %v2771 = vcombine.low %v2691, %v2692
        %v2773 = vunpack.c.l.s4 1983009808
        %v2774 = vunpack.c.0.s8 %v2773
        %v2775 = vlaneseq
        %v2776 = vshrl.u32 %v2775, 7
        %v2777 = vsub.s32 %v2774, %v2776
        %v2778 = vrot.slane %v2771, %v2777
        %v2779 = vcombine.low %v2683, %v2690
        %v2781 = vunpack.c.l.s4 1983009808
        %v2782 = vunpack.c.0.s8 %v2781
        %v2783 = vlaneseq
        %v2784 = vshrl.u32 %v2783, 7
        %v2785 = vsub.s32 %v2782, %v2784
        %v2786 = vrot.slane %v2779, %v2785
        %v2787 = vcombine.low %v2693, %v2694
        %v2789 = vunpack.c.l.s4 1983009808
        %v2790 = vunpack.c.0.s8 %v2789
        %v2791 = vlaneseq
        %v2792 = vshrl.u32 %v2791, 7
        %v2793 = vsub.s32 %v2790, %v2792
        %v2794 = vrot.slane %v2787, %v2793
        %v2795 = vcombine.low %v2770, %v2778
        %v2796 = vcombine.high %v2770, %v2778
        %v2798 = vunpack.c.l.s4 1934713408
        %v2799 = vunpack.c.0.s8 %v2798
        %v2800 = vlaneseq
        %v2801 = vshrl.u32 %v2800, 7
        %v2802 = vsub.s32 %v2799, %v2801
        %v2803 = vrot.slane %v2795, %v2802
        %v2805 = vunpack.c.l.s4 1934713408
        %v2806 = vunpack.c.0.s8 %v2805
        %v2807 = vlaneseq
        %v2808 = vshrl.u32 %v2807, 7
        %v2809 = vsub.s32 %v2806, %v2808
        %v2810 = vrot.slane %v2796, %v2809
        %v2811 = vcombine.low %v2786, %v2794
        %v2812 = vcombine.high %v2786, %v2794
        %v2814 = vunpack.c.l.s4 1934713408
        %v2815 = vunpack.c.0.s8 %v2814
        %v2816 = vlaneseq
        %v2817 = vshrl.u32 %v2816, 7
        %v2818 = vsub.s32 %v2815, %v2817
        %v2819 = vrot.slane %v2811, %v2818
        %v2821 = vunpack.c.l.s4 1934713408
        %v2822 = vunpack.c.0.s8 %v2821
        %v2823 = vlaneseq
        %v2824 = vshrl.u32 %v2823, 7
        %v2825 = vsub.s32 %v2822, %v2824
        %v2826 = vrot.slane %v2812, %v2825
        %v2827 = vcombine.low %v2803, %v2819
        %v2828 = vcombine.high %v2803, %v2819
        %v2829 = vcombine.low %v2810, %v2826
        %v2830 = vcombine.high %v2810, %v2826
        %v2831 = vcombine.low %v2735, %v2742
        %v2833 = vunpack.c.l.s4 1983009808
        %v2834 = vunpack.c.0.s8 %v2833
        %v2835 = vlaneseq
        %v2836 = vshrl.u32 %v2835, 7
        %v2837 = vsub.s32 %v2834, %v2836
        %v2838 = vrot.slane %v2831, %v2837
        %v2839 = vcombine.low %v2759, %v2760
        %v2841 = vunpack.c.l.s4 1983009808
        %v2842 = vunpack.c.0.s8 %v2841
        %v2843 = vlaneseq
        %v2844 = vshrl.u32 %v2843, 7
        %v2845 = vsub.s32 %v2842, %v2844
        %v2846 = vrot.slane %v2839, %v2845
        %v2847 = vcombine.low %v2751, %v2758
        %v2849 = vunpack.c.l.s4 1983009808
        %v2850 = vunpack.c.0.s8 %v2849
        %v2851 = vlaneseq
        %v2852 = vshrl.u32 %v2851, 7
        %v2853 = vsub.s32 %v2850, %v2852
        %v2854 = vrot.slane %v2847, %v2853
        %v2855 = vcombine.low %v2761, %v2762
        %v2857 = vunpack.c.l.s4 1983009808
        %v2858 = vunpack.c.0.s8 %v2857
        %v2859 = vlaneseq
        %v2860 = vshrl.u32 %v2859, 7
        %v2861 = vsub.s32 %v2858, %v2860
        %v2862 = vrot.slane %v2855, %v2861
        %v2863 = vcombine.low %v2838, %v2846
        %v2864 = vcombine.high %v2838, %v2846
        %v2866 = vunpack.c.l.s4 1934713408
        %v2867 = vunpack.c.0.s8 %v2866
        %v2868 = vlaneseq
        %v2869 = vshrl.u32 %v2868, 7
        %v2870 = vsub.s32 %v2867, %v2869
        %v2871 = vrot.slane %v2863, %v2870
        %v2873 = vunpack.c.l.s4 1934713408
        %v2874 = vunpack.c.0.s8 %v2873
        %v2875 = vlaneseq
        %v2876 = vshrl.u32 %v2875, 7
        %v2877 = vsub.s32 %v2874, %v2876
        %v2878 = vrot.slane %v2864, %v2877
        %v2879 = vcombine.low %v2854, %v2862
        %v2880 = vcombine.high %v2854, %v2862
        %v2882 = vunpack.c.l.s4 1934713408
        %v2883 = vunpack.c.0.s8 %v2882
        %v2884 = vlaneseq
        %v2885 = vshrl.u32 %v2884, 7
        %v2886 = vsub.s32 %v2883, %v2885
        %v2887 = vrot.slane %v2879, %v2886
        %v2889 = vunpack.c.l.s4 1934713408
        %v2890 = vunpack.c.0.s8 %v2889
        %v2891 = vlaneseq
        %v2892 = vshrl.u32 %v2891, 7
        %v2893 = vsub.s32 %v2890, %v2892
        %v2894 = vrot.slane %v2880, %v2893
        %v2895 = vcombine.low %v2871, %v2887
        %v2896 = vcombine.high %v2871, %v2887
        %v2897 = vcombine.low %v2878, %v2894
        %v2898 = vcombine.high %v2878, %v2894
        %2901 = vrot.lane.b32.xlu0 %v2828, 32
        %v2902 = vpop.permute.xlu0 %2901
        %2903 = vrot.lane.b32.xlu0 %v2896, 32
        %v2904 = vpop.permute.xlu0 %2903
        %2909 = vrot.lane.b32.xlu0 %v2829, 64
        %v2910 = vpop.permute.xlu0 %2909
        %2911 = vrot.lane.b32.xlu0 %v2897, 64
        %v2912 = vpop.permute.xlu0 %2911
        %2917 = vrot.lane.b32.xlu0 %v2830, 96
        %v2918 = vpop.permute.xlu0 %2917
        %2919 = vrot.lane.b32.xlu0 %v2898, 96
        %v2920 = vpop.permute.xlu0 %2919
        %v2923 = vsel %vm1762, %v2827, %v2902
        %v2924 = vsel %vm1762, %v2895, %v2904
        %vm2925 = vcmask 523264
        %v2926 = vsel %vm2925, %v2923, %v2910
        %v2927 = vsel %vm2925, %v2924, %v2912
        %vm2928 = vcmask 785408
        %v2929 = vsel %vm2928, %v2926, %v2918
        %v2930 = vsel %vm2928, %v2927, %v2920
        %v2931 = vpack.c.bf16 %v2930, %v2929
        %v2932 = vld [vmem:[%s481] sm:$0xf]
        %v2933 = vld [vmem:[%s481 + $0x4] sm:$0xf]
        %v2934 = vld [vmem:[%s481 + $0x8] sm:$0xf]
        %v2935 = vld [vmem:[%s481 + $0xc] sm:$0xf]
        %v2936 = vld [vmem:[%s481 + $0x10] sm:$0xf]
        %v2937 = vld [vmem:[%s481 + $0x14] sm:$0xf]
        %v2938 = vld [vmem:[%s481 + $0x18] sm:$0xf]
        %v2939 = vld [vmem:[%s481 + $0x1c] sm:$0xf]
        %v2940 = vld [vmem:[%s481 + $0x20] sm:$0xf]
        %v2941 = vld [vmem:[%s481 + $0x24] sm:$0xf]
        %v2942 = vld [vmem:[%s481 + $0x28] sm:$0xf]
        %v2943 = vld [vmem:[%s481 + $0x2c] sm:$0xf]
        %v2944 = vld [vmem:[%s481 + $0x30] sm:$0xf]
        %v2945 = vld [vmem:[%s481 + $0x34] sm:$0xf]
        %v2946 = vld [vmem:[%s481 + $0x38] sm:$0xf]
        %v2947 = vld [vmem:[%s481 + $0x3c] sm:$0xf]
        %v2964 = vunpack.c.l.b16 %v2932
        %v2965 = vunpack.c.l.b16 %v2933
        %v2966 = vunpack.c.l.b16 %v2934
        %v2967 = vunpack.c.l.b16 %v2935
        %v2968 = vunpack.c.l.b16 %v2936
        %v2969 = vunpack.c.l.b16 %v2937
        %v2970 = vunpack.c.l.b16 %v2938
        %v2971 = vunpack.c.l.b16 %v2939
        %v2972 = vunpack.c.l.b16 %v2940
        %v2973 = vunpack.c.l.b16 %v2941
        %v2974 = vunpack.c.l.b16 %v2942
        %v2975 = vunpack.c.l.b16 %v2943
        %v2976 = vunpack.c.l.b16 %v2944
        %v2977 = vunpack.c.l.b16 %v2945
        %v2978 = vunpack.c.l.b16 %v2946
        %v2979 = vunpack.c.l.b16 %v2947
        %v2980 = vpack.c.b16 %v2965, %v2964
        %v2981 = vpack.c.b16 %v2967, %v2966
        %v2982 = vpack.c.b16 %v2969, %v2968
        %v2983 = vpack.c.b16 %v2971, %v2970
        %v2984 = vpack.c.b16 %v2973, %v2972
        %v2985 = vpack.c.b16 %v2975, %v2974
        %v2986 = vpack.c.b16 %v2977, %v2976
        %v2987 = vpack.c.b16 %v2979, %v2978
        %2996 = vmatprep.subr.bf16.mxu0 0
        %2997 = vmatpush1.bf16.msra.mxu0 %v2980
        %2998 = vmatprep.subr.bf16.mxu0 0
        %2999 = vmatpush1.bf16.msra.mxu0 %v2981
        %3000 = vmatprep.subr.bf16.mxu0 0
        %3001 = vmatpush1.bf16.msra.mxu0 %v2982
        %3002 = vmatprep.subr.bf16.mxu0 0
        %3003 = vmatpush1.bf16.msra.mxu0 %v2983
        %3004 = vmatprep.subr.bf16.mxu0 0
        %3005 = vmatpush1.bf16.msra.mxu0 %v2984
        %3006 = vmatprep.subr.bf16.mxu0 0
        %3007 = vmatpush1.bf16.msra.mxu0 %v2985
        %3008 = vmatprep.subr.bf16.mxu0 0
        %3009 = vmatpush1.bf16.msra.mxu0 %v2986
        %3010 = vmatprep.subr.bf16.mxu0 0
        %3011 = vmatpush1.bf16.msra.mxu0 %v2987
        %3012 = vmatprep.subr.bf16.mxu0 0
        %3013 = vmatpush1.bf16.msra.mxu0 0
        %3014 = vmatprep.subr.bf16.mxu0 0
        %3015 = vmatpush1.bf16.msra.mxu0 0
        %3016 = vmatprep.subr.bf16.mxu0 0
        %3017 = vmatpush1.bf16.msra.mxu0 0
        %3018 = vmatprep.subr.bf16.mxu0 0
        %3019 = vmatpush1.bf16.msra.mxu0 0
        %3020 = vmatprep.subr.bf16.mxu0 0
        %3021 = vmatpush1.bf16.msra.mxu0 0
        %3022 = vmatprep.subr.bf16.mxu0 0
        %3023 = vmatpush1.bf16.msra.mxu0 0
        %3024 = vmatprep.subr.bf16.mxu0 0
        %3025 = vmatpush1.bf16.msra.mxu0 0
        %3026 = vmatprep.subr.bf16.mxu0 0
        %3027 = vmatpush1.bf16.msra.mxu0 0
        %3028 = vmatprep.mubr.bf16.mxu0 0
        %3029 = vmatmul.mubr.bf16.gmra.mrb[0].mxu0 %v2931
        %v3030 = vpop.f32.mrb[0].mxu0
        %v3031 = vadd.f32 0.0, %v3030
        %v3032 = vpop.f32.mrb[0].mxu0
        %v3033 = vpop.f32.mrb[0].mxu0
        %v3034 = vadd.f32 0.0, %v3033
        %v3035 = vpop.f32.mrb[0].mxu0
        %3036 = vdwg.mxu0
        %v3037 = vadd.f32 %v579, %v3031
        %v3038 = vadd.f32 %v580, %v3034
        %3039 = vadd.xlane.f32.xlu0 %v3037
        %v3040 = vpop.xlane.xlu0 %3039
        %3041 = vadd.xlane.f32.xlu0 %v3038
        %v3042 = vpop.xlane.xlu0 %3041
        %v3043 = vmul.f32 %v3040, %v586
        %v3044 = vmul.f32 %v3042, %v586
        %v3045 = vsub.f32 %v3037, %v3043
        %v3046 = vsub.f32 %v3038, %v3044
        %v3047 = vmul.f32 %v3045, %v3045
        %v3048 = vmul.f32 %v3046, %v3046
        %3049 = vadd.xlane.f32.xlu0 %v3047
        %v3050 = vpop.xlane.xlu0 %3049
        %3051 = vadd.xlane.f32.xlu0 %v3048
        %v3052 = vpop.xlane.xlu0 %3051
        %v3053 = vmul.f32 %v3050, %v586
        %v3054 = vmul.f32 %v3052, %v586
        %v3055 = vadd.f32 %v3053, 1e-05
        %v3056 = vadd.f32 %v3054, 1e-05
        %v3057 = vrsqrt.pop %v3055
        %v3058 = vrsqrt.pop %v3056
        %v3059 = vmul.f32 %v3045, %v3057
        %v3060 = vmul.f32 %v3046, %v3058
        %v3061 = vlaneseq
        %v3062 = vshrl.u32 %v3061, 7
        %v3063 = vsub.s32 2, %v3062
        %v3064 = vrot.slane %v581, %v3063
        %v3065 = vmul.f32 %v3059, %v3064
        %v3066 = vmul.f32 %v3060, %v3064
        %v3067 = vlaneseq
        %v3068 = vshrl.u32 %v3067, 7
        %v3069 = vsub.s32 3, %v3068
        %v3070 = vrot.slane %v581, %v3069
        %v3071 = vadd.f32 %v3065, %v3070
        %v3072 = vadd.f32 %v3066, %v3070
        %v3073 = vpack.c.bf16 %v3072, %v3071
        %v3074 = vld [vmem:[%s490] sm:$0xff]
        %v3075 = vld [vmem:[%s490 + $0x8] sm:$0xff]
        %v3076 = vld [vmem:[%s490 + $0x10] sm:$0xff]
        %v3077 = vld [vmem:[%s490 + $0x18] sm:$0xff]
        %v3078 = vld [vmem:[%s490 + $0x20] sm:$0xff]
        %v3079 = vld [vmem:[%s490 + $0x28] sm:$0xff]
        %v3080 = vld [vmem:[%s490 + $0x30] sm:$0xff]
        %v3081 = vld [vmem:[%s490 + $0x38] sm:$0xff]
        %v3082 = vld [vmem:[%s490 + $0x40] sm:$0xff]
        %v3083 = vld [vmem:[%s490 + $0x48] sm:$0xff]
        %v3084 = vld [vmem:[%s490 + $0x50] sm:$0xff]
        %v3085 = vld [vmem:[%s490 + $0x58] sm:$0xff]
        %v3086 = vld [vmem:[%s490 + $0x60] sm:$0xff]
        %v3087 = vld [vmem:[%s490 + $0x68] sm:$0xff]
        %v3088 = vld [vmem:[%s490 + $0x70] sm:$0xff]
        %v3089 = vld [vmem:[%s490 + $0x78] sm:$0xff]
        %v3090 = vld [vmem:[%s490 + $0x80] sm:$0xff]
        %v3091 = vld [vmem:[%s490 + $0x88] sm:$0xff]
        %v3092 = vld [vmem:[%s490 + $0x90] sm:$0xff]
        %v3093 = vld [vmem:[%s490 + $0x98] sm:$0xff]
        %v3094 = vld [vmem:[%s490 + $0xa0] sm:$0xff]
        %v3095 = vld [vmem:[%s490 + $0xa8] sm:$0xff]
        %v3096 = vld [vmem:[%s490 + $0xb0] sm:$0xff]
        %v3097 = vld [vmem:[%s490 + $0xb8] sm:$0xff]
        %v3098 = vld [vmem:[%s490 + $0xc0] sm:$0xff]
        %v3099 = vld [vmem:[%s490 + $0xc8] sm:$0xff]
        %v3100 = vld [vmem:[%s490 + $0xd0] sm:$0xff]
        %v3101 = vld [vmem:[%s490 + $0xd8] sm:$0xff]
        %v3102 = vld [vmem:[%s490 + $0xe0] sm:$0xff]
        %v3103 = vld [vmem:[%s490 + $0xe8] sm:$0xff]
        %v3104 = vld [vmem:[%s490 + $0xf0] sm:$0xff]
        %v3105 = vld [vmem:[%s490 + $0xf8] sm:$0xff]
        %v3106 = vld [vmem:[%s566] sm:$0xf]
        %v3108 = vlaneseq
        %v3109 = vshrl.u32 %v3108, 7
        %v3110 = vsub.s32 0, %v3109
        %v3111 = vrot.slane %v3106, %v3110
        %v3112 = vlaneseq
        %v3113 = vshrl.u32 %v3112, 7
        %v3114 = vsub.s32 1, %v3113
        %v3115 = vrot.slane %v3106, %v3114
        %v3116 = vlaneseq
        %v3117 = vshrl.u32 %v3116, 7
        %v3118 = vsub.s32 2, %v3117
        %v3119 = vrot.slane %v3106, %v3118
        %v3120 = vlaneseq
        %v3121 = vshrl.u32 %v3120, 7
        %v3122 = vsub.s32 3, %v3121
        %v3123 = vrot.slane %v3106, %v3122
        %v3160 = vunpack.c.l.b16 %v3074
        %v3161 = vunpack.c.h.b16 %v3074
        %v3162 = vunpack.c.l.b16 %v3075
        %v3163 = vunpack.c.h.b16 %v3075
        %v3164 = vunpack.c.l.b16 %v3076
        %v3165 = vunpack.c.h.b16 %v3076
        %v3166 = vunpack.c.l.b16 %v3077
        %v3167 = vunpack.c.h.b16 %v3077
        %v3168 = vunpack.c.l.b16 %v3078
        %v3169 = vunpack.c.h.b16 %v3078
        %v3170 = vunpack.c.l.b16 %v3079
        %v3171 = vunpack.c.h.b16 %v3079
        %v3172 = vunpack.c.l.b16 %v3080
        %v3173 = vunpack.c.h.b16 %v3080
        %v3174 = vunpack.c.l.b16 %v3081
        %v3175 = vunpack.c.h.b16 %v3081
        %v3176 = vunpack.c.l.b16 %v3082
        %v3177 = vunpack.c.h.b16 %v3082
        %v3178 = vunpack.c.l.b16 %v3083
        %v3179 = vunpack.c.h.b16 %v3083
        %v3180 = vunpack.c.l.b16 %v3084
        %v3181 = vunpack.c.h.b16 %v3084
        %v3182 = vunpack.c.l.b16 %v3085
        %v3183 = vunpack.c.h.b16 %v3085
        %v3184 = vunpack.c.l.b16 %v3086
        %v3185 = vunpack.c.h.b16 %v3086
        %v3186 = vunpack.c.l.b16 %v3087
        %v3187 = vunpack.c.h.b16 %v3087
        %v3188 = vunpack.c.l.b16 %v3088
        %v3189 = vunpack.c.h.b16 %v3088
        %v3190 = vunpack.c.l.b16 %v3089
        %v3191 = vunpack.c.h.b16 %v3089
        %v3192 = vunpack.c.l.b16 %v3090
        %v3193 = vunpack.c.h.b16 %v3090
        %v3194 = vunpack.c.l.b16 %v3091
        %v3195 = vunpack.c.h.b16 %v3091
        %v3196 = vunpack.c.l.b16 %v3092
        %v3197 = vunpack.c.h.b16 %v3092
        %v3198 = vunpack.c.l.b16 %v3093
        %v3199 = vunpack.c.h.b16 %v3093
        %v3200 = vunpack.c.l.b16 %v3094
        %v3201 = vunpack.c.h.b16 %v3094
        %v3202 = vunpack.c.l.b16 %v3095
        %v3203 = vunpack.c.h.b16 %v3095
        %v3204 = vunpack.c.l.b16 %v3096
        %v3205 = vunpack.c.h.b16 %v3096
        %v3206 = vunpack.c.l.b16 %v3097
        %v3207 = vunpack.c.h.b16 %v3097
        %v3208 = vunpack.c.l.b16 %v3098
        %v3209 = vunpack.c.h.b16 %v3098
        %v3210 = vunpack.c.l.b16 %v3099
        %v3211 = vunpack.c.h.b16 %v3099
        %v3212 = vunpack.c.l.b16 %v3100
        %v3213 = vunpack.c.h.b16 %v3100
        %v3214 = vunpack.c.l.b16 %v3101
        %v3215 = vunpack.c.h.b16 %v3101
        %v3216 = vunpack.c.l.b16 %v3102
        %v3217 = vunpack.c.h.b16 %v3102
        %v3218 = vunpack.c.l.b16 %v3103
        %v3219 = vunpack.c.h.b16 %v3103
        %v3220 = vunpack.c.l.b16 %v3104
        %v3221 = vunpack.c.h.b16 %v3104
        %v3222 = vunpack.c.l.b16 %v3105
        %v3223 = vunpack.c.h.b16 %v3105
        %v3224 = vpack.c.b16 %v3164, %v3160
        %v3225 = vpack.c.b16 %v3165, %v3161
        %v3226 = vpack.c.b16 %v3166, %v3162
        %v3227 = vpack.c.b16 %v3167, %v3163
        %v3228 = vpack.c.b16 %v3172, %v3168
        %v3229 = vpack.c.b16 %v3173, %v3169
        %v3230 = vpack.c.b16 %v3174, %v3170
        %v3231 = vpack.c.b16 %v3175, %v3171
        %v3232 = vpack.c.b16 %v3180, %v3176
        %v3233 = vpack.c.b16 %v3181, %v3177
        %v3234 = vpack.c.b16 %v3182, %v3178
        %v3235 = vpack.c.b16 %v3183, %v3179
        %v3236 = vpack.c.b16 %v3188, %v3184
        %v3237 = vpack.c.b16 %v3189, %v3185
        %v3238 = vpack.c.b16 %v3190, %v3186
        %v3239 = vpack.c.b16 %v3191, %v3187
        %v3240 = vpack.c.b16 %v3196, %v3192
        %v3241 = vpack.c.b16 %v3197, %v3193
        %v3242 = vpack.c.b16 %v3198, %v3194
        %v3243 = vpack.c.b16 %v3199, %v3195
        %v3244 = vpack.c.b16 %v3204, %v3200
        %v3245 = vpack.c.b16 %v3205, %v3201
        %v3246 = vpack.c.b16 %v3206, %v3202
        %v3247 = vpack.c.b16 %v3207, %v3203
        %v3248 = vpack.c.b16 %v3212, %v3208
        %v3249 = vpack.c.b16 %v3213, %v3209
        %v3250 = vpack.c.b16 %v3214, %v3210
        %v3251 = vpack.c.b16 %v3215, %v3211
        %v3252 = vpack.c.b16 %v3220, %v3216
        %v3253 = vpack.c.b16 %v3221, %v3217
        %v3254 = vpack.c.b16 %v3222, %v3218
        %v3255 = vpack.c.b16 %v3223, %v3219
        %3288 = vmatprep.subr.bf16.mxu0 %v3225
        %3289 = vmatpush1.bf16.msra.mxu0 %v3224
        %3290 = vmatprep.subr.bf16.mxu0 %v3229
        %3291 = vmatpush1.bf16.msra.mxu0 %v3228
        %3292 = vmatprep.subr.bf16.mxu0 %v3233
        %3293 = vmatpush1.bf16.msra.mxu0 %v3232
        %3294 = vmatprep.subr.bf16.mxu0 %v3237
        %3295 = vmatpush1.bf16.msra.mxu0 %v3236
        %3296 = vmatprep.subr.bf16.mxu0 %v3241
        %3297 = vmatpush1.bf16.msra.mxu0 %v3240
        %3298 = vmatprep.subr.bf16.mxu0 %v3245
        %3299 = vmatpush1.bf16.msra.mxu0 %v3244
        %3300 = vmatprep.subr.bf16.mxu0 %v3249
        %3301 = vmatpush1.bf16.msra.mxu0 %v3248
        %3302 = vmatprep.subr.bf16.mxu0 %v3253
        %3303 = vmatpush1.bf16.msra.mxu0 %v3252
        %3304 = vmatprep.subr.bf16.mxu0 0
        %3305 = vmatpush1.bf16.msra.mxu0 0
        %3306 = vmatprep.subr.bf16.mxu0 0
        %3307 = vmatpush1.bf16.msra.mxu0 0
        %3308 = vmatprep.subr.bf16.mxu0 0
        %3309 = vmatpush1.bf16.msra.mxu0 0
        %3310 = vmatprep.subr.bf16.mxu0 0
        %3311 = vmatpush1.bf16.msra.mxu0 0
        %3312 = vmatprep.subr.bf16.mxu0 0
        %3313 = vmatpush1.bf16.msra.mxu0 0
        %3314 = vmatprep.subr.bf16.mxu0 0
        %3315 = vmatpush1.bf16.msra.mxu0 0
        %3316 = vmatprep.subr.bf16.mxu0 0
        %3317 = vmatpush1.bf16.msra.mxu0 0
        %3318 = vmatprep.subr.bf16.mxu0 0
        %3319 = vmatpush1.bf16.msra.mxu0 0
        %3320 = vmatprep.mubr.bf16.mxu0 0
        %3321 = vmatmul.mubr.bf16.gmra.mrb[0].mxu0 %v3073
        %v3322 = vpop.f32.mrb[0].mxu0
        %v3323 = vadd.f32 %v3111, %v3322
        %v3324 = vpop.f32.mrb[0].mxu0
        %v3325 = vadd.f32 %v3115, %v3324
        %v3326 = vpop.f32.mrb[0].mxu0
        %v3327 = vadd.f32 %v3111, %v3326
        %v3328 = vpop.f32.mrb[0].mxu0
        %v3329 = vadd.f32 %v3115, %v3328
        %3330 = vdwg.mxu0
        %3331 = vmatprep.subr.bf16.mxu0 %v3227
        %3332 = vmatpush1.bf16.msra.mxu0 %v3226
        %3333 = vmatprep.subr.bf16.mxu0 %v3231
        %3334 = vmatpush1.bf16.msra.mxu0 %v3230
        %3335 = vmatprep.subr.bf16.mxu0 %v3235
        %3336 = vmatpush1.bf16.msra.mxu0 %v3234
        %3337 = vmatprep.subr.bf16.mxu0 %v3239
        %3338 = vmatpush1.bf16.msra.mxu0 %v3238
        %3339 = vmatprep.subr.bf16.mxu0 %v3243
        %3340 = vmatpush1.bf16.msra.mxu0 %v3242
        %3341 = vmatprep.subr.bf16.mxu0 %v3247
        %3342 = vmatpush1.bf16.msra.mxu0 %v3246
        %3343 = vmatprep.subr.bf16.mxu0 %v3251
        %3344 = vmatpush1.bf16.msra.mxu0 %v3250
        %3345 = vmatprep.subr.bf16.mxu0 %v3255
        %3346 = vmatpush1.bf16.msra.mxu0 %v3254
        %3347 = vmatprep.subr.bf16.mxu0 0
        %3348 = vmatpush1.bf16.msra.mxu0 0
        %3349 = vmatprep.subr.bf16.mxu0 0
        %3350 = vmatpush1.bf16.msra.mxu0 0
        %3351 = vmatprep.subr.bf16.mxu0 0
        %3352 = vmatpush1.bf16.msra.mxu0 0
        %3353 = vmatprep.subr.bf16.mxu0 0
        %3354 = vmatpush1.bf16.msra.mxu0 0
        %3355 = vmatprep.subr.bf16.mxu0 0
        %3356 = vmatpush1.bf16.msra.mxu0 0
        %3357 = vmatprep.subr.bf16.mxu0 0
        %3358 = vmatpush1.bf16.msra.mxu0 0
        %3359 = vmatprep.subr.bf16.mxu0 0
        %3360 = vmatpush1.bf16.msra.mxu0 0
        %3361 = vmatprep.subr.bf16.mxu0 0
        %3362 = vmatpush1.bf16.msra.mxu0 0
        %3363 = vmatprep.mubr.bf16.mxu0 0
        %3364 = vmatmul.mubr.bf16.gmra.mrb[0].mxu0 %v3073
        %v3365 = vpop.f32.mrb[0].mxu0
        %v3366 = vadd.f32 %v3119, %v3365
        %v3367 = vpop.f32.mrb[0].mxu0
        %v3368 = vadd.f32 %v3123, %v3367
        %v3369 = vpop.f32.mrb[0].mxu0
        %v3370 = vadd.f32 %v3119, %v3369
        %v3371 = vpop.f32.mrb[0].mxu0
        %v3372 = vadd.f32 %v3123, %v3371
        %3373 = vdwg.mxu0
        %v3374 = vmul.f32 %v3323, 0.5
        %v3375 = vmul.f32 %v3325, 0.5
        %v3376 = vmul.f32 %v3366, 0.5
        %v3377 = vmul.f32 %v3368, 0.5
        %v3378 = vmul.f32 %v3327, 0.5
        %v3379 = vmul.f32 %v3329, 0.5
        %v3380 = vmul.f32 %v3370, 0.5
        %v3381 = vmul.f32 %v3372, 0.5
        %v3382 = vmul.f32 %v3323, 0.70710677
        %v3383 = vmul.f32 %v3325, 0.70710677
        %v3384 = vmul.f32 %v3366, 0.70710677
        %v3385 = vmul.f32 %v3368, 0.70710677
        %v3386 = vmul.f32 %v3327, 0.70710677
        %v3387 = vmul.f32 %v3329, 0.70710677
        %v3388 = vmul.f32 %v3370, 0.70710677
        %v3389 = vmul.f32 %v3372, 0.70710677
        %v3390 = verf.f32.pop %v3382
        %v3391 = verf.f32.pop %v3383
        %v3392 = verf.f32.pop %v3384
        %v3393 = verf.f32.pop %v3385
        %v3394 = verf.f32.pop %v3386
        %v3395 = verf.f32.pop %v3387
        %v3396 = verf.f32.pop %v3388
        %v3397 = verf.f32.pop %v3389
        %v3398 = vadd.f32 %v3390, 1.0
        %v3399 = vadd.f32 %v3391, 1.0
        %v3400 = vadd.f32 %v3392, 1.0
        %v3401 = vadd.f32 %v3393, 1.0
        %v3402 = vadd.f32 %v3394, 1.0
        %v3403 = vadd.f32 %v3395, 1.0
        %v3404 = vadd.f32 %v3396, 1.0
        %v3405 = vadd.f32 %v3397, 1.0
        %v3406 = vmul.f32 %v3374, %v3398
        %v3407 = vmul.f32 %v3375, %v3399
        %v3408 = vmul.f32 %v3376, %v3400
        %v3409 = vmul.f32 %v3377, %v3401
        %v3410 = vmul.f32 %v3378, %v3402
        %v3411 = vmul.f32 %v3379, %v3403
        %v3412 = vmul.f32 %v3380, %v3404
        %v3413 = vmul.f32 %v3381, %v3405
        %v3414 = vpack.c.bf16 %v3410, %v3406
        %v3415 = vpack.c.bf16 %v3411, %v3407
        %v3416 = vpack.c.bf16 %v3412, %v3408
        %v3417 = vpack.c.bf16 %v3413, %v3409
        %v3418 = vld [vmem:[%s499] sm:$0xf]
        %v3419 = vld [vmem:[%s499 + $0x4] sm:$0xf]
        %v3420 = vld [vmem:[%s499 + $0x8] sm:$0xf]
        %v3421 = vld [vmem:[%s499 + $0xc] sm:$0xf]
        %v3422 = vld [vmem:[%s499 + $0x10] sm:$0xf]
        %v3423 = vld [vmem:[%s499 + $0x14] sm:$0xf]
        %v3424 = vld [vmem:[%s499 + $0x18] sm:$0xf]
        %v3425 = vld [vmem:[%s499 + $0x1c] sm:$0xf]
        %v3426 = vld [vmem:[%s499 + $0x20] sm:$0xf]
        %v3427 = vld [vmem:[%s499 + $0x24] sm:$0xf]
        %v3428 = vld [vmem:[%s499 + $0x28] sm:$0xf]
        %v3429 = vld [vmem:[%s499 + $0x2c] sm:$0xf]
        %v3430 = vld [vmem:[%s499 + $0x30] sm:$0xf]
        %v3431 = vld [vmem:[%s499 + $0x34] sm:$0xf]
        %v3432 = vld [vmem:[%s499 + $0x38] sm:$0xf]
        %v3433 = vld [vmem:[%s499 + $0x3c] sm:$0xf]
        %v3434 = vld [vmem:[%s499 + $0x40] sm:$0xf]
        %v3435 = vld [vmem:[%s499 + $0x44] sm:$0xf]
        %v3436 = vld [vmem:[%s499 + $0x48] sm:$0xf]
        %v3437 = vld [vmem:[%s499 + $0x4c] sm:$0xf]
        %v3438 = vld [vmem:[%s499 + $0x50] sm:$0xf]
        %v3439 = vld [vmem:[%s499 + $0x54] sm:$0xf]
        %v3440 = vld [vmem:[%s499 + $0x58] sm:$0xf]
        %v3441 = vld [vmem:[%s499 + $0x5c] sm:$0xf]
        %v3442 = vld [vmem:[%s499 + $0x60] sm:$0xf]
        %v3443 = vld [vmem:[%s499 + $0x64] sm:$0xf]
        %v3444 = vld [vmem:[%s499 + $0x68] sm:$0xf]
        %v3445 = vld [vmem:[%s499 + $0x6c] sm:$0xf]
        %v3446 = vld [vmem:[%s499 + $0x70] sm:$0xf]
        %v3447 = vld [vmem:[%s499 + $0x74] sm:$0xf]
        %v3448 = vld [vmem:[%s499 + $0x78] sm:$0xf]
        %v3449 = vld [vmem:[%s499 + $0x7c] sm:$0xf]
        %v3450 = vld [vmem:[%s499 + $0x80] sm:$0xf]
        %v3451 = vld [vmem:[%s499 + $0x84] sm:$0xf]
        %v3452 = vld [vmem:[%s499 + $0x88] sm:$0xf]
        %v3453 = vld [vmem:[%s499 + $0x8c] sm:$0xf]
        %v3454 = vld [vmem:[%s499 + $0x90] sm:$0xf]
        %v3455 = vld [vmem:[%s499 + $0x94] sm:$0xf]
        %v3456 = vld [vmem:[%s499 + $0x98] sm:$0xf]
        %v3457 = vld [vmem:[%s499 + $0x9c] sm:$0xf]
        %v3458 = vld [vmem:[%s499 + $0xa0] sm:$0xf]
        %v3459 = vld [vmem:[%s499 + $0xa4] sm:$0xf]
        %v3460 = vld [vmem:[%s499 + $0xa8] sm:$0xf]
        %v3461 = vld [vmem:[%s499 + $0xac] sm:$0xf]
        %v3462 = vld [vmem:[%s499 + $0xb0] sm:$0xf]
        %v3463 = vld [vmem:[%s499 + $0xb4] sm:$0xf]
        %v3464 = vld [vmem:[%s499 + $0xb8] sm:$0xf]
        %v3465 = vld [vmem:[%s499 + $0xbc] sm:$0xf]
        %v3466 = vld [vmem:[%s499 + $0xc0] sm:$0xf]
        %v3467 = vld [vmem:[%s499 + $0xc4] sm:$0xf]
        %v3468 = vld [vmem:[%s499 + $0xc8] sm:$0xf]
        %v3469 = vld [vmem:[%s499 + $0xcc] sm:$0xf]
        %v3470 = vld [vmem:[%s499 + $0xd0] sm:$0xf]
        %v3471 = vld [vmem:[%s499 + $0xd4] sm:$0xf]
        %v3472 = vld [vmem:[%s499 + $0xd8] sm:$0xf]
        %v3473 = vld [vmem:[%s499 + $0xdc] sm:$0xf]
        %v3474 = vld [vmem:[%s499 + $0xe0] sm:$0xf]
        %v3475 = vld [vmem:[%s499 + $0xe4] sm:$0xf]
        %v3476 = vld [vmem:[%s499 + $0xe8] sm:$0xf]
        %v3477 = vld [vmem:[%s499 + $0xec] sm:$0xf]
        %v3478 = vld [vmem:[%s499 + $0xf0] sm:$0xf]
        %v3479 = vld [vmem:[%s499 + $0xf4] sm:$0xf]
        %v3480 = vld [vmem:[%s499 + $0xf8] sm:$0xf]
        %v3481 = vld [vmem:[%s499 + $0xfc] sm:$0xf]
        %v3482 = vlaneseq
        %v3483 = vshrl.u32 %v3482, 7
        %v3484 = vsub.s32 4, %v3483
        %v3485 = vrot.slane %v581, %v3484
        %v3550 = vunpack.c.l.b16 %v3418
        %v3551 = vunpack.c.l.b16 %v3419
        %v3552 = vunpack.c.l.b16 %v3420
        %v3553 = vunpack.c.l.b16 %v3421
        %v3554 = vunpack.c.l.b16 %v3422
        %v3555 = vunpack.c.l.b16 %v3423
        %v3556 = vunpack.c.l.b16 %v3424
        %v3557 = vunpack.c.l.b16 %v3425
        %v3558 = vunpack.c.l.b16 %v3426
        %v3559 = vunpack.c.l.b16 %v3427
        %v3560 = vunpack.c.l.b16 %v3428
        %v3561 = vunpack.c.l.b16 %v3429
        %v3562 = vunpack.c.l.b16 %v3430
        %v3563 = vunpack.c.l.b16 %v3431
        %v3564 = vunpack.c.l.b16 %v3432
        %v3565 = vunpack.c.l.b16 %v3433
        %v3566 = vunpack.c.l.b16 %v3434
        %v3567 = vunpack.c.l.b16 %v3435
        %v3568 = vunpack.c.l.b16 %v3436
        %v3569 = vunpack.c.l.b16 %v3437
        %v3570 = vunpack.c.l.b16 %v3438
        %v3571 = vunpack.c.l.b16 %v3439
        %v3572 = vunpack.c.l.b16 %v3440
        %v3573 = vunpack.c.l.b16 %v3441
        %v3574 = vunpack.c.l.b16 %v3442
        %v3575 = vunpack.c.l.b16 %v3443
        %v3576 = vunpack.c.l.b16 %v3444
        %v3577 = vunpack.c.l.b16 %v3445
        %v3578 = vunpack.c.l.b16 %v3446
        %v3579 = vunpack.c.l.b16 %v3447
        %v3580 = vunpack.c.l.b16 %v3448
        %v3581 = vunpack.c.l.b16 %v3449
        %v3582 = vunpack.c.l.b16 %v3450
        %v3583 = vunpack.c.l.b16 %v3451
        %v3584 = vunpack.c.l.b16 %v3452
        %v3585 = vunpack.c.l.b16 %v3453
        %v3586 = vunpack.c.l.b16 %v3454
        %v3587 = vunpack.c.l.b16 %v3455
        %v3588 = vunpack.c.l.b16 %v3456
        %v3589 = vunpack.c.l.b16 %v3457
        %v3590 = vunpack.c.l.b16 %v3458
        %v3591 = vunpack.c.l.b16 %v3459
        %v3592 = vunpack.c.l.b16 %v3460
        %v3593 = vunpack.c.l.b16 %v3461
        %v3594 = vunpack.c.l.b16 %v3462
        %v3595 = vunpack.c.l.b16 %v3463
        %v3596 = vunpack.c.l.b16 %v3464
        %v3597 = vunpack.c.l.b16 %v3465
        %v3598 = vunpack.c.l.b16 %v3466
        %v3599 = vunpack.c.l.b16 %v3467
        %v3600 = vunpack.c.l.b16 %v3468
        %v3601 = vunpack.c.l.b16 %v3469
        %v3602 = vunpack.c.l.b16 %v3470
        %v3603 = vunpack.c.l.b16 %v3471
        %v3604 = vunpack.c.l.b16 %v3472
        %v3605 = vunpack.c.l.b16 %v3473
        %v3606 = vunpack.c.l.b16 %v3474
        %v3607 = vunpack.c.l.b16 %v3475
        %v3608 = vunpack.c.l.b16 %v3476
        %v3609 = vunpack.c.l.b16 %v3477
        %v3610 = vunpack.c.l.b16 %v3478
        %v3611 = vunpack.c.l.b16 %v3479
        %v3612 = vunpack.c.l.b16 %v3480
        %v3613 = vunpack.c.l.b16 %v3481
        %v3614 = vpack.c.b16 %v3551, %v3550
        %v3615 = vpack.c.b16 %v3553, %v3552
        %v3616 = vpack.c.b16 %v3555, %v3554
        %v3617 = vpack.c.b16 %v3557, %v3556
        %v3618 = vpack.c.b16 %v3559, %v3558
        %v3619 = vpack.c.b16 %v3561, %v3560
        %v3620 = vpack.c.b16 %v3563, %v3562
        %v3621 = vpack.c.b16 %v3565, %v3564
        %v3622 = vpack.c.b16 %v3567, %v3566
        %v3623 = vpack.c.b16 %v3569, %v3568
        %v3624 = vpack.c.b16 %v3571, %v3570
        %v3625 = vpack.c.b16 %v3573, %v3572
        %v3626 = vpack.c.b16 %v3575, %v3574
        %v3627 = vpack.c.b16 %v3577, %v3576
        %v3628 = vpack.c.b16 %v3579, %v3578
        %v3629 = vpack.c.b16 %v3581, %v3580
        %v3630 = vpack.c.b16 %v3583, %v3582
        %v3631 = vpack.c.b16 %v3585, %v3584
        %v3632 = vpack.c.b16 %v3587, %v3586
        %v3633 = vpack.c.b16 %v3589, %v3588
        %v3634 = vpack.c.b16 %v3591, %v3590
        %v3635 = vpack.c.b16 %v3593, %v3592
        %v3636 = vpack.c.b16 %v3595, %v3594
        %v3637 = vpack.c.b16 %v3597, %v3596
        %v3638 = vpack.c.b16 %v3599, %v3598
        %v3639 = vpack.c.b16 %v3601, %v3600
        %v3640 = vpack.c.b16 %v3603, %v3602
        %v3641 = vpack.c.b16 %v3605, %v3604
        %v3642 = vpack.c.b16 %v3607, %v3606
        %v3643 = vpack.c.b16 %v3609, %v3608
        %v3644 = vpack.c.b16 %v3611, %v3610
        %v3645 = vpack.c.b16 %v3613, %v3612
        %3678 = vmatprep.subr.bf16.mxu0 0
        %3679 = vmatpush1.bf16.msra.mxu0 %v3614
        %3680 = vmatprep.subr.bf16.mxu0 0
        %3681 = vmatpush1.bf16.msra.mxu0 %v3615
        %3682 = vmatprep.subr.bf16.mxu0 0
        %3683 = vmatpush1.bf16.msra.mxu0 %v3616
        %3684 = vmatprep.subr.bf16.mxu0 0
        %3685 = vmatpush1.bf16.msra.mxu0 %v3617
        %3686 = vmatprep.subr.bf16.mxu0 0
        %3687 = vmatpush1.bf16.msra.mxu0 %v3618
        %3688 = vmatprep.subr.bf16.mxu0 0
        %3689 = vmatpush1.bf16.msra.mxu0 %v3619
        %3690 = vmatprep.subr.bf16.mxu0 0
        %3691 = vmatpush1.bf16.msra.mxu0 %v3620
        %3692 = vmatprep.subr.bf16.mxu0 0
        %3693 = vmatpush1.bf16.msra.mxu0 %v3621
        %3694 = vmatprep.subr.bf16.mxu0 0
        %3695 = vmatpush1.bf16.msra.mxu0 %v3622
        %3696 = vmatprep.subr.bf16.mxu0 0
        %3697 = vmatpush1.bf16.msra.mxu0 %v3623
        %3698 = vmatprep.subr.bf16.mxu0 0
        %3699 = vmatpush1.bf16.msra.mxu0 %v3624
        %3700 = vmatprep.subr.bf16.mxu0 0
        %3701 = vmatpush1.bf16.msra.mxu0 %v3625
        %3702 = vmatprep.subr.bf16.mxu0 0
        %3703 = vmatpush1.bf16.msra.mxu0 %v3626
        %3704 = vmatprep.subr.bf16.mxu0 0
        %3705 = vmatpush1.bf16.msra.mxu0 %v3627
        %3706 = vmatprep.subr.bf16.mxu0 0
        %3707 = vmatpush1.bf16.msra.mxu0 %v3628
        %3708 = vmatprep.subr.bf16.mxu0 0
        %3709 = vmatpush1.bf16.msra.mxu0 %v3629
        %3710 = vmatprep.mubr.bf16.mxu0 %v3415
        %3711 = vmatmul.mubr.bf16.gmra.mrb[0].mxu0 %v3414
        %v3712 = vpop.f32.mrb[0].mxu0
        %v3713 = vadd.f32 %v3485, %v3712
        %v3714 = vpop.f32.mrb[0].mxu0
        %v3715 = vpop.f32.mrb[0].mxu0
        %v3716 = vadd.f32 %v3485, %v3715
        %v3717 = vpop.f32.mrb[0].mxu0
        %3718 = vdwg.mxu0
        %3719 = vmatprep.subr.bf16.mxu0 0
        %3720 = vmatpush1.bf16.msra.mxu0 %v3630
        %3721 = vmatprep.subr.bf16.mxu0 0
        %3722 = vmatpush1.bf16.msra.mxu0 %v3631
        %3723 = vmatprep.subr.bf16.mxu0 0
        %3724 = vmatpush1.bf16.msra.mxu0 %v3632
        %3725 = vmatprep.subr.bf16.mxu0 0
        %3726 = vmatpush1.bf16.msra.mxu0 %v3633
        %3727 = vmatprep.subr.bf16.mxu0 0
        %3728 = vmatpush1.bf16.msra.mxu0 %v3634
        %3729 = vmatprep.subr.bf16.mxu0 0
        %3730 = vmatpush1.bf16.msra.mxu0 %v3635
        %3731 = vmatprep.subr.bf16.mxu0 0
        %3732 = vmatpush1.bf16.msra.mxu0 %v3636
        %3733 = vmatprep.subr.bf16.mxu0 0
        %3734 = vmatpush1.bf16.msra.mxu0 %v3637
        %3735 = vmatprep.subr.bf16.mxu0 0
        %3736 = vmatpush1.bf16.msra.mxu0 %v3638
        %3737 = vmatprep.subr.bf16.mxu0 0
        %3738 = vmatpush1.bf16.msra.mxu0 %v3639
        %3739 = vmatprep.subr.bf16.mxu0 0
        %3740 = vmatpush1.bf16.msra.mxu0 %v3640
        %3741 = vmatprep.subr.bf16.mxu0 0
        %3742 = vmatpush1.bf16.msra.mxu0 %v3641
        %3743 = vmatprep.subr.bf16.mxu0 0
        %3744 = vmatpush1.bf16.msra.mxu0 %v3642
        %3745 = vmatprep.subr.bf16.mxu0 0
        %3746 = vmatpush1.bf16.msra.mxu0 %v3643
        %3747 = vmatprep.subr.bf16.mxu0 0
        %3748 = vmatpush1.bf16.msra.mxu0 %v3644
        %3749 = vmatprep.subr.bf16.mxu0 0
        %3750 = vmatpush1.bf16.msra.mxu0 %v3645
        %3751 = vmatprep.mubr.bf16.mxu0 %v3417
        %3752 = vmatmul.mubr.bf16.gmra.mrb[0].mxu0 %v3416
        %v3753 = vpop.f32.mrb[0].mxu0
        %v3754 = vadd.f32 %v3713, %v3753
        %v3755 = vpop.f32.mrb[0].mxu0
        %v3756 = vpop.f32.mrb[0].mxu0
        %v3757 = vadd.f32 %v3716, %v3756
        %v3758 = vpop.f32.mrb[0].mxu0
        %3759 = vdwg.mxu0
        %v3760 = vadd.f32 %v3037, %v3754
        %v3761 = vadd.f32 %v3038, %v3757
        %3762 = vst [vmem:[#allocation2] sm:$0xff] %v3760
        %3763 = vst [vmem:[#allocation2 + $0x8] sm:$0xff] %v3761
        %p3764 = scmp.eq.s32.totalorder %s36, 1
        // Predicated region
        $region85: #{tpu_custom_call.1} parent=55 // pred_check
          %p3765 = pneg %p3764
        $region86: #{tpu_custom_call.1} parent=55 // pred_check_branch
          %3767 = sbr.rel (%p3765) target = $region88
        $region87: #{tpu_custom_call.1} parent=55 // pred_region
          %v3768 = vld [vmem:[#allocation2] sm:$0xff]
          %v3769 = vld [vmem:[#allocation2 + $0x8] sm:$0xff]
          %v3770 = vld [vmem:[%s8] sm:$0x1]
          %v3771 = vld [vmem:[%s8 + $0x1] sm:$0x1]
          %3772 = vadd.xlane.f32.xlu0 %v3768
          %v3773 = vpop.xlane.xlu0 %3772
          %3774 = vadd.xlane.f32.xlu0 %v3769
          %v3775 = vpop.xlane.xlu0 %3774
          %v3776 = vmul.f32 %v3773, %v586
          %v3777 = vmul.f32 %v3775, %v586
          %v3778 = vsub.f32 %v3768, %v3776
          %v3779 = vsub.f32 %v3769, %v3777
          %v3780 = vmul.f32 %v3778, %v3778
          %v3781 = vmul.f32 %v3779, %v3779
          %3782 = vadd.xlane.f32.xlu0 %v3780
          %v3783 = vpop.xlane.xlu0 %3782
          %3784 = vadd.xlane.f32.xlu0 %v3781
          %v3785 = vpop.xlane.xlu0 %3784
          %v3786 = vmul.f32 %v3783, %v586
          %v3787 = vmul.f32 %v3785, %v586
          %v3788 = vadd.f32 %v3786, 1e-05
          %v3789 = vadd.f32 %v3787, 1e-05
          %v3790 = vrsqrt.pop %v3788
          %v3791 = vrsqrt.pop %v3789
          %v3792 = vmul.f32 %v3778, %v3790
          %v3793 = vmul.f32 %v3779, %v3791
          %v3794 = vlaneseq
          %v3795 = vshrl.u32 %v3794, 7
          %v3796 = vsub.s32 0, %v3795
          %v3797 = vrot.slane %v3770, %v3796
          %v3798 = vmul.f32 %v3792, %v3797
          %v3799 = vmul.f32 %v3793, %v3797
          %v3800 = vlaneseq
          %v3801 = vshrl.u32 %v3800, 7
          %v3802 = vsub.s32 0, %v3801
          %v3803 = vrot.slane %v3771, %v3802
          %v3804 = vadd.f32 %v3798, %v3803
          %v3805 = vadd.f32 %v3799, %v3803
          %3806 = vst [vmem:[#allocation14] sm:$0xff] %v3804
          %3807 = vst [vmem:[#allocation14 + $0x8] sm:$0xff] %v3805
        $region88: #{tpu_custom_call.1} parent=55 // pred_fallthru
          _
        // Predicated region
        $region89: #{tpu_custom_call.1} parent=55 // pred_check
          %p3808 = pneg %p290
        $region90: #{tpu_custom_call.1} parent=55 // pred_check_branch
          %3810 = sbr.rel (%p3808) target = $region92
        $region91: #{tpu_custom_call.1} parent=55 // pred_region
          %s3811 = smul.u32 2, %s35
          %s3813 = ssub.s32 256, 256
          %3814 = vsyncadd [#allocation5], %s3813
          %s3815 = smul.addr %s3811, 128
          %s3816 = scalar_lea.hbm %s9, %s3815
          %s3817 = sshll.u32 [#allocation14], 4
          %s3818 = int_to_ptr.vmem [resolvable:$true] %s3817
          %3823 = dma.vmem_to_hbm [thread:$0]  %s3818, 256, %s3816, [#allocation5], 128, 128, 8
        $region92: #{tpu_custom_call.1} parent=55 // pred_fallthru
          _
        // Predicated region
        $region93: #{tpu_custom_call.1} parent=55 // pred_check
          %p3824 = pneg %p290
        $region94: #{tpu_custom_call.1} parent=55 // pred_check_branch
          %3826 = sbr.rel (%p3824) target = $region96
        $region95: #{tpu_custom_call.1} parent=55 // pred_region
          %3827 = dma.done [#allocation5], 256
        $region96: #{tpu_custom_call.1} parent=55 // pred_fallthru
          _
      $region56: #{tpu_custom_call.1} parent=5 // pred_fallthru
        _
      %p3828 = scmp.le.s32.totalorder 2, %s26
      // Predicated region
      $region97: #{tpu_custom_call.1} parent=5 // pred_check
        %p3829 = pneg %p3828
      $region98: #{tpu_custom_call.1} parent=5 // pred_check_branch
        %3831 = sbr.rel (%p3829) target = $region100
      $region99: #{tpu_custom_call.1} parent=5 // pred_region
        %s3832 = ssub.s32 %s26, 2
      $region100: #{tpu_custom_call.1} parent=5 // pred_fallthru
        _
    $region6: #{tpu_custom_call.1} parent=1 // loop_footer
      %s30 = sadd.s32 1, %s26
    $region7: #{tpu_custom_call.1} parent=1 // loop_footer_branch
      %25 = sbr.rel target = $region3
    $region8: #{tpu_custom_call.1} parent=1 // loop_exit
      _
    %3833 = vsyncpa [#allocation4], 1
    %s3834 = scalar_lea.sflag [#allocation4], 1
    %3835 = vsyncpa %s3834, 1
    %3836 = vsyncpa [#allocation7], 1
    %s3837 = scalar_lea.sflag [#allocation7], 1
    %3838 = vsyncpa %s3837, 1
    %3839 = vsyncpa [#allocation10], 1
    %s3840 = scalar_lea.sflag [#allocation10], 1
    %3841 = vsyncpa %s3840, 1
    %3842 = vsyncpa [#allocation13], 1
    %s3843 = scalar_lea.sflag [#allocation13], 1
    %3844 = vsyncpa %s3843, 1
    %3845 = vsyncpa [#allocation5], 1
    %s3846 = scalar_lea.sflag [#allocation5], 1
    %3847 = vsyncpa %s3846, 1

</llo_original>
